<compile_context>
chip_gen: v7x
topology: tpu7x:2x2x1
jax: 0.10.0
libtpu: 0.0.40
codegen_flags: <defaults>
</compile_context>

<pallas_src>
import functools
import math

import jax
import jax.numpy as jnp
from jax.experimental import pallas as pl
from jax.experimental.pallas import tpu as pltpu


def _dvn_kernel(qbd_ref, v_ref, w1_ref, b1_ref, w2_ref, b2_ref,
                w3v_ref, w3h_ref, b3_ref, o_ref, *, depth, tanh_dtype):
    """One grid step processes M = block_b * Np rows.

    qbd_ref : (M, M)   bf16  block-diagonal Q for this batch block
    v_ref   : (M, Fp)  bf16  flattened, lane-padded features
    w1/w2   : (Fp, Fp) bf16  pre-transposed (kernel computes y = x @ W.T)
    w3v/w3h : (Fp, Fp) bf16  W3.T split into the V-half and the h-half
    b1/b2/b3: (1, Fp)  f32   broadcast-added (not materialized to (M, Fp))
    o_ref   : (M, Fp)  bf16
    """
    f32, bf16 = jnp.float32, jnp.bfloat16

    Qbd = qbd_ref[...]
    w1, w2 = w1_ref[...], w2_ref[...]
    w3v, w3h = w3v_ref[...], w3h_ref[...]
    b1, b2, b3 = b1_ref[...], b2_ref[...], b3_ref[...]   # (1, Fp)

    V = v_ref[...]                                        # (M, Fp) bf16

    for _ in range(depth):                                # small static depth -> unrolled
        # Message passing: one big block-diagonal matmul, f32 accumulation.
        QV = jnp.dot(Qbd, V, preferred_element_type=f32)                        # (M, Fp)
        # M1 + relu (bias add broadcasts the (1, Fp) row — no materialized constant).
        h = jnp.maximum(
            jnp.dot(QV.astype(bf16), w1, preferred_element_type=f32) + b1, 0.0)
        # M2 + tanh (tanh in bf16 on chips with a bf16 EUP; result feeds bf16 matmul).
        pre2 = jnp.dot(h.astype(bf16), w2, preferred_element_type=f32) + b2
        h2 = jnp.tanh(pre2.astype(tanh_dtype)).astype(bf16)
        # Fusion layer M3: two accumulating matmuls, no (M, 2Fp) concat buffer.
        fused = (jnp.dot(V, w3v, preferred_element_type=f32)
                 + jnp.dot(h2, w3h, preferred_element_type=f32) + b3)
        V = jnp.tanh(fused.astype(tanh_dtype)).astype(bf16)

    o_ref[...] = V


def dvn_forward(Q, V, params, depth=3, block_b=None):
    """Q: (B, N, N) f32, V: (B, N, F) f32 -> (B, N, F) bf16."""
    B, N, _ = Q.shape
    F = V.shape[-1]

    kind = ""
    try:
        kind = jax.devices()[0].device_kind.lower()
    except Exception:
        pass
    multi_tc = "v7" in kind                               # 2 TensorCores per chip
    old_gen = any(g in kind for g in ("v2", "v3", "v4", "v5"))
    tanh_dtype = jnp.float32 if old_gen else jnp.bfloat16  # v5e: no bf16 VPU/EUP

    # Sublane-pad N, lane-pad F. Pads stay inert (see kernel comment).
    Np = pl.cdiv(N, 8) * 8
    Fp = pl.cdiv(F, 128) * 128

    # block_b: target M = block_b*Np ~ 256 MXU rows. On v7x force an even grid >= 2
    # so both TensorCores get work; single-TC chips prefer one fat block.
    if block_b is None:
        block_b = 1 if Np >= 256 else max(1, min(B, 256 // Np))
        if multi_tc and pl.cdiv(B, block_b) < 2 and B >= 2:
            block_b = pl.cdiv(B, 2)
    grid = pl.cdiv(B, block_b)
    if multi_tc and grid > 1 and grid % 2 == 1:
        grid += 1                                         # balance the two TensorCores
    Bp = grid * block_b
    M = block_b * Np

    W1, b1, W2, b2, W3, b3 = (params["W1"], params["b1"], params["W2"],
                              params["b2"], params["W3"], params["b3"])

    def pad2d(w):
        return jnp.pad(w, ((0, Fp - w.shape[0]), (0, Fp - w.shape[1])))

    # Pre-transpose (kernel computes y = x @ W.T), zero-pad to Fp lanes, bf16 MXU
    # operands. W3 is split into its V-half and h-half so no concat is needed.
    w1_t = pad2d(W1.T).astype(jnp.bfloat16)               # (Fp, Fp)
    w2_t = pad2d(W2.T).astype(jnp.bfloat16)               # (Fp, Fp)
    w3_v = pad2d(W3[:, :F].T).astype(jnp.bfloat16)        # (Fp, Fp) acts on V lanes
    w3_h = pad2d(W3[:, F:].T).astype(jnp.bfloat16)        # (Fp, Fp) acts on h lanes
    b1_p = jnp.pad(b1, (0, Fp - F)).reshape(1, Fp).astype(jnp.float32)
    b2_p = jnp.pad(b2, (0, Fp - F)).reshape(1, Fp).astype(jnp.float32)
    b3_p = jnp.pad(b3, (0, Fp - F)).reshape(1, Fp).astype(jnp.float32)

    # Zero-pad inputs (pad rows / lanes never leak into real rows: padded Q columns
    # are zero and all pad weight/bias entries are zero).
    Q_p = jnp.pad(Q, ((0, Bp - B), (0, Np - N), (0, Np - N))).astype(jnp.bfloat16)
    V_p = jnp.pad(V, ((0, Bp - B), (0, Np - N), (0, Fp - F))).astype(jnp.bfloat16)

    # Block-diagonalize Q per grid block -> one (M,M)x(M,Fp) matmul per layer.
    Qg = Q_p.reshape(grid, block_b, Np, Np)
    eye = jnp.eye(block_b, dtype=jnp.bfloat16)
    Q_bd = (Qg[:, :, :, None, :] * eye[None, :, None, :, None]).reshape(grid * M, M)
    V_flat = V_p.reshape(grid * M, Fp)

    full = lambda shape: pl.BlockSpec(shape, lambda g: (0,) * len(shape))
    kernel = functools.partial(_dvn_kernel, depth=depth, tanh_dtype=tanh_dtype)

    rows = grid * M
    flops = depth * (2 * rows * M * Fp + 8 * rows * Fp * Fp)
    transc = depth * 2 * rows * Fp
    bytes_acc = int((Q_bd.size + V_flat.size + rows * Fp) * 2
                    + 4 * Fp * Fp * 2 + 3 * Fp * 4)

    out = pl.pallas_call(
        kernel,
        out_shape=jax.ShapeDtypeStruct((rows, Fp), jnp.bfloat16),
        grid_spec=pltpu.PrefetchScalarGridSpec(
            num_scalar_prefetch=0,
            grid=(grid,),
            in_specs=[
                pl.BlockSpec((M, M), lambda g: (g, 0)),    # block-diagonal Q
                pl.BlockSpec((M, Fp), lambda g: (g, 0)),   # V block (flattened rows)
                full((Fp, Fp)), full((1, Fp)),             # W1.T, b1
                full((Fp, Fp)), full((1, Fp)),             # W2.T, b2
                full((Fp, Fp)), full((Fp, Fp)),            # W3.T (V-half, h-half)
                full((1, Fp)),                             # b3
            ],
            out_specs=pl.BlockSpec((M, Fp), lambda g: (g, 0)),
        ),
        compiler_params=pltpu.CompilerParams(
            dimension_semantics=("parallel",)),
        cost_estimate=pl.CostEstimate(
            flops=flops, transcendentals=transc, bytes_accessed=bytes_acc),
    )(Q_bd, V_flat, w1_t, b1_p, w2_t, b2_p, w3_v, w3_h, b3_p)

    return out.reshape(Bp, Np, Fp)[:B, :N, :F]


def dvn_reference(Q, V, params, depth=3):
    """Pure-JAX f32 reference matching the PyTorch forward (no layernorm)."""
    W1, b1, W2, b2, W3, b3 = (params["W1"], params["b1"], params["W2"],
                              params["b2"], params["W3"], params["b3"])
    V_curr = V
    for _ in range(depth):
        QV = jnp.einsum("bij,bjf->bif", Q, V_curr)
        out = jax.nn.relu(QV @ W1.T + b1)
        out = jnp.tanh(out @ W2.T + b2)
        fused = jnp.concatenate([V_curr, out], axis=-1) @ W3.T + b3
        V_curr = jnp.tanh(fused)
    return V_curr


def _xavier_uniform(key, out_dim, in_dim):
    bound = math.sqrt(6.0 / (in_dim + out_dim))
    return jax.random.uniform(key, (out_dim, in_dim), jnp.float32,
                              minval=-bound, maxval=bound)


def init_dvn_params(key, n_features):
    F = n_features
    k1, k2, k3 = jax.random.split(key, 3)
    return {
        "W1": _xavier_uniform(k1, F, F),
        "b1": jnp.zeros((F,), jnp.float32),
        "W2": _xavier_uniform(k2, F, F),
        "b2": jnp.zeros((F,), jnp.float32),
        "W3": _xavier_uniform(k3, F, 2 * F),
        "b3": jnp.zeros((F,), jnp.float32),
    }


if __name__ == "__main__":
    # B=16, N=16, F=32 -> single-TC chips: one (256,256)x(256,128) block per layer;
    # v7x: grid=2 blocks of M=128 so both TensorCores get work.
    B, N, F, DEPTH = 16, 16, 32, 3

    key = jax.random.PRNGKey(0)
    k_q, k_params = jax.random.split(key)

    # Q: scaled (B, N, N) matrix; V: initial features (all ones), as in the module.
    Q = jax.random.normal(k_q, (B, N, N), jnp.float32) * 0.1
    V = jnp.ones((B, N, F), jnp.float32)

    params = init_dvn_params(k_params, F)

    out = jax.block_until_ready(dvn_forward(Q, V, params, depth=DEPTH))
    ref = dvn_reference(Q, V, params, depth=DEPTH)

    assert out.shape == (B, N, F)
    # bf16 MXU operands / bf16 tanh & output (f32 accumulation) across `depth`
    # stacked layers -> relaxed tolerance vs. the pure-f32 reference.
    err = jnp.max(jnp.abs(out.astype(jnp.float32) - ref))
    assert jnp.allclose(out.astype(jnp.float32), ref, atol=5e-2, rtol=0.0), \
        f"max err {err}"

    print("KERNEL_OK")
</pallas_src>

<mosaic_0001>
module attributes {stable_mosaic.version = 11 : i64} {
  func.func @_dvn_kernel(%arg0: i32, %arg1: memref<256x256xbf16, #tpu.memory_space<vmem>>, %arg2: memref<256x128xbf16, #tpu.memory_space<vmem>>, %arg3: memref<128x128xbf16, #tpu.memory_space<vmem>>, %arg4: memref<1x128xf32, #tpu.memory_space<vmem>>, %arg5: memref<128x128xbf16, #tpu.memory_space<vmem>>, %arg6: memref<1x128xf32, #tpu.memory_space<vmem>>, %arg7: memref<128x128xbf16, #tpu.memory_space<vmem>>, %arg8: memref<128x128xbf16, #tpu.memory_space<vmem>>, %arg9: memref<1x128xf32, #tpu.memory_space<vmem>>, %arg10: memref<256x128xbf16, #tpu.memory_space<vmem>>) attributes {dimension_semantics = [#tpu.dimension_semantics<parallel>], iteration_bounds = array<i64: 1>, scalar_prefetch = 0 : i64, scratch_operands = 0 : i64, tpu.core_type = #tpu.core_type<tc>, window_params = [{transform_indices = @transform_0, window_bounds = array<i64: 256, 256>}, {transform_indices = @transform_1, window_bounds = array<i64: 256, 128>}, {pipeline_mode = #tpu.pipeline_mode<synchronous>, transform_indices = @transform_2, window_bounds = array<i64: 128, 128>}, {pipeline_mode = #tpu.pipeline_mode<synchronous>, transform_indices = @transform_3, window_bounds = array<i64: 1, 128>}, {pipeline_mode = #tpu.pipeline_mode<synchronous>, transform_indices = @transform_4, window_bounds = array<i64: 128, 128>}, {pipeline_mode = #tpu.pipeline_mode<synchronous>, transform_indices = @transform_5, window_bounds = array<i64: 1, 128>}, {pipeline_mode = #tpu.pipeline_mode<synchronous>, transform_indices = @transform_6, window_bounds = array<i64: 128, 128>}, {pipeline_mode = #tpu.pipeline_mode<synchronous>, transform_indices = @transform_7, window_bounds = array<i64: 128, 128>}, {pipeline_mode = #tpu.pipeline_mode<synchronous>, transform_indices = @transform_8, window_bounds = array<i64: 1, 128>}, {transform_indices = @transform_9, window_bounds = array<i64: 256, 128>}]} {
    %c0 = arith.constant 0 : index
    %c0_0 = arith.constant 0 : index
    %0 = vector.load %arg1[%c0, %c0_0] : memref<256x256xbf16, #tpu.memory_space<vmem>>, vector<256x256xbf16>
    %c0_1 = arith.constant 0 : index
    %c0_2 = arith.constant 0 : index
    %1 = vector.load %arg3[%c0_1, %c0_2] : memref<128x128xbf16, #tpu.memory_space<vmem>>, vector<128x128xbf16>
    %c0_3 = arith.constant 0 : index
    %c0_4 = arith.constant 0 : index
    %2 = vector.load %arg5[%c0_3, %c0_4] : memref<128x128xbf16, #tpu.memory_space<vmem>>, vector<128x128xbf16>
    %c0_5 = arith.constant 0 : index
    %c0_6 = arith.constant 0 : index
    %3 = vector.load %arg7[%c0_5, %c0_6] : memref<128x128xbf16, #tpu.memory_space<vmem>>, vector<128x128xbf16>
    %c0_7 = arith.constant 0 : index
    %c0_8 = arith.constant 0 : index
    %4 = vector.load %arg8[%c0_7, %c0_8] : memref<128x128xbf16, #tpu.memory_space<vmem>>, vector<128x128xbf16>
    %c0_9 = arith.constant 0 : index
    %c0_10 = arith.constant 0 : index
    %5 = vector.load %arg4[%c0_9, %c0_10] : memref<1x128xf32, #tpu.memory_space<vmem>>, vector<1x128xf32>
    %c0_11 = arith.constant 0 : index
    %c0_12 = arith.constant 0 : index
    %6 = vector.load %arg6[%c0_11, %c0_12] : memref<1x128xf32, #tpu.memory_space<vmem>>, vector<1x128xf32>
    %c0_13 = arith.constant 0 : index
    %c0_14 = arith.constant 0 : index
    %7 = vector.load %arg9[%c0_13, %c0_14] : memref<1x128xf32, #tpu.memory_space<vmem>>, vector<1x128xf32>
    %c0_15 = arith.constant 0 : index
    %c0_16 = arith.constant 0 : index
    %8 = vector.load %arg2[%c0_15, %c0_16] : memref<256x128xbf16, #tpu.memory_space<vmem>>, vector<256x128xbf16>
    %cst = arith.constant dense<0.000000e+00> : vector<256x128xf32>
    %9 = tpu.matmul %0, %8, %cst {dimension_numbers = #tpu.dot_dimension_numbers<[1], [0], [0], [1], [0, 0, 1, 1], [], []>} : vector<256x256xbf16>, vector<256x128xbf16>, vector<256x128xf32> -> vector<256x128xf32>
    %10 = arith.truncf %9 : vector<256x128xf32> to vector<256x128xbf16>
    %cst_17 = arith.constant dense<0.000000e+00> : vector<256x128xf32>
    %11 = tpu.matmul %10, %1, %cst_17 {dimension_numbers = #tpu.dot_dimension_numbers<[1], [0], [0], [1], [0, 0, 1, 1], [], []>} : vector<256x128xbf16>, vector<128x128xbf16>, vector<256x128xf32> -> vector<256x128xf32>
    %12 = vector.broadcast %5 : vector<1x128xf32> to vector<256x128xf32>
    %13 = arith.addf %11, %12 : vector<256x128xf32>
    %cst_18 = arith.constant 0.000000e+00 : f32
    %14 = vector.broadcast %cst_18 : f32 to vector<256x128xf32>
    %15 = arith.maximumf %13, %14 : vector<256x128xf32>
    %16 = arith.truncf %15 : vector<256x128xf32> to vector<256x128xbf16>
    %cst_19 = arith.constant dense<0.000000e+00> : vector<256x128xf32>
    %17 = tpu.matmul %16, %2, %cst_19 {dimension_numbers = #tpu.dot_dimension_numbers<[1], [0], [0], [1], [0, 0, 1, 1], [], []>} : vector<256x128xbf16>, vector<128x128xbf16>, vector<256x128xf32> -> vector<256x128xf32>
    %18 = vector.broadcast %6 : vector<1x128xf32> to vector<256x128xf32>
    %19 = arith.addf %17, %18 : vector<256x128xf32>
    %20 = arith.truncf %19 : vector<256x128xf32> to vector<256x128xbf16>
    %21 = math.tanh %20 : vector<256x128xbf16>
    %cst_20 = arith.constant dense<0.000000e+00> : vector<256x128xf32>
    %22 = tpu.matmul %8, %3, %cst_20 {dimension_numbers = #tpu.dot_dimension_numbers<[1], [0], [0], [1], [0, 0, 1, 1], [], []>} : vector<256x128xbf16>, vector<128x128xbf16>, vector<256x128xf32> -> vector<256x128xf32>
    %cst_21 = arith.constant dense<0.000000e+00> : vector<256x128xf32>
    %23 = tpu.matmul %21, %4, %cst_21 {dimension_numbers = #tpu.dot_dimension_numbers<[1], [0], [0], [1], [0, 0, 1, 1], [], []>} : vector<256x128xbf16>, vector<128x128xbf16>, vector<256x128xf32> -> vector<256x128xf32>
    %24 = arith.addf %22, %23 : vector<256x128xf32>
    %25 = vector.broadcast %7 : vector<1x128xf32> to vector<256x128xf32>
    %26 = arith.addf %24, %25 : vector<256x128xf32>
    %27 = arith.truncf %26 : vector<256x128xf32> to vector<256x128xbf16>
    %28 = math.tanh %27 : vector<256x128xbf16>
    %cst_22 = arith.constant dense<0.000000e+00> : vector<256x128xf32>
    %29 = tpu.matmul %0, %28, %cst_22 {dimension_numbers = #tpu.dot_dimension_numbers<[1], [0], [0], [1], [0, 0, 1, 1], [], []>} : vector<256x256xbf16>, vector<256x128xbf16>, vector<256x128xf32> -> vector<256x128xf32>
    %30 = arith.truncf %29 : vector<256x128xf32> to vector<256x128xbf16>
    %cst_23 = arith.constant dense<0.000000e+00> : vector<256x128xf32>
    %31 = tpu.matmul %30, %1, %cst_23 {dimension_numbers = #tpu.dot_dimension_numbers<[1], [0], [0], [1], [0, 0, 1, 1], [], []>} : vector<256x128xbf16>, vector<128x128xbf16>, vector<256x128xf32> -> vector<256x128xf32>
    %32 = vector.broadcast %5 : vector<1x128xf32> to vector<256x128xf32>
    %33 = arith.addf %31, %32 : vector<256x128xf32>
    %cst_24 = arith.constant 0.000000e+00 : f32
    %34 = vector.broadcast %cst_24 : f32 to vector<256x128xf32>
    %35 = arith.maximumf %33, %34 : vector<256x128xf32>
    %36 = arith.truncf %35 : vector<256x128xf32> to vector<256x128xbf16>
    %cst_25 = arith.constant dense<0.000000e+00> : vector<256x128xf32>
    %37 = tpu.matmul %36, %2, %cst_25 {dimension_numbers = #tpu.dot_dimension_numbers<[1], [0], [0], [1], [0, 0, 1, 1], [], []>} : vector<256x128xbf16>, vector<128x128xbf16>, vector<256x128xf32> -> vector<256x128xf32>
    %38 = vector.broadcast %6 : vector<1x128xf32> to vector<256x128xf32>
    %39 = arith.addf %37, %38 : vector<256x128xf32>
    %40 = arith.truncf %39 : vector<256x128xf32> to vector<256x128xbf16>
    %41 = math.tanh %40 : vector<256x128xbf16>
    %cst_26 = arith.constant dense<0.000000e+00> : vector<256x128xf32>
    %42 = tpu.matmul %28, %3, %cst_26 {dimension_numbers = #tpu.dot_dimension_numbers<[1], [0], [0], [1], [0, 0, 1, 1], [], []>} : vector<256x128xbf16>, vector<128x128xbf16>, vector<256x128xf32> -> vector<256x128xf32>
    %cst_27 = arith.constant dense<0.000000e+00> : vector<256x128xf32>
    %43 = tpu.matmul %41, %4, %cst_27 {dimension_numbers = #tpu.dot_dimension_numbers<[1], [0], [0], [1], [0, 0, 1, 1], [], []>} : vector<256x128xbf16>, vector<128x128xbf16>, vector<256x128xf32> -> vector<256x128xf32>
    %44 = arith.addf %42, %43 : vector<256x128xf32>
    %45 = vector.broadcast %7 : vector<1x128xf32> to vector<256x128xf32>
    %46 = arith.addf %44, %45 : vector<256x128xf32>
    %47 = arith.truncf %46 : vector<256x128xf32> to vector<256x128xbf16>
    %48 = math.tanh %47 : vector<256x128xbf16>
    %cst_28 = arith.constant dense<0.000000e+00> : vector<256x128xf32>
    %49 = tpu.matmul %0, %48, %cst_28 {dimension_numbers = #tpu.dot_dimension_numbers<[1], [0], [0], [1], [0, 0, 1, 1], [], []>} : vector<256x256xbf16>, vector<256x128xbf16>, vector<256x128xf32> -> vector<256x128xf32>
    %50 = arith.truncf %49 : vector<256x128xf32> to vector<256x128xbf16>
    %cst_29 = arith.constant dense<0.000000e+00> : vector<256x128xf32>
    %51 = tpu.matmul %50, %1, %cst_29 {dimension_numbers = #tpu.dot_dimension_numbers<[1], [0], [0], [1], [0, 0, 1, 1], [], []>} : vector<256x128xbf16>, vector<128x128xbf16>, vector<256x128xf32> -> vector<256x128xf32>
    %52 = vector.broadcast %5 : vector<1x128xf32> to vector<256x128xf32>
    %53 = arith.addf %51, %52 : vector<256x128xf32>
    %cst_30 = arith.constant 0.000000e+00 : f32
    %54 = vector.broadcast %cst_30 : f32 to vector<256x128xf32>
    %55 = arith.maximumf %53, %54 : vector<256x128xf32>
    %56 = arith.truncf %55 : vector<256x128xf32> to vector<256x128xbf16>
    %cst_31 = arith.constant dense<0.000000e+00> : vector<256x128xf32>
    %57 = tpu.matmul %56, %2, %cst_31 {dimension_numbers = #tpu.dot_dimension_numbers<[1], [0], [0], [1], [0, 0, 1, 1], [], []>} : vector<256x128xbf16>, vector<128x128xbf16>, vector<256x128xf32> -> vector<256x128xf32>
    %58 = vector.broadcast %6 : vector<1x128xf32> to vector<256x128xf32>
    %59 = arith.addf %57, %58 : vector<256x128xf32>
    %60 = arith.truncf %59 : vector<256x128xf32> to vector<256x128xbf16>
    %61 = math.tanh %60 : vector<256x128xbf16>
    %cst_32 = arith.constant dense<0.000000e+00> : vector<256x128xf32>
    %62 = tpu.matmul %48, %3, %cst_32 {dimension_numbers = #tpu.dot_dimension_numbers<[1], [0], [0], [1], [0, 0, 1, 1], [], []>} : vector<256x128xbf16>, vector<128x128xbf16>, vector<256x128xf32> -> vector<256x128xf32>
    %cst_33 = arith.constant dense<0.000000e+00> : vector<256x128xf32>
    %63 = tpu.matmul %61, %4, %cst_33 {dimension_numbers = #tpu.dot_dimension_numbers<[1], [0], [0], [1], [0, 0, 1, 1], [], []>} : vector<256x128xbf16>, vector<128x128xbf16>, vector<256x128xf32> -> vector<256x128xf32>
    %64 = arith.addf %62, %63 : vector<256x128xf32>
    %65 = vector.broadcast %7 : vector<1x128xf32> to vector<256x128xf32>
    %66 = arith.addf %64, %65 : vector<256x128xf32>
    %67 = arith.truncf %66 : vector<256x128xf32> to vector<256x128xbf16>
    %68 = math.tanh %67 : vector<256x128xbf16>
    %c0_34 = arith.constant 0 : index
    %c0_35 = arith.constant 0 : index
    %69 = vector.load %arg10[%c0_34, %c0_35] : memref<256x128xbf16, #tpu.memory_space<vmem>>, vector<256x128xbf16>
    tpu.vector_store %arg10[%c0_34, %c0_35], %68 {strides = array<i32>} : memref<256x128xbf16, #tpu.memory_space<vmem>>, vector<256x128xbf16>,
    return
  }
  func.func @transform_0(%arg0: i32) -> (i32, i32) {
    %c0_i32 = arith.constant 0 : i32
    %c0_i32_0 = arith.constant 0 : i32
    return %arg0, %c0_i32 : i32, i32
  }
  func.func @transform_1(%arg0: i32) -> (i32, i32) {
    %c0_i32 = arith.constant 0 : i32
    %c0_i32_0 = arith.constant 0 : i32
    return %arg0, %c0_i32 : i32, i32
  }
  func.func @transform_2(%arg0: i32) -> (i32, i32) {
    %c0_i32 = arith.constant 0 : i32
    %c0_i32_0 = arith.constant 0 : i32
    %c0_i32_1 = arith.constant 0 : i32
    return %c0_i32, %c0_i32_0 : i32, i32
  }
  func.func @transform_3(%arg0: i32) -> (i32, i32) {
    %c0_i32 = arith.constant 0 : i32
    %c0_i32_0 = arith.constant 0 : i32
    %c0_i32_1 = arith.constant 0 : i32
    return %c0_i32, %c0_i32_0 : i32, i32
  }
  func.func @transform_4(%arg0: i32) -> (i32, i32) {
    %c0_i32 = arith.constant 0 : i32
    %c0_i32_0 = arith.constant 0 : i32
    %c0_i32_1 = arith.constant 0 : i32
    return %c0_i32, %c0_i32_0 : i32, i32
  }
  func.func @transform_5(%arg0: i32) -> (i32, i32) {
    %c0_i32 = arith.constant 0 : i32
    %c0_i32_0 = arith.constant 0 : i32
    %c0_i32_1 = arith.constant 0 : i32
    return %c0_i32, %c0_i32_0 : i32, i32
  }
  func.func @transform_6(%arg0: i32) -> (i32, i32) {
    %c0_i32 = arith.constant 0 : i32
    %c0_i32_0 = arith.constant 0 : i32
    %c0_i32_1 = arith.constant 0 : i32
    return %c0_i32, %c0_i32_0 : i32, i32
  }
  func.func @transform_7(%arg0: i32) -> (i32, i32) {
    %c0_i32 = arith.constant 0 : i32
    %c0_i32_0 = arith.constant 0 : i32
    %c0_i32_1 = arith.constant 0 : i32
    return %c0_i32, %c0_i32_0 : i32, i32
  }
  func.func @transform_8(%arg0: i32) -> (i32, i32) {
    %c0_i32 = arith.constant 0 : i32
    %c0_i32_0 = arith.constant 0 : i32
    %c0_i32_1 = arith.constant 0 : i32
    return %c0_i32, %c0_i32_0 : i32, i32
  }
  func.func @transform_9(%arg0: i32) -> (i32, i32) {
    %c0_i32 = arith.constant 0 : i32
    %c0_i32_0 = arith.constant 0 : i32
    return %arg0, %c0_i32 : i32, i32
  }
}

</mosaic_0001>

<llo_original>
// kernel: tpu_custom_call.1
$region0: #{tpu_custom_call.1}
  #allocation0 [shape = 'u32[]', space=smem, size = 0x4, offset = 0x4, fixed_abs, tag = 'smem constant byte address 0x4 - core index']
  #allocation1 [shape = 'u32[144,128]{1,0:T(1,128)}', space=vmem, size = 0x12000, scoped, tag = 'internal scratch']
  %s0 = inlined_call_operand.hbm [shape: bf16[256,256], index: 0, kind: input, shape index: {}]
  %s1 = inlined_call_operand.hbm [shape: bf16[256,128], index: 1, kind: input, shape index: {}]
  %s2 = inlined_call_operand.hbm [shape: bf16[128,128], index: 2, kind: input, shape index: {}]
  %s3 = inlined_call_operand.vmem [shape: f32[1,128], index: 3, kind: input, shape index: {}]
  %s4 = inlined_call_operand.hbm [shape: bf16[128,128], index: 4, kind: input, shape index: {}]
  %s5 = inlined_call_operand.vmem [shape: f32[1,128], index: 5, kind: input, shape index: {}]
  %s6 = inlined_call_operand.hbm [shape: bf16[128,128], index: 6, kind: input, shape index: {}]
  %s7 = inlined_call_operand.hbm [shape: bf16[128,128], index: 7, kind: input, shape index: {}]
  %s8 = inlined_call_operand.vmem [shape: f32[1,128], index: 8, kind: input, shape index: {}]
  %s9 = inlined_call_operand.hbm [shape: bf16[256,128], index: 9, kind: output, shape index: {}]
  %s10 = sld [smem:[#allocation0]]
  $region70: #{tpu_custom_call.1} parent=0
    _
  %s12 = ssub.s32 1, %s10
  %s13 = scalar_select 0, %s12, %s10
  $region1: #{tpu_custom_call.1} parent=0
    #allocation2 [shape = 'u8[131072]{0}', space=vmem, size = 0x20000, scoped, tag = 'input window, operand 0, single buffered']
    #allocation3 [shape = 's32[1]{0}', space=sflag, size = 0x4, scoped, tag = 'scoped memory for tpu_custom_call.1']
    #allocation4 [shape = 's32[1]{0}', space=sflag, size = 0x4, scoped, tag = 'scoped memory for tpu_custom_call.1']
    #allocation5 [shape = 'u8[65536]{0}', space=vmem, size = 0x10000, scoped, tag = 'input window, operand 1, single buffered']
    #allocation6 [shape = 's32[1]{0}', space=sflag, size = 0x4, scoped, tag = 'scoped memory for tpu_custom_call.1']
    #allocation7 [shape = 'u8[32768]{0}', space=vmem, size = 0x8000, scoped, tag = 'input window, operand 2, single buffered']
    #allocation8 [shape = 'u8[32768]{0}', space=vmem, size = 0x8000, scoped, tag = 'input window, operand 4, single buffered']
    #allocation9 [shape = 's32[1]{0}', space=sflag, size = 0x4, scoped, tag = 'scoped memory for tpu_custom_call.1']
    #allocation10 [shape = 'u8[32768]{0}', space=vmem, size = 0x8000, scoped, tag = 'input window, operand 6, single buffered']
    #allocation11 [shape = 'u8[32768]{0}', space=vmem, size = 0x8000, scoped, tag = 'input window, operand 7, single buffered']
    #allocation12 [shape = 's32[1]{0}', space=sflag, size = 0x4, scoped, tag = 'scoped memory for tpu_custom_call.1']
    #allocation13 [shape = 'u8[65536]{0}', space=vmem, size = 0x10000, scoped, tag = 'output window, operand 0, single buffered']
    %14 = vsyncpa [#allocation3], 0
    %15 = vsyncpa [#allocation6], 0
    %16 = vsyncpa [#allocation9], 0
    %17 = vsyncpa [#allocation12], 0
    %18 = vsyncpa [#allocation4], 0
    // Predicated region
    $region2: #{tpu_custom_call.1} parent=1 // pred_check
      _
    $region3: #{tpu_custom_call.1} parent=1 // pred_check_branch
      %20 = sbr.rel (0) target = $region5
    $region4: #{tpu_custom_call.1} parent=1 // pred_region
      %s22 = ssub.s32 4096, 4096
      %23 = vsyncadd [#allocation3], %s22
      %s24 = sshll.u32 [#allocation2], 4
      %s25 = int_to_ptr.vmem [resolvable:$true] %s24
      %30 = dma.hbm_to_vmem [thread:$0]  %s0, 4096, %s25, [#allocation3], 128, 128, 8
    $region5: #{tpu_custom_call.1} parent=1 // pred_fallthru
      _
    // Predicated region
    $region6: #{tpu_custom_call.1} parent=1 // pred_check
      _
    $region7: #{tpu_custom_call.1} parent=1 // pred_check_branch
      %32 = sbr.rel (0) target = $region9
    $region8: #{tpu_custom_call.1} parent=1 // pred_region
      %s34 = ssub.s32 2048, 2048
      %35 = vsyncadd [#allocation6], %s34
      %s36 = sshll.u32 [#allocation5], 4
      %s37 = int_to_ptr.vmem [resolvable:$true] %s36
      %42 = dma.hbm_to_vmem [thread:$0]  %s1, 2048, %s37, [#allocation6], 64, 64, 4
    $region9: #{tpu_custom_call.1} parent=1 // pred_fallthru
      _
    // Predicated region
    $region10: #{tpu_custom_call.1} parent=1 // pred_check
      _
    $region11: #{tpu_custom_call.1} parent=1 // pred_check_branch
      %44 = sbr.rel (0) target = $region13
    $region12: #{tpu_custom_call.1} parent=1 // pred_region
      %s46 = ssub.s32 1024, 1024
      %47 = vsyncadd [#allocation6], %s46
      %s48 = sshll.u32 [#allocation7], 4
      %s49 = int_to_ptr.vmem [resolvable:$true] %s48
      %54 = dma.hbm_to_vmem [thread:$0]  %s2, 1024, %s49, [#allocation6], 64, 64, 4
    $region13: #{tpu_custom_call.1} parent=1 // pred_fallthru
      _
    // Predicated region
    $region14: #{tpu_custom_call.1} parent=1 // pred_check
      _
    $region15: #{tpu_custom_call.1} parent=1 // pred_check_branch
      %56 = sbr.rel (0) target = $region17
    $region16: #{tpu_custom_call.1} parent=1 // pred_region
      _
    $region17: #{tpu_custom_call.1} parent=1 // pred_fallthru
      _
    // Predicated region
    $region18: #{tpu_custom_call.1} parent=1 // pred_check
      _
    $region19: #{tpu_custom_call.1} parent=1 // pred_check_branch
      %58 = sbr.rel (0) target = $region21
    $region20: #{tpu_custom_call.1} parent=1 // pred_region
      %s60 = ssub.s32 1024, 1024
      %61 = vsyncadd [#allocation9], %s60
      %s62 = sshll.u32 [#allocation8], 4
      %s63 = int_to_ptr.vmem [resolvable:$true] %s62
      %68 = dma.hbm_to_vmem [thread:$0]  %s4, 1024, %s63, [#allocation9], 64, 64, 4
    $region21: #{tpu_custom_call.1} parent=1 // pred_fallthru
      _
    // Predicated region
    $region22: #{tpu_custom_call.1} parent=1 // pred_check
      _
    $region23: #{tpu_custom_call.1} parent=1 // pred_check_branch
      %70 = sbr.rel (0) target = $region25
    $region24: #{tpu_custom_call.1} parent=1 // pred_region
      _
    $region25: #{tpu_custom_call.1} parent=1 // pred_fallthru
      _
    // Predicated region
    $region26: #{tpu_custom_call.1} parent=1 // pred_check
      _
    $region27: #{tpu_custom_call.1} parent=1 // pred_check_branch
      %72 = sbr.rel (0) target = $region29
    $region28: #{tpu_custom_call.1} parent=1 // pred_region
      %s74 = ssub.s32 1024, 1024
      %75 = vsyncadd [#allocation9], %s74
      %s76 = sshll.u32 [#allocation10], 4
      %s77 = int_to_ptr.vmem [resolvable:$true] %s76
      %82 = dma.hbm_to_vmem [thread:$0]  %s6, 1024, %s77, [#allocation9], 64, 64, 4
    $region29: #{tpu_custom_call.1} parent=1 // pred_fallthru
      _
    // Predicated region
    $region30: #{tpu_custom_call.1} parent=1 // pred_check
      _
    $region31: #{tpu_custom_call.1} parent=1 // pred_check_branch
      %84 = sbr.rel (0) target = $region33
    $region32: #{tpu_custom_call.1} parent=1 // pred_region
      %s86 = ssub.s32 1024, 1024
      %87 = vsyncadd [#allocation12], %s86
      %s88 = sshll.u32 [#allocation11], 4
      %s89 = int_to_ptr.vmem [resolvable:$true] %s88
      %94 = dma.hbm_to_vmem [thread:$0]  %s7, 1024, %s89, [#allocation12], 64, 64, 4
    $region33: #{tpu_custom_call.1} parent=1 // pred_fallthru
      _
    // Predicated region
    $region34: #{tpu_custom_call.1} parent=1 // pred_check
      _
    $region35: #{tpu_custom_call.1} parent=1 // pred_check_branch
      %96 = sbr.rel (0) target = $region37
    $region36: #{tpu_custom_call.1} parent=1 // pred_region
      _
    $region37: #{tpu_custom_call.1} parent=1 // pred_fallthru
      _
    // Predicated region
    $region38: #{tpu_custom_call.1} parent=1 // pred_check
      _
    $region39: #{tpu_custom_call.1} parent=1 // pred_check_branch
      %98 = sbr.rel (0) target = $region41
    $region40: #{tpu_custom_call.1} parent=1 // pred_region
      %99 = dma.done [#allocation3], 4096
    $region41: #{tpu_custom_call.1} parent=1 // pred_fallthru
      _
    // Predicated region
    $region42: #{tpu_custom_call.1} parent=1 // pred_check
      _
    $region43: #{tpu_custom_call.1} parent=1 // pred_check_branch
      %101 = sbr.rel (0) target = $region45
    $region44: #{tpu_custom_call.1} parent=1 // pred_region
      %102 = dma.done [#allocation6], 2048
    $region45: #{tpu_custom_call.1} parent=1 // pred_fallthru
      _
    // Predicated region
    $region46: #{tpu_custom_call.1} parent=1 // pred_check
      _
    $region47: #{tpu_custom_call.1} parent=1 // pred_check_branch
      %104 = sbr.rel (0) target = $region49
    $region48: #{tpu_custom_call.1} parent=1 // pred_region
      %105 = dma.done [#allocation6], 1024
    $region49: #{tpu_custom_call.1} parent=1 // pred_fallthru
      _
    // Predicated region
    $region50: #{tpu_custom_call.1} parent=1 // pred_check
      _
    $region51: #{tpu_custom_call.1} parent=1 // pred_check_branch
      %107 = sbr.rel (0) target = $region53
    $region52: #{tpu_custom_call.1} parent=1 // pred_region
      %108 = dma.done [#allocation9], 1024
    $region53: #{tpu_custom_call.1} parent=1 // pred_fallthru
      _
    // Predicated region
    $region54: #{tpu_custom_call.1} parent=1 // pred_check
      _
    $region55: #{tpu_custom_call.1} parent=1 // pred_check_branch
      %110 = sbr.rel (0) target = $region57
    $region56: #{tpu_custom_call.1} parent=1 // pred_region
      %111 = dma.done [#allocation9], 1024
    $region57: #{tpu_custom_call.1} parent=1 // pred_fallthru
      _
    // Predicated region
    $region58: #{tpu_custom_call.1} parent=1 // pred_check
      _
    $region59: #{tpu_custom_call.1} parent=1 // pred_check_branch
      %113 = sbr.rel (0) target = $region61
    $region60: #{tpu_custom_call.1} parent=1 // pred_region
      %114 = dma.done [#allocation12], 1024
    $region61: #{tpu_custom_call.1} parent=1 // pred_fallthru
      _
    %v116 = vld [vmem:[#allocation2] sm:$0xff]
    %v117 = vld [vmem:[#allocation2 + $0x8] sm:$0xff]
    %v118 = vld [vmem:[#allocation2 + $0x10] sm:$0xff]
    %v119 = vld [vmem:[#allocation2 + $0x18] sm:$0xff]
    %v120 = vld [vmem:[#allocation2 + $0x20] sm:$0xff]
    %v121 = vld [vmem:[#allocation2 + $0x28] sm:$0xff]
    %v122 = vld [vmem:[#allocation2 + $0x30] sm:$0xff]
    %v123 = vld [vmem:[#allocation2 + $0x38] sm:$0xff]
    %v124 = vld [vmem:[#allocation2 + $0x40] sm:$0xff]
    %v125 = vld [vmem:[#allocation2 + $0x48] sm:$0xff]
    %v126 = vld [vmem:[#allocation2 + $0x50] sm:$0xff]
    %v127 = vld [vmem:[#allocation2 + $0x58] sm:$0xff]
    %v128 = vld [vmem:[#allocation2 + $0x60] sm:$0xff]
    %v129 = vld [vmem:[#allocation2 + $0x68] sm:$0xff]
    %v130 = vld [vmem:[#allocation2 + $0x70] sm:$0xff]
    %v131 = vld [vmem:[#allocation2 + $0x78] sm:$0xff]
    %v132 = vld [vmem:[#allocation2 + $0x80] sm:$0xff]
    %v133 = vld [vmem:[#allocation2 + $0x88] sm:$0xff]
    %v134 = vld [vmem:[#allocation2 + $0x90] sm:$0xff]
    %v135 = vld [vmem:[#allocation2 + $0x98] sm:$0xff]
    %v136 = vld [vmem:[#allocation2 + $0xa0] sm:$0xff]
    %v137 = vld [vmem:[#allocation2 + $0xa8] sm:$0xff]
    %v138 = vld [vmem:[#allocation2 + $0xb0] sm:$0xff]
    %v139 = vld [vmem:[#allocation2 + $0xb8] sm:$0xff]
    %v140 = vld [vmem:[#allocation2 + $0xc0] sm:$0xff]
    %v141 = vld [vmem:[#allocation2 + $0xc8] sm:$0xff]
    %v142 = vld [vmem:[#allocation2 + $0xd0] sm:$0xff]
    %v143 = vld [vmem:[#allocation2 + $0xd8] sm:$0xff]
    %v144 = vld [vmem:[#allocation2 + $0xe0] sm:$0xff]
    %v145 = vld [vmem:[#allocation2 + $0xe8] sm:$0xff]
    %v146 = vld [vmem:[#allocation2 + $0xf0] sm:$0xff]
    %v147 = vld [vmem:[#allocation2 + $0xf8] sm:$0xff]
    %v148 = vld [vmem:[#allocation7] sm:$0xf]
    %v149 = vld [vmem:[#allocation7 + $0x4] sm:$0xf]
    %v150 = vld [vmem:[#allocation7 + $0x8] sm:$0xf]
    %v151 = vld [vmem:[#allocation7 + $0xc] sm:$0xf]
    %v152 = vld [vmem:[#allocation7 + $0x10] sm:$0xf]
    %v153 = vld [vmem:[#allocation7 + $0x14] sm:$0xf]
    %v154 = vld [vmem:[#allocation7 + $0x18] sm:$0xf]
    %v155 = vld [vmem:[#allocation7 + $0x1c] sm:$0xf]
    %v156 = vld [vmem:[#allocation7 + $0x20] sm:$0xf]
    %v157 = vld [vmem:[#allocation7 + $0x24] sm:$0xf]
    %v158 = vld [vmem:[#allocation7 + $0x28] sm:$0xf]
    %v159 = vld [vmem:[#allocation7 + $0x2c] sm:$0xf]
    %v160 = vld [vmem:[#allocation7 + $0x30] sm:$0xf]
    %v161 = vld [vmem:[#allocation7 + $0x34] sm:$0xf]
    %v162 = vld [vmem:[#allocation7 + $0x38] sm:$0xf]
    %v163 = vld [vmem:[#allocation7 + $0x3c] sm:$0xf]
    %v164 = vld [vmem:[#allocation8] sm:$0xf]
    %v165 = vld [vmem:[#allocation8 + $0x4] sm:$0xf]
    %v166 = vld [vmem:[#allocation8 + $0x8] sm:$0xf]
    %v167 = vld [vmem:[#allocation8 + $0xc] sm:$0xf]
    %v168 = vld [vmem:[#allocation8 + $0x10] sm:$0xf]
    %v169 = vld [vmem:[#allocation8 + $0x14] sm:$0xf]
    %v170 = vld [vmem:[#allocation8 + $0x18] sm:$0xf]
    %v171 = vld [vmem:[#allocation8 + $0x1c] sm:$0xf]
    %v172 = vld [vmem:[#allocation8 + $0x20] sm:$0xf]
    %v173 = vld [vmem:[#allocation8 + $0x24] sm:$0xf]
    %v174 = vld [vmem:[#allocation8 + $0x28] sm:$0xf]
    %v175 = vld [vmem:[#allocation8 + $0x2c] sm:$0xf]
    %v176 = vld [vmem:[#allocation8 + $0x30] sm:$0xf]
    %v177 = vld [vmem:[#allocation8 + $0x34] sm:$0xf]
    %v178 = vld [vmem:[#allocation8 + $0x38] sm:$0xf]
    %v179 = vld [vmem:[#allocation8 + $0x3c] sm:$0xf]
    %v180 = vld [vmem:[#allocation10] sm:$0xf]
    %v181 = vld [vmem:[#allocation10 + $0x4] sm:$0xf]
    %v182 = vld [vmem:[#allocation10 + $0x8] sm:$0xf]
    %v183 = vld [vmem:[#allocation10 + $0xc] sm:$0xf]
    %v184 = vld [vmem:[#allocation10 + $0x10] sm:$0xf]
    %v185 = vld [vmem:[#allocation10 + $0x14] sm:$0xf]
    %v186 = vld [vmem:[#allocation10 + $0x18] sm:$0xf]
    %v187 = vld [vmem:[#allocation10 + $0x1c] sm:$0xf]
    %v188 = vld [vmem:[#allocation10 + $0x20] sm:$0xf]
    %v189 = vld [vmem:[#allocation10 + $0x24] sm:$0xf]
    %v190 = vld [vmem:[#allocation10 + $0x28] sm:$0xf]
    %v191 = vld [vmem:[#allocation10 + $0x2c] sm:$0xf]
    %v192 = vld [vmem:[#allocation10 + $0x30] sm:$0xf]
    %v193 = vld [vmem:[#allocation10 + $0x34] sm:$0xf]
    %v194 = vld [vmem:[#allocation10 + $0x38] sm:$0xf]
    %v195 = vld [vmem:[#allocation10 + $0x3c] sm:$0xf]
    %v196 = vld [vmem:[#allocation11] sm:$0xf]
    %v197 = vld [vmem:[#allocation11 + $0x4] sm:$0xf]
    %v198 = vld [vmem:[#allocation11 + $0x8] sm:$0xf]
    %v199 = vld [vmem:[#allocation11 + $0xc] sm:$0xf]
    %v200 = vld [vmem:[#allocation11 + $0x10] sm:$0xf]
    %v201 = vld [vmem:[#allocation11 + $0x14] sm:$0xf]
    %v202 = vld [vmem:[#allocation11 + $0x18] sm:$0xf]
    %v203 = vld [vmem:[#allocation11 + $0x1c] sm:$0xf]
    %v204 = vld [vmem:[#allocation11 + $0x20] sm:$0xf]
    %v205 = vld [vmem:[#allocation11 + $0x24] sm:$0xf]
    %v206 = vld [vmem:[#allocation11 + $0x28] sm:$0xf]
    %v207 = vld [vmem:[#allocation11 + $0x2c] sm:$0xf]
    %v208 = vld [vmem:[#allocation11 + $0x30] sm:$0xf]
    %v209 = vld [vmem:[#allocation11 + $0x34] sm:$0xf]
    %v210 = vld [vmem:[#allocation11 + $0x38] sm:$0xf]
    %v211 = vld [vmem:[#allocation11 + $0x3c] sm:$0xf]
    %v212 = vld [vmem:[%s3] sm:$0x1]
    %v213 = vld [vmem:[%s5] sm:$0x1]
    %v214 = vld [vmem:[%s8] sm:$0x1]
    %v215 = vld [vmem:[#allocation5] sm:$0xf]
    %v216 = vld [vmem:[#allocation5 + $0x4] sm:$0xf]
    %v217 = vld [vmem:[#allocation5 + $0x8] sm:$0xf]
    %v218 = vld [vmem:[#allocation5 + $0xc] sm:$0xf]
    %v219 = vld [vmem:[#allocation5 + $0x10] sm:$0xf]
    %v220 = vld [vmem:[#allocation5 + $0x14] sm:$0xf]
    %v221 = vld [vmem:[#allocation5 + $0x18] sm:$0xf]
    %v222 = vld [vmem:[#allocation5 + $0x1c] sm:$0xf]
    %v223 = vld [vmem:[#allocation5 + $0x20] sm:$0xf]
    %v224 = vld [vmem:[#allocation5 + $0x24] sm:$0xf]
    %v225 = vld [vmem:[#allocation5 + $0x28] sm:$0xf]
    %v226 = vld [vmem:[#allocation5 + $0x2c] sm:$0xf]
    %v227 = vld [vmem:[#allocation5 + $0x30] sm:$0xf]
    %v228 = vld [vmem:[#allocation5 + $0x34] sm:$0xf]
    %v229 = vld [vmem:[#allocation5 + $0x38] sm:$0xf]
    %v230 = vld [vmem:[#allocation5 + $0x3c] sm:$0xf]
    %v231 = vld [vmem:[#allocation5 + $0x40] sm:$0xf]
    %v232 = vld [vmem:[#allocation5 + $0x44] sm:$0xf]
    %v233 = vld [vmem:[#allocation5 + $0x48] sm:$0xf]
    %v234 = vld [vmem:[#allocation5 + $0x4c] sm:$0xf]
    %v235 = vld [vmem:[#allocation5 + $0x50] sm:$0xf]
    %v236 = vld [vmem:[#allocation5 + $0x54] sm:$0xf]
    %v237 = vld [vmem:[#allocation5 + $0x58] sm:$0xf]
    %v238 = vld [vmem:[#allocation5 + $0x5c] sm:$0xf]
    %v239 = vld [vmem:[#allocation5 + $0x60] sm:$0xf]
    %v240 = vld [vmem:[#allocation5 + $0x64] sm:$0xf]
    %v241 = vld [vmem:[#allocation5 + $0x68] sm:$0xf]
    %v242 = vld [vmem:[#allocation5 + $0x6c] sm:$0xf]
    %v243 = vld [vmem:[#allocation5 + $0x70] sm:$0xf]
    %v244 = vld [vmem:[#allocation5 + $0x74] sm:$0xf]
    %v245 = vld [vmem:[#allocation5 + $0x78] sm:$0xf]
    %v246 = vld [vmem:[#allocation5 + $0x7c] sm:$0xf]
    %v279 = vunpack.c.l.b16 %v116
    %v280 = vunpack.c.h.b16 %v116
    %v281 = vunpack.c.l.b16 %v117
    %v282 = vunpack.c.h.b16 %v117
    %v283 = vunpack.c.l.b16 %v118
    %v284 = vunpack.c.h.b16 %v118
    %v285 = vunpack.c.l.b16 %v119
    %v286 = vunpack.c.h.b16 %v119
    %v287 = vunpack.c.l.b16 %v120
    %v288 = vunpack.c.h.b16 %v120
    %v289 = vunpack.c.l.b16 %v121
    %v290 = vunpack.c.h.b16 %v121
    %v291 = vunpack.c.l.b16 %v122
    %v292 = vunpack.c.h.b16 %v122
    %v293 = vunpack.c.l.b16 %v123
    %v294 = vunpack.c.h.b16 %v123
    %v295 = vunpack.c.l.b16 %v124
    %v296 = vunpack.c.h.b16 %v124
    %v297 = vunpack.c.l.b16 %v125
    %v298 = vunpack.c.h.b16 %v125
    %v299 = vunpack.c.l.b16 %v126
    %v300 = vunpack.c.h.b16 %v126
    %v301 = vunpack.c.l.b16 %v127
    %v302 = vunpack.c.h.b16 %v127
    %v303 = vunpack.c.l.b16 %v128
    %v304 = vunpack.c.h.b16 %v128
    %v305 = vunpack.c.l.b16 %v129
    %v306 = vunpack.c.h.b16 %v129
    %v307 = vunpack.c.l.b16 %v130
    %v308 = vunpack.c.h.b16 %v130
    %v309 = vunpack.c.l.b16 %v131
    %v310 = vunpack.c.h.b16 %v131
    %v311 = vunpack.c.l.b16 %v132
    %v312 = vunpack.c.h.b16 %v132
    %v313 = vunpack.c.l.b16 %v133
    %v314 = vunpack.c.h.b16 %v133
    %v315 = vunpack.c.l.b16 %v134
    %v316 = vunpack.c.h.b16 %v134
    %v317 = vunpack.c.l.b16 %v135
    %v318 = vunpack.c.h.b16 %v135
    %v319 = vunpack.c.l.b16 %v136
    %v320 = vunpack.c.h.b16 %v136
    %v321 = vunpack.c.l.b16 %v137
    %v322 = vunpack.c.h.b16 %v137
    %v323 = vunpack.c.l.b16 %v138
    %v324 = vunpack.c.h.b16 %v138
    %v325 = vunpack.c.l.b16 %v139
    %v326 = vunpack.c.h.b16 %v139
    %v327 = vunpack.c.l.b16 %v140
    %v328 = vunpack.c.h.b16 %v140
    %v329 = vunpack.c.l.b16 %v141
    %v330 = vunpack.c.h.b16 %v141
    %v331 = vunpack.c.l.b16 %v142
    %v332 = vunpack.c.h.b16 %v142
    %v333 = vunpack.c.l.b16 %v143
    %v334 = vunpack.c.h.b16 %v143
    %v335 = vunpack.c.l.b16 %v144
    %v336 = vunpack.c.h.b16 %v144
    %v337 = vunpack.c.l.b16 %v145
    %v338 = vunpack.c.h.b16 %v145
    %v339 = vunpack.c.l.b16 %v146
    %v340 = vunpack.c.h.b16 %v146
    %v341 = vunpack.c.l.b16 %v147
    %v342 = vunpack.c.h.b16 %v147
    %v343 = vpack.c.b16 %v281, %v279
    %v344 = vpack.c.b16 %v282, %v280
    %v345 = vpack.c.b16 %v285, %v283
    %v346 = vpack.c.b16 %v286, %v284
    %v347 = vpack.c.b16 %v289, %v287
    %v348 = vpack.c.b16 %v290, %v288
    %v349 = vpack.c.b16 %v293, %v291
    %v350 = vpack.c.b16 %v294, %v292
    %v351 = vpack.c.b16 %v297, %v295
    %v352 = vpack.c.b16 %v298, %v296
    %v353 = vpack.c.b16 %v301, %v299
    %v354 = vpack.c.b16 %v302, %v300
    %v355 = vpack.c.b16 %v305, %v303
    %v356 = vpack.c.b16 %v306, %v304
    %v357 = vpack.c.b16 %v309, %v307
    %v358 = vpack.c.b16 %v310, %v308
    %v359 = vpack.c.b16 %v313, %v311
    %v360 = vpack.c.b16 %v314, %v312
    %v361 = vpack.c.b16 %v317, %v315
    %v362 = vpack.c.b16 %v318, %v316
    %v363 = vpack.c.b16 %v321, %v319
    %v364 = vpack.c.b16 %v322, %v320
    %v365 = vpack.c.b16 %v325, %v323
    %v366 = vpack.c.b16 %v326, %v324
    %v367 = vpack.c.b16 %v329, %v327
    %v368 = vpack.c.b16 %v330, %v328
    %v369 = vpack.c.b16 %v333, %v331
    %v370 = vpack.c.b16 %v334, %v332
    %v371 = vpack.c.b16 %v337, %v335
    %v372 = vpack.c.b16 %v338, %v336
    %v373 = vpack.c.b16 %v341, %v339
    %v374 = vpack.c.b16 %v342, %v340
    %v439 = vunpack.c.l.b16 %v215
    %v440 = vunpack.c.l.b16 %v216
    %v441 = vunpack.c.l.b16 %v217
    %v442 = vunpack.c.l.b16 %v218
    %v443 = vunpack.c.l.b16 %v219
    %v444 = vunpack.c.l.b16 %v220
    %v445 = vunpack.c.l.b16 %v221
    %v446 = vunpack.c.l.b16 %v222
    %v447 = vunpack.c.l.b16 %v223
    %v448 = vunpack.c.l.b16 %v224
    %v449 = vunpack.c.l.b16 %v225
    %v450 = vunpack.c.l.b16 %v226
    %v451 = vunpack.c.l.b16 %v227
    %v452 = vunpack.c.l.b16 %v228
    %v453 = vunpack.c.l.b16 %v229
    %v454 = vunpack.c.l.b16 %v230
    %v455 = vunpack.c.l.b16 %v231
    %v456 = vunpack.c.l.b16 %v232
    %v457 = vunpack.c.l.b16 %v233
    %v458 = vunpack.c.l.b16 %v234
    %v459 = vunpack.c.l.b16 %v235
    %v460 = vunpack.c.l.b16 %v236
    %v461 = vunpack.c.l.b16 %v237
    %v462 = vunpack.c.l.b16 %v238
    %v463 = vunpack.c.l.b16 %v239
    %v464 = vunpack.c.l.b16 %v240
    %v465 = vunpack.c.l.b16 %v241
    %v466 = vunpack.c.l.b16 %v242
    %v467 = vunpack.c.l.b16 %v243
    %v468 = vunpack.c.l.b16 %v244
    %v469 = vunpack.c.l.b16 %v245
    %v470 = vunpack.c.l.b16 %v246
    %v471 = vpack.c.b16 %v440, %v439
    %v472 = vpack.c.b16 %v442, %v441
    %v473 = vpack.c.b16 %v444, %v443
    %v474 = vpack.c.b16 %v446, %v445
    %v475 = vpack.c.b16 %v448, %v447
    %v476 = vpack.c.b16 %v450, %v449
    %v477 = vpack.c.b16 %v452, %v451
    %v478 = vpack.c.b16 %v454, %v453
    %v479 = vpack.c.b16 %v456, %v455
    %v480 = vpack.c.b16 %v458, %v457
    %v481 = vpack.c.b16 %v460, %v459
    %v482 = vpack.c.b16 %v462, %v461
    %v483 = vpack.c.b16 %v464, %v463
    %v484 = vpack.c.b16 %v466, %v465
    %v485 = vpack.c.b16 %v468, %v467
    %v486 = vpack.c.b16 %v470, %v469
    %503 = vmatprep.subr.bf16.mxu0 0
    %504 = vmatpush1.bf16.msra.mxu0 %v471
    %505 = vmatprep.subr.bf16.mxu0 0
    %506 = vmatpush1.bf16.msra.mxu0 %v472
    %507 = vmatprep.subr.bf16.mxu0 0
    %508 = vmatpush1.bf16.msra.mxu0 %v473
    %509 = vmatprep.subr.bf16.mxu0 0
    %510 = vmatpush1.bf16.msra.mxu0 %v474
    %511 = vmatprep.subr.bf16.mxu0 0
    %512 = vmatpush1.bf16.msra.mxu0 %v475
    %513 = vmatprep.subr.bf16.mxu0 0
    %514 = vmatpush1.bf16.msra.mxu0 %v476
    %515 = vmatprep.subr.bf16.mxu0 0
    %516 = vmatpush1.bf16.msra.mxu0 %v477
    %517 = vmatprep.subr.bf16.mxu0 0
    %518 = vmatpush1.bf16.msra.mxu0 %v478
    %519 = vmatprep.subr.bf16.mxu0 0
    %520 = vmatpush1.bf16.msra.mxu0 %v479
    %521 = vmatprep.subr.bf16.mxu0 0
    %522 = vmatpush1.bf16.msra.mxu0 %v480
    %523 = vmatprep.subr.bf16.mxu0 0
    %524 = vmatpush1.bf16.msra.mxu0 %v481
    %525 = vmatprep.subr.bf16.mxu0 0
    %526 = vmatpush1.bf16.msra.mxu0 %v482
    %527 = vmatprep.subr.bf16.mxu0 0
    %528 = vmatpush1.bf16.msra.mxu0 %v483
    %529 = vmatprep.subr.bf16.mxu0 0
    %530 = vmatpush1.bf16.msra.mxu0 %v484
    %531 = vmatprep.subr.bf16.mxu0 0
    %532 = vmatpush1.bf16.msra.mxu0 %v485
    %533 = vmatprep.subr.bf16.mxu0 0
    %534 = vmatpush1.bf16.msra.mxu0 %v486
    %535 = vmatprep.mubr.bf16.mxu0 %v344
    %536 = vmatmul.mubr.bf16.gmra.mrb[0].mxu0 %v343
    %v537 = vpop.f32.mrb[0].mxu0
    %v538 = vadd.f32 0.0, %v537
    %v539 = vpop.f32.mrb[0].mxu0
    %v540 = vpop.f32.mrb[0].mxu0
    %v541 = vadd.f32 0.0, %v540
    %v542 = vpop.f32.mrb[0].mxu0
    %543 = vmatprep.mubr.bf16.mxu0 %v346
    %544 = vmatmul.mubr.bf16.gmra.mrb[0].mxu0 %v345
    %v545 = vpop.f32.mrb[0].mxu0
    %v546 = vadd.f32 0.0, %v545
    %v547 = vpop.f32.mrb[0].mxu0
    %v548 = vpop.f32.mrb[0].mxu0
    %v549 = vadd.f32 0.0, %v548
    %v550 = vpop.f32.mrb[0].mxu0
    %551 = vmatprep.mubr.bf16.mxu0 %v348
    %552 = vmatmul.mubr.bf16.gmra.mrb[0].mxu0 %v347
    %v553 = vpop.f32.mrb[0].mxu0
    %v554 = vadd.f32 0.0, %v553
    %v555 = vpop.f32.mrb[0].mxu0
    %v556 = vpop.f32.mrb[0].mxu0
    %v557 = vadd.f32 0.0, %v556
    %v558 = vpop.f32.mrb[0].mxu0
    %559 = vmatprep.mubr.bf16.mxu0 %v350
    %560 = vmatmul.mubr.bf16.gmra.mrb[0].mxu0 %v349
    %v561 = vpop.f32.mrb[0].mxu0
    %v562 = vadd.f32 0.0, %v561
    %v563 = vpop.f32.mrb[0].mxu0
    %v564 = vpop.f32.mrb[0].mxu0
    %v565 = vadd.f32 0.0, %v564
    %v566 = vpop.f32.mrb[0].mxu0
    %567 = vmatprep.mubr.bf16.mxu0 %v352
    %568 = vmatmul.mubr.bf16.gmra.mrb[0].mxu0 %v351
    %v569 = vpop.f32.mrb[0].mxu0
    %v570 = vadd.f32 0.0, %v569
    %v571 = vpop.f32.mrb[0].mxu0
    %v572 = vpop.f32.mrb[0].mxu0
    %v573 = vadd.f32 0.0, %v572
    %v574 = vpop.f32.mrb[0].mxu0
    %575 = vmatprep.mubr.bf16.mxu0 %v354
    %576 = vmatmul.mubr.bf16.gmra.mrb[0].mxu0 %v353
    %v577 = vpop.f32.mrb[0].mxu0
    %v578 = vadd.f32 0.0, %v577
    %v579 = vpop.f32.mrb[0].mxu0
    %v580 = vpop.f32.mrb[0].mxu0
    %v581 = vadd.f32 0.0, %v580
    %v582 = vpop.f32.mrb[0].mxu0
    %583 = vmatprep.mubr.bf16.mxu0 %v356
    %584 = vmatmul.mubr.bf16.gmra.mrb[0].mxu0 %v355
    %v585 = vpop.f32.mrb[0].mxu0
    %v586 = vadd.f32 0.0, %v585
    %v587 = vpop.f32.mrb[0].mxu0
    %v588 = vpop.f32.mrb[0].mxu0
    %v589 = vadd.f32 0.0, %v588
    %v590 = vpop.f32.mrb[0].mxu0
    %591 = vmatprep.mubr.bf16.mxu0 %v358
    %592 = vmatmul.mubr.bf16.gmra.mrb[0].mxu0 %v357
    %v593 = vpop.f32.mrb[0].mxu0
    %v594 = vadd.f32 0.0, %v593
    %v595 = vpop.f32.mrb[0].mxu0
    %v596 = vpop.f32.mrb[0].mxu0
    %v597 = vadd.f32 0.0, %v596
    %v598 = vpop.f32.mrb[0].mxu0
    %599 = vmatprep.mubr.bf16.mxu0 %v360
    %600 = vmatmul.mubr.bf16.gmra.mrb[0].mxu0 %v359
    %v601 = vpop.f32.mrb[0].mxu0
    %v602 = vadd.f32 0.0, %v601
    %v603 = vpop.f32.mrb[0].mxu0
    %v604 = vpop.f32.mrb[0].mxu0
    %v605 = vadd.f32 0.0, %v604
    %v606 = vpop.f32.mrb[0].mxu0
    %607 = vmatprep.mubr.bf16.mxu0 %v362
    %608 = vmatmul.mubr.bf16.gmra.mrb[0].mxu0 %v361
    %v609 = vpop.f32.mrb[0].mxu0
    %v610 = vadd.f32 0.0, %v609
    %v611 = vpop.f32.mrb[0].mxu0
    %v612 = vpop.f32.mrb[0].mxu0
    %v613 = vadd.f32 0.0, %v612
    %v614 = vpop.f32.mrb[0].mxu0
    %615 = vmatprep.mubr.bf16.mxu0 %v364
    %616 = vmatmul.mubr.bf16.gmra.mrb[0].mxu0 %v363
    %v617 = vpop.f32.mrb[0].mxu0
    %v618 = vadd.f32 0.0, %v617
    %v619 = vpop.f32.mrb[0].mxu0
    %v620 = vpop.f32.mrb[0].mxu0
    %v621 = vadd.f32 0.0, %v620
    %v622 = vpop.f32.mrb[0].mxu0
    %623 = vmatprep.mubr.bf16.mxu0 %v366
    %624 = vmatmul.mubr.bf16.gmra.mrb[0].mxu0 %v365
    %v625 = vpop.f32.mrb[0].mxu0
    %v626 = vadd.f32 0.0, %v625
    %v627 = vpop.f32.mrb[0].mxu0
    %v628 = vpop.f32.mrb[0].mxu0
    %v629 = vadd.f32 0.0, %v628
    %v630 = vpop.f32.mrb[0].mxu0
    %631 = vmatprep.mubr.bf16.mxu0 %v368
    %632 = vmatmul.mubr.bf16.gmra.mrb[0].mxu0 %v367
    %v633 = vpop.f32.mrb[0].mxu0
    %v634 = vadd.f32 0.0, %v633
    %v635 = vpop.f32.mrb[0].mxu0
    %v636 = vpop.f32.mrb[0].mxu0
    %v637 = vadd.f32 0.0, %v636
    %v638 = vpop.f32.mrb[0].mxu0
    %639 = vmatprep.mubr.bf16.mxu0 %v370
    %640 = vmatmul.mubr.bf16.gmra.mrb[0].mxu0 %v369
    %v641 = vpop.f32.mrb[0].mxu0
    %v642 = vadd.f32 0.0, %v641
    %v643 = vpop.f32.mrb[0].mxu0
    %v644 = vpop.f32.mrb[0].mxu0
    %v645 = vadd.f32 0.0, %v644
    %v646 = vpop.f32.mrb[0].mxu0
    %647 = vmatprep.mubr.bf16.mxu0 %v372
    %648 = vmatmul.mubr.bf16.gmra.mrb[0].mxu0 %v371
    %v649 = vpop.f32.mrb[0].mxu0
    %v650 = vadd.f32 0.0, %v649
    %v651 = vpop.f32.mrb[0].mxu0
    %v652 = vpop.f32.mrb[0].mxu0
    %v653 = vadd.f32 0.0, %v652
    %v654 = vpop.f32.mrb[0].mxu0
    %655 = vmatprep.mubr.bf16.mxu0 %v374
    %656 = vmatmul.mubr.bf16.gmra.mrb[0].mxu0 %v373
    %v657 = vpop.f32.mrb[0].mxu0
    %v658 = vadd.f32 0.0, %v657
    %v659 = vpop.f32.mrb[0].mxu0
    %v660 = vpop.f32.mrb[0].mxu0
    %v661 = vadd.f32 0.0, %v660
    %v662 = vpop.f32.mrb[0].mxu0
    %663 = vdwg.mxu0
    %v664 = vpack.c.bf16 %v541, %v538
    %v665 = vpack.c.bf16 %v549, %v546
    %v666 = vpack.c.bf16 %v557, %v554
    %v667 = vpack.c.bf16 %v565, %v562
    %v668 = vpack.c.bf16 %v573, %v570
    %v669 = vpack.c.bf16 %v581, %v578
    %v670 = vpack.c.bf16 %v589, %v586
    %v671 = vpack.c.bf16 %v597, %v594
    %v672 = vpack.c.bf16 %v605, %v602
    %v673 = vpack.c.bf16 %v613, %v610
    %v674 = vpack.c.bf16 %v621, %v618
    %v675 = vpack.c.bf16 %v629, %v626
    %v676 = vpack.c.bf16 %v637, %v634
    %v677 = vpack.c.bf16 %v645, %v642
    %v678 = vpack.c.bf16 %v653, %v650
    %v679 = vpack.c.bf16 %v661, %v658
    %v681 = vlaneseq
    %v682 = vshrl.u32 %v681, 7
    %v683 = vsub.s32 0, %v682
    %v684 = vrot.slane %v212, %v683
    %v702 = vunpack.c.l.b16 %v148
    %v703 = vunpack.c.l.b16 %v149
    %v704 = vunpack.c.l.b16 %v150
    %v705 = vunpack.c.l.b16 %v151
    %v706 = vunpack.c.l.b16 %v152
    %v707 = vunpack.c.l.b16 %v153
    %v708 = vunpack.c.l.b16 %v154
    %v709 = vunpack.c.l.b16 %v155
    %v710 = vunpack.c.l.b16 %v156
    %v711 = vunpack.c.l.b16 %v157
    %v712 = vunpack.c.l.b16 %v158
    %v713 = vunpack.c.l.b16 %v159
    %v714 = vunpack.c.l.b16 %v160
    %v715 = vunpack.c.l.b16 %v161
    %v716 = vunpack.c.l.b16 %v162
    %v717 = vunpack.c.l.b16 %v163
    %v718 = vpack.c.b16 %v703, %v702
    %v719 = vpack.c.b16 %v705, %v704
    %v720 = vpack.c.b16 %v707, %v706
    %v721 = vpack.c.b16 %v709, %v708
    %v722 = vpack.c.b16 %v711, %v710
    %v723 = vpack.c.b16 %v713, %v712
    %v724 = vpack.c.b16 %v715, %v714
    %v725 = vpack.c.b16 %v717, %v716
    %734 = vmatprep.subr.bf16.mxu0 0
    %735 = vmatpush1.bf16.msra.mxu0 %v718
    %736 = vmatprep.subr.bf16.mxu0 0
    %737 = vmatpush1.bf16.msra.mxu0 %v719
    %738 = vmatprep.subr.bf16.mxu0 0
    %739 = vmatpush1.bf16.msra.mxu0 %v720
    %740 = vmatprep.subr.bf16.mxu0 0
    %741 = vmatpush1.bf16.msra.mxu0 %v721
    %742 = vmatprep.subr.bf16.mxu0 0
    %743 = vmatpush1.bf16.msra.mxu0 %v722
    %744 = vmatprep.subr.bf16.mxu0 0
    %745 = vmatpush1.bf16.msra.mxu0 %v723
    %746 = vmatprep.subr.bf16.mxu0 0
    %747 = vmatpush1.bf16.msra.mxu0 %v724
    %748 = vmatprep.subr.bf16.mxu0 0
    %749 = vmatpush1.bf16.msra.mxu0 %v725
    %750 = vmatprep.subr.bf16.mxu0 0
    %751 = vmatpush1.bf16.msra.mxu0 0
    %752 = vmatprep.subr.bf16.mxu0 0
    %753 = vmatpush1.bf16.msra.mxu0 0
    %754 = vmatprep.subr.bf16.mxu0 0
    %755 = vmatpush1.bf16.msra.mxu0 0
    %756 = vmatprep.subr.bf16.mxu0 0
    %757 = vmatpush1.bf16.msra.mxu0 0
    %758 = vmatprep.subr.bf16.mxu0 0
    %759 = vmatpush1.bf16.msra.mxu0 0
    %760 = vmatprep.subr.bf16.mxu0 0
    %761 = vmatpush1.bf16.msra.mxu0 0
    %762 = vmatprep.subr.bf16.mxu0 0
    %763 = vmatpush1.bf16.msra.mxu0 0
    %764 = vmatprep.subr.bf16.mxu0 0
    %765 = vmatpush1.bf16.msra.mxu0 0
    %766 = vmatprep.mubr.bf16.mxu0 0
    %767 = vmatmul.mubr.bf16.gmra.mrb[0].mxu0 %v664
    %v768 = vpop.f32.mrb[0].mxu0
    %v769 = vadd.f32 %v684, %v768
    %v770 = vpop.f32.mrb[0].mxu0
    %v771 = vpop.f32.mrb[0].mxu0
    %v772 = vadd.f32 %v684, %v771
    %v773 = vpop.f32.mrb[0].mxu0
    %774 = vmatprep.mubr.bf16.mxu0 0
    %775 = vmatmul.mubr.bf16.gmra.mrb[0].mxu0 %v665
    %v776 = vpop.f32.mrb[0].mxu0
    %v777 = vadd.f32 %v684, %v776
    %v778 = vpop.f32.mrb[0].mxu0
    %v779 = vpop.f32.mrb[0].mxu0
    %v780 = vadd.f32 %v684, %v779
    %v781 = vpop.f32.mrb[0].mxu0
    %782 = vmatprep.mubr.bf16.mxu0 0
    %783 = vmatmul.mubr.bf16.gmra.mrb[0].mxu0 %v666
    %v784 = vpop.f32.mrb[0].mxu0
    %v785 = vadd.f32 %v684, %v784
    %v786 = vpop.f32.mrb[0].mxu0
    %v787 = vpop.f32.mrb[0].mxu0
    %v788 = vadd.f32 %v684, %v787
    %v789 = vpop.f32.mrb[0].mxu0
    %790 = vmatprep.mubr.bf16.mxu0 0
    %791 = vmatmul.mubr.bf16.gmra.mrb[0].mxu0 %v667
    %v792 = vpop.f32.mrb[0].mxu0
    %v793 = vadd.f32 %v684, %v792
    %v794 = vpop.f32.mrb[0].mxu0
    %v795 = vpop.f32.mrb[0].mxu0
    %v796 = vadd.f32 %v684, %v795
    %v797 = vpop.f32.mrb[0].mxu0
    %798 = vmatprep.mubr.bf16.mxu0 0
    %799 = vmatmul.mubr.bf16.gmra.mrb[0].mxu0 %v668
    %v800 = vpop.f32.mrb[0].mxu0
    %v801 = vadd.f32 %v684, %v800
    %v802 = vpop.f32.mrb[0].mxu0
    %v803 = vpop.f32.mrb[0].mxu0
    %v804 = vadd.f32 %v684, %v803
    %v805 = vpop.f32.mrb[0].mxu0
    %806 = vmatprep.mubr.bf16.mxu0 0
    %807 = vmatmul.mubr.bf16.gmra.mrb[0].mxu0 %v669
    %v808 = vpop.f32.mrb[0].mxu0
    %v809 = vadd.f32 %v684, %v808
    %v810 = vpop.f32.mrb[0].mxu0
    %v811 = vpop.f32.mrb[0].mxu0
    %v812 = vadd.f32 %v684, %v811
    %v813 = vpop.f32.mrb[0].mxu0
    %814 = vmatprep.mubr.bf16.mxu0 0
    %815 = vmatmul.mubr.bf16.gmra.mrb[0].mxu0 %v670
    %v816 = vpop.f32.mrb[0].mxu0
    %v817 = vadd.f32 %v684, %v816
    %v818 = vpop.f32.mrb[0].mxu0
    %v819 = vpop.f32.mrb[0].mxu0
    %v820 = vadd.f32 %v684, %v819
    %v821 = vpop.f32.mrb[0].mxu0
    %822 = vmatprep.mubr.bf16.mxu0 0
    %823 = vmatmul.mubr.bf16.gmra.mrb[0].mxu0 %v671
    %v824 = vpop.f32.mrb[0].mxu0
    %v825 = vadd.f32 %v684, %v824
    %v826 = vpop.f32.mrb[0].mxu0
    %v827 = vpop.f32.mrb[0].mxu0
    %v828 = vadd.f32 %v684, %v827
    %v829 = vpop.f32.mrb[0].mxu0
    %830 = vmatprep.mubr.bf16.mxu0 0
    %831 = vmatmul.mubr.bf16.gmra.mrb[0].mxu0 %v672
    %v832 = vpop.f32.mrb[0].mxu0
    %v833 = vadd.f32 %v684, %v832
    %v834 = vpop.f32.mrb[0].mxu0
    %v835 = vpop.f32.mrb[0].mxu0
    %v836 = vadd.f32 %v684, %v835
    %v837 = vpop.f32.mrb[0].mxu0
    %838 = vmatprep.mubr.bf16.mxu0 0
    %839 = vmatmul.mubr.bf16.gmra.mrb[0].mxu0 %v673
    %v840 = vpop.f32.mrb[0].mxu0
    %v841 = vadd.f32 %v684, %v840
    %v842 = vpop.f32.mrb[0].mxu0
    %v843 = vpop.f32.mrb[0].mxu0
    %v844 = vadd.f32 %v684, %v843
    %v845 = vpop.f32.mrb[0].mxu0
    %846 = vmatprep.mubr.bf16.mxu0 0
    %847 = vmatmul.mubr.bf16.gmra.mrb[0].mxu0 %v674
    %v848 = vpop.f32.mrb[0].mxu0
    %v849 = vadd.f32 %v684, %v848
    %v850 = vpop.f32.mrb[0].mxu0
    %v851 = vpop.f32.mrb[0].mxu0
    %v852 = vadd.f32 %v684, %v851
    %v853 = vpop.f32.mrb[0].mxu0
    %854 = vmatprep.mubr.bf16.mxu0 0
    %855 = vmatmul.mubr.bf16.gmra.mrb[0].mxu0 %v675
    %v856 = vpop.f32.mrb[0].mxu0
    %v857 = vadd.f32 %v684, %v856
    %v858 = vpop.f32.mrb[0].mxu0
    %v859 = vpop.f32.mrb[0].mxu0
    %v860 = vadd.f32 %v684, %v859
    %v861 = vpop.f32.mrb[0].mxu0
    %862 = vmatprep.mubr.bf16.mxu0 0
    %863 = vmatmul.mubr.bf16.gmra.mrb[0].mxu0 %v676
    %v864 = vpop.f32.mrb[0].mxu0
    %v865 = vadd.f32 %v684, %v864
    %v866 = vpop.f32.mrb[0].mxu0
    %v867 = vpop.f32.mrb[0].mxu0
    %v868 = vadd.f32 %v684, %v867
    %v869 = vpop.f32.mrb[0].mxu0
    %870 = vmatprep.mubr.bf16.mxu0 0
    %871 = vmatmul.mubr.bf16.gmra.mrb[0].mxu0 %v677
    %v872 = vpop.f32.mrb[0].mxu0
    %v873 = vadd.f32 %v684, %v872
    %v874 = vpop.f32.mrb[0].mxu0
    %v875 = vpop.f32.mrb[0].mxu0
    %v876 = vadd.f32 %v684, %v875
    %v877 = vpop.f32.mrb[0].mxu0
    %878 = vmatprep.mubr.bf16.mxu0 0
    %879 = vmatmul.mubr.bf16.gmra.mrb[0].mxu0 %v678
    %v880 = vpop.f32.mrb[0].mxu0
    %v881 = vadd.f32 %v684, %v880
    %v882 = vpop.f32.mrb[0].mxu0
    %v883 = vpop.f32.mrb[0].mxu0
    %v884 = vadd.f32 %v684, %v883
    %v885 = vpop.f32.mrb[0].mxu0
    %886 = vmatprep.mubr.bf16.mxu0 0
    %887 = vmatmul.mubr.bf16.gmra.mrb[0].mxu0 %v679
    %v888 = vpop.f32.mrb[0].mxu0
    %v889 = vadd.f32 %v684, %v888
    %v890 = vpop.f32.mrb[0].mxu0
    %v891 = vpop.f32.mrb[0].mxu0
    %v892 = vadd.f32 %v684, %v891
    %v893 = vpop.f32.mrb[0].mxu0
    %894 = vdwg.mxu0
    %v895 = vmax.f32 %v769, 0.0
    %v896 = vmax.f32 %v772, 0.0
    %v897 = vmax.f32 %v777, 0.0
    %v898 = vmax.f32 %v780, 0.0
    %v899 = vmax.f32 %v785, 0.0
    %v900 = vmax.f32 %v788, 0.0
    %v901 = vmax.f32 %v793, 0.0
    %v902 = vmax.f32 %v796, 0.0
    %v903 = vmax.f32 %v801, 0.0
    %v904 = vmax.f32 %v804, 0.0
    %v905 = vmax.f32 %v809, 0.0
    %v906 = vmax.f32 %v812, 0.0
    %v907 = vmax.f32 %v817, 0.0
    %v908 = vmax.f32 %v820, 0.0
    %v909 = vmax.f32 %v825, 0.0
    %v910 = vmax.f32 %v828, 0.0
    %v911 = vmax.f32 %v833, 0.0
    %v912 = vmax.f32 %v836, 0.0
    %v913 = vmax.f32 %v841, 0.0
    %v914 = vmax.f32 %v844, 0.0
    %v915 = vmax.f32 %v849, 0.0
    %v916 = vmax.f32 %v852, 0.0
    %v917 = vmax.f32 %v857, 0.0
    %v918 = vmax.f32 %v860, 0.0
    %v919 = vmax.f32 %v865, 0.0
    %v920 = vmax.f32 %v868, 0.0
    %v921 = vmax.f32 %v873, 0.0
    %v922 = vmax.f32 %v876, 0.0
    %v923 = vmax.f32 %v881, 0.0
    %v924 = vmax.f32 %v884, 0.0
    %v925 = vmax.f32 %v889, 0.0
    %v926 = vmax.f32 %v892, 0.0
    %v927 = vpack.c.bf16 %v896, %v895
    %v928 = vpack.c.bf16 %v898, %v897
    %v929 = vpack.c.bf16 %v900, %v899
    %v930 = vpack.c.bf16 %v902, %v901
    %v931 = vpack.c.bf16 %v904, %v903
    %v932 = vpack.c.bf16 %v906, %v905
    %v933 = vpack.c.bf16 %v908, %v907
    %v934 = vpack.c.bf16 %v910, %v909
    %v935 = vpack.c.bf16 %v912, %v911
    %v936 = vpack.c.bf16 %v914, %v913
    %v937 = vpack.c.bf16 %v916, %v915
    %v938 = vpack.c.bf16 %v918, %v917
    %v939 = vpack.c.bf16 %v920, %v919
    %v940 = vpack.c.bf16 %v922, %v921
    %v941 = vpack.c.bf16 %v924, %v923
    %v942 = vpack.c.bf16 %v926, %v925
    %v944 = vlaneseq
    %v945 = vshrl.u32 %v944, 7
    %v946 = vsub.s32 0, %v945
    %v947 = vrot.slane %v213, %v946
    %v965 = vunpack.c.l.b16 %v164
    %v966 = vunpack.c.l.b16 %v165
    %v967 = vunpack.c.l.b16 %v166
    %v968 = vunpack.c.l.b16 %v167
    %v969 = vunpack.c.l.b16 %v168
    %v970 = vunpack.c.l.b16 %v169
    %v971 = vunpack.c.l.b16 %v170
    %v972 = vunpack.c.l.b16 %v171
    %v973 = vunpack.c.l.b16 %v172
    %v974 = vunpack.c.l.b16 %v173
    %v975 = vunpack.c.l.b16 %v174
    %v976 = vunpack.c.l.b16 %v175
    %v977 = vunpack.c.l.b16 %v176
    %v978 = vunpack.c.l.b16 %v177
    %v979 = vunpack.c.l.b16 %v178
    %v980 = vunpack.c.l.b16 %v179
    %v981 = vpack.c.b16 %v966, %v965
    %v982 = vpack.c.b16 %v968, %v967
    %v983 = vpack.c.b16 %v970, %v969
    %v984 = vpack.c.b16 %v972, %v971
    %v985 = vpack.c.b16 %v974, %v973
    %v986 = vpack.c.b16 %v976, %v975
    %v987 = vpack.c.b16 %v978, %v977
    %v988 = vpack.c.b16 %v980, %v979
    %997 = vmatprep.subr.bf16.mxu0 0
    %998 = vmatpush1.bf16.msra.mxu0 %v981
    %999 = vmatprep.subr.bf16.mxu0 0
    %1000 = vmatpush1.bf16.msra.mxu0 %v982
    %1001 = vmatprep.subr.bf16.mxu0 0
    %1002 = vmatpush1.bf16.msra.mxu0 %v983
    %1003 = vmatprep.subr.bf16.mxu0 0
    %1004 = vmatpush1.bf16.msra.mxu0 %v984
    %1005 = vmatprep.subr.bf16.mxu0 0
    %1006 = vmatpush1.bf16.msra.mxu0 %v985
    %1007 = vmatprep.subr.bf16.mxu0 0
    %1008 = vmatpush1.bf16.msra.mxu0 %v986
    %1009 = vmatprep.subr.bf16.mxu0 0
    %1010 = vmatpush1.bf16.msra.mxu0 %v987
    %1011 = vmatprep.subr.bf16.mxu0 0
    %1012 = vmatpush1.bf16.msra.mxu0 %v988
    %1013 = vmatprep.subr.bf16.mxu0 0
    %1014 = vmatpush1.bf16.msra.mxu0 0
    %1015 = vmatprep.subr.bf16.mxu0 0
    %1016 = vmatpush1.bf16.msra.mxu0 0
    %1017 = vmatprep.subr.bf16.mxu0 0
    %1018 = vmatpush1.bf16.msra.mxu0 0
    %1019 = vmatprep.subr.bf16.mxu0 0
    %1020 = vmatpush1.bf16.msra.mxu0 0
    %1021 = vmatprep.subr.bf16.mxu0 0
    %1022 = vmatpush1.bf16.msra.mxu0 0
    %1023 = vmatprep.subr.bf16.mxu0 0
    %1024 = vmatpush1.bf16.msra.mxu0 0
    %1025 = vmatprep.subr.bf16.mxu0 0
    %1026 = vmatpush1.bf16.msra.mxu0 0
    %1027 = vmatprep.subr.bf16.mxu0 0
    %1028 = vmatpush1.bf16.msra.mxu0 0
    %1029 = vmatprep.mubr.bf16.mxu0 0
    %1030 = vmatmul.mubr.bf16.gmra.mrb[0].mxu0 %v927
    %v1031 = vpop.f32.mrb[0].mxu0
    %v1032 = vadd.f32 %v947, %v1031
    %v1033 = vpop.f32.mrb[0].mxu0
    %v1034 = vpop.f32.mrb[0].mxu0
    %v1035 = vadd.f32 %v947, %v1034
    %v1036 = vpop.f32.mrb[0].mxu0
    %1037 = vmatprep.mubr.bf16.mxu0 0
    %1038 = vmatmul.mubr.bf16.gmra.mrb[0].mxu0 %v928
    %v1039 = vpop.f32.mrb[0].mxu0
    %v1040 = vadd.f32 %v947, %v1039
    %v1041 = vpop.f32.mrb[0].mxu0
    %v1042 = vpop.f32.mrb[0].mxu0
    %v1043 = vadd.f32 %v947, %v1042
    %v1044 = vpop.f32.mrb[0].mxu0
    %1045 = vmatprep.mubr.bf16.mxu0 0
    %1046 = vmatmul.mubr.bf16.gmra.mrb[0].mxu0 %v929
    %v1047 = vpop.f32.mrb[0].mxu0
    %v1048 = vadd.f32 %v947, %v1047
    %v1049 = vpop.f32.mrb[0].mxu0
    %v1050 = vpop.f32.mrb[0].mxu0
    %v1051 = vadd.f32 %v947, %v1050
    %v1052 = vpop.f32.mrb[0].mxu0
    %1053 = vmatprep.mubr.bf16.mxu0 0
    %1054 = vmatmul.mubr.bf16.gmra.mrb[0].mxu0 %v930
    %v1055 = vpop.f32.mrb[0].mxu0
    %v1056 = vadd.f32 %v947, %v1055
    %v1057 = vpop.f32.mrb[0].mxu0
    %v1058 = vpop.f32.mrb[0].mxu0
    %v1059 = vadd.f32 %v947, %v1058
    %v1060 = vpop.f32.mrb[0].mxu0
    %1061 = vmatprep.mubr.bf16.mxu0 0
    %1062 = vmatmul.mubr.bf16.gmra.mrb[0].mxu0 %v931
    %v1063 = vpop.f32.mrb[0].mxu0
    %v1064 = vadd.f32 %v947, %v1063
    %v1065 = vpop.f32.mrb[0].mxu0
    %v1066 = vpop.f32.mrb[0].mxu0
    %v1067 = vadd.f32 %v947, %v1066
    %v1068 = vpop.f32.mrb[0].mxu0
    %1069 = vmatprep.mubr.bf16.mxu0 0
    %1070 = vmatmul.mubr.bf16.gmra.mrb[0].mxu0 %v932
    %v1071 = vpop.f32.mrb[0].mxu0
    %v1072 = vadd.f32 %v947, %v1071
    %v1073 = vpop.f32.mrb[0].mxu0
    %v1074 = vpop.f32.mrb[0].mxu0
    %v1075 = vadd.f32 %v947, %v1074
    %v1076 = vpop.f32.mrb[0].mxu0
    %1077 = vmatprep.mubr.bf16.mxu0 0
    %1078 = vmatmul.mubr.bf16.gmra.mrb[0].mxu0 %v933
    %v1079 = vpop.f32.mrb[0].mxu0
    %v1080 = vadd.f32 %v947, %v1079
    %v1081 = vpop.f32.mrb[0].mxu0
    %v1082 = vpop.f32.mrb[0].mxu0
    %v1083 = vadd.f32 %v947, %v1082
    %v1084 = vpop.f32.mrb[0].mxu0
    %1085 = vmatprep.mubr.bf16.mxu0 0
    %1086 = vmatmul.mubr.bf16.gmra.mrb[0].mxu0 %v934
    %v1087 = vpop.f32.mrb[0].mxu0
    %v1088 = vadd.f32 %v947, %v1087
    %v1089 = vpop.f32.mrb[0].mxu0
    %v1090 = vpop.f32.mrb[0].mxu0
    %v1091 = vadd.f32 %v947, %v1090
    %v1092 = vpop.f32.mrb[0].mxu0
    %1093 = vmatprep.mubr.bf16.mxu0 0
    %1094 = vmatmul.mubr.bf16.gmra.mrb[0].mxu0 %v935
    %v1095 = vpop.f32.mrb[0].mxu0
    %v1096 = vadd.f32 %v947, %v1095
    %v1097 = vpop.f32.mrb[0].mxu0
    %v1098 = vpop.f32.mrb[0].mxu0
    %v1099 = vadd.f32 %v947, %v1098
    %v1100 = vpop.f32.mrb[0].mxu0
    %1101 = vmatprep.mubr.bf16.mxu0 0
    %1102 = vmatmul.mubr.bf16.gmra.mrb[0].mxu0 %v936
    %v1103 = vpop.f32.mrb[0].mxu0
    %v1104 = vadd.f32 %v947, %v1103
    %v1105 = vpop.f32.mrb[0].mxu0
    %v1106 = vpop.f32.mrb[0].mxu0
    %v1107 = vadd.f32 %v947, %v1106
    %v1108 = vpop.f32.mrb[0].mxu0
    %1109 = vmatprep.mubr.bf16.mxu0 0
    %1110 = vmatmul.mubr.bf16.gmra.mrb[0].mxu0 %v937
    %v1111 = vpop.f32.mrb[0].mxu0
    %v1112 = vadd.f32 %v947, %v1111
    %v1113 = vpop.f32.mrb[0].mxu0
    %v1114 = vpop.f32.mrb[0].mxu0
    %v1115 = vadd.f32 %v947, %v1114
    %v1116 = vpop.f32.mrb[0].mxu0
    %1117 = vmatprep.mubr.bf16.mxu0 0
    %1118 = vmatmul.mubr.bf16.gmra.mrb[0].mxu0 %v938
    %v1119 = vpop.f32.mrb[0].mxu0
    %v1120 = vadd.f32 %v947, %v1119
    %v1121 = vpop.f32.mrb[0].mxu0
    %v1122 = vpop.f32.mrb[0].mxu0
    %v1123 = vadd.f32 %v947, %v1122
    %v1124 = vpop.f32.mrb[0].mxu0
    %1125 = vmatprep.mubr.bf16.mxu0 0
    %1126 = vmatmul.mubr.bf16.gmra.mrb[0].mxu0 %v939
    %v1127 = vpop.f32.mrb[0].mxu0
    %v1128 = vadd.f32 %v947, %v1127
    %v1129 = vpop.f32.mrb[0].mxu0
    %v1130 = vpop.f32.mrb[0].mxu0
    %v1131 = vadd.f32 %v947, %v1130
    %v1132 = vpop.f32.mrb[0].mxu0
    %1133 = vmatprep.mubr.bf16.mxu0 0
    %1134 = vmatmul.mubr.bf16.gmra.mrb[0].mxu0 %v940
    %v1135 = vpop.f32.mrb[0].mxu0
    %v1136 = vadd.f32 %v947, %v1135
    %v1137 = vpop.f32.mrb[0].mxu0
    %v1138 = vpop.f32.mrb[0].mxu0
    %v1139 = vadd.f32 %v947, %v1138
    %v1140 = vpop.f32.mrb[0].mxu0
    %1141 = vmatprep.mubr.bf16.mxu0 0
    %1142 = vmatmul.mubr.bf16.gmra.mrb[0].mxu0 %v941
    %v1143 = vpop.f32.mrb[0].mxu0
    %v1144 = vadd.f32 %v947, %v1143
    %v1145 = vpop.f32.mrb[0].mxu0
    %v1146 = vpop.f32.mrb[0].mxu0
    %v1147 = vadd.f32 %v947, %v1146
    %v1148 = vpop.f32.mrb[0].mxu0
    %1149 = vmatprep.mubr.bf16.mxu0 0
    %1150 = vmatmul.mubr.bf16.gmra.mrb[0].mxu0 %v942
    %v1151 = vpop.f32.mrb[0].mxu0
    %v1152 = vadd.f32 %v947, %v1151
    %v1153 = vpop.f32.mrb[0].mxu0
    %v1154 = vpop.f32.mrb[0].mxu0
    %v1155 = vadd.f32 %v947, %v1154
    %v1156 = vpop.f32.mrb[0].mxu0
    %1157 = vdwg.mxu0
    %v1158 = vpack.c.bf16 %v1035, %v1032
    %v1159 = vpack.c.bf16 %v1043, %v1040
    %v1160 = vpack.c.bf16 %v1051, %v1048
    %v1161 = vpack.c.bf16 %v1059, %v1056
    %v1162 = vpack.c.bf16 %v1067, %v1064
    %v1163 = vpack.c.bf16 %v1075, %v1072
    %v1164 = vpack.c.bf16 %v1083, %v1080
    %v1165 = vpack.c.bf16 %v1091, %v1088
    %v1166 = vpack.c.bf16 %v1099, %v1096
    %v1167 = vpack.c.bf16 %v1107, %v1104
    %v1168 = vpack.c.bf16 %v1115, %v1112
    %v1169 = vpack.c.bf16 %v1123, %v1120
    %v1170 = vpack.c.bf16 %v1131, %v1128
    %v1171 = vpack.c.bf16 %v1139, %v1136
    %v1172 = vpack.c.bf16 %v1147, %v1144
    %v1173 = vpack.c.bf16 %v1155, %v1152
    %v1174 = vtanh.bf16.pop %v1158
    %v1175 = vtanh.bf16.pop %v1159
    %v1176 = vtanh.bf16.pop %v1160
    %v1177 = vtanh.bf16.pop %v1161
    %v1178 = vtanh.bf16.pop %v1162
    %v1179 = vtanh.bf16.pop %v1163
    %v1180 = vtanh.bf16.pop %v1164
    %v1181 = vtanh.bf16.pop %v1165
    %v1182 = vtanh.bf16.pop %v1166
    %v1183 = vtanh.bf16.pop %v1167
    %v1184 = vtanh.bf16.pop %v1168
    %v1185 = vtanh.bf16.pop %v1169
    %v1186 = vtanh.bf16.pop %v1170
    %v1187 = vtanh.bf16.pop %v1171
    %v1188 = vtanh.bf16.pop %v1172
    %v1189 = vtanh.bf16.pop %v1173
    %v1206 = vunpack.c.l.b16 %v196
    %v1207 = vunpack.c.l.b16 %v197
    %v1208 = vunpack.c.l.b16 %v198
    %v1209 = vunpack.c.l.b16 %v199
    %v1210 = vunpack.c.l.b16 %v200
    %v1211 = vunpack.c.l.b16 %v201
    %v1212 = vunpack.c.l.b16 %v202
    %v1213 = vunpack.c.l.b16 %v203
    %v1214 = vunpack.c.l.b16 %v204
    %v1215 = vunpack.c.l.b16 %v205
    %v1216 = vunpack.c.l.b16 %v206
    %v1217 = vunpack.c.l.b16 %v207
    %v1218 = vunpack.c.l.b16 %v208
    %v1219 = vunpack.c.l.b16 %v209
    %v1220 = vunpack.c.l.b16 %v210
    %v1221 = vunpack.c.l.b16 %v211
    %v1222 = vpack.c.b16 %v1207, %v1206
    %v1223 = vpack.c.b16 %v1209, %v1208
    %v1224 = vpack.c.b16 %v1211, %v1210
    %v1225 = vpack.c.b16 %v1213, %v1212
    %v1226 = vpack.c.b16 %v1215, %v1214
    %v1227 = vpack.c.b16 %v1217, %v1216
    %v1228 = vpack.c.b16 %v1219, %v1218
    %v1229 = vpack.c.b16 %v1221, %v1220
    %1238 = vmatprep.subr.bf16.mxu0 0
    %1239 = vmatpush1.bf16.msra.mxu0 %v1222
    %1240 = vmatprep.subr.bf16.mxu0 0
    %1241 = vmatpush1.bf16.msra.mxu0 %v1223
    %1242 = vmatprep.subr.bf16.mxu0 0
    %1243 = vmatpush1.bf16.msra.mxu0 %v1224
    %1244 = vmatprep.subr.bf16.mxu0 0
    %1245 = vmatpush1.bf16.msra.mxu0 %v1225
    %1246 = vmatprep.subr.bf16.mxu0 0
    %1247 = vmatpush1.bf16.msra.mxu0 %v1226
    %1248 = vmatprep.subr.bf16.mxu0 0
    %1249 = vmatpush1.bf16.msra.mxu0 %v1227
    %1250 = vmatprep.subr.bf16.mxu0 0
    %1251 = vmatpush1.bf16.msra.mxu0 %v1228
    %1252 = vmatprep.subr.bf16.mxu0 0
    %1253 = vmatpush1.bf16.msra.mxu0 %v1229
    %1254 = vmatprep.subr.bf16.mxu0 0
    %1255 = vmatpush1.bf16.msra.mxu0 0
    %1256 = vmatprep.subr.bf16.mxu0 0
    %1257 = vmatpush1.bf16.msra.mxu0 0
    %1258 = vmatprep.subr.bf16.mxu0 0
    %1259 = vmatpush1.bf16.msra.mxu0 0
    %1260 = vmatprep.subr.bf16.mxu0 0
    %1261 = vmatpush1.bf16.msra.mxu0 0
    %1262 = vmatprep.subr.bf16.mxu0 0
    %1263 = vmatpush1.bf16.msra.mxu0 0
    %1264 = vmatprep.subr.bf16.mxu0 0
    %1265 = vmatpush1.bf16.msra.mxu0 0
    %1266 = vmatprep.subr.bf16.mxu0 0
    %1267 = vmatpush1.bf16.msra.mxu0 0
    %1268 = vmatprep.subr.bf16.mxu0 0
    %1269 = vmatpush1.bf16.msra.mxu0 0
    %1270 = vmatprep.mubr.bf16.mxu0 0
    %1271 = vmatmul.mubr.bf16.gmra.mrb[0].mxu0 %v1174
    %v1272 = vpop.f32.mrb[0].mxu0
    %v1273 = vadd.f32 0.0, %v1272
    %v1274 = vpop.f32.mrb[0].mxu0
    %v1275 = vpop.f32.mrb[0].mxu0
    %v1276 = vadd.f32 0.0, %v1275
    %v1277 = vpop.f32.mrb[0].mxu0
    %1278 = vmatprep.mubr.bf16.mxu0 0
    %1279 = vmatmul.mubr.bf16.gmra.mrb[0].mxu0 %v1175
    %v1280 = vpop.f32.mrb[0].mxu0
    %v1281 = vadd.f32 0.0, %v1280
    %v1282 = vpop.f32.mrb[0].mxu0
    %v1283 = vpop.f32.mrb[0].mxu0
    %v1284 = vadd.f32 0.0, %v1283
    %v1285 = vpop.f32.mrb[0].mxu0
    %1286 = vmatprep.mubr.bf16.mxu0 0
    %1287 = vmatmul.mubr.bf16.gmra.mrb[0].mxu0 %v1176
    %v1288 = vpop.f32.mrb[0].mxu0
    %v1289 = vadd.f32 0.0, %v1288
    %v1290 = vpop.f32.mrb[0].mxu0
    %v1291 = vpop.f32.mrb[0].mxu0
    %v1292 = vadd.f32 0.0, %v1291
    %v1293 = vpop.f32.mrb[0].mxu0
    %1294 = vmatprep.mubr.bf16.mxu0 0
    %1295 = vmatmul.mubr.bf16.gmra.mrb[0].mxu0 %v1177
    %v1296 = vpop.f32.mrb[0].mxu0
    %v1297 = vadd.f32 0.0, %v1296
    %v1298 = vpop.f32.mrb[0].mxu0
    %v1299 = vpop.f32.mrb[0].mxu0
    %v1300 = vadd.f32 0.0, %v1299
    %v1301 = vpop.f32.mrb[0].mxu0
    %1302 = vmatprep.mubr.bf16.mxu0 0
    %1303 = vmatmul.mubr.bf16.gmra.mrb[0].mxu0 %v1178
    %v1304 = vpop.f32.mrb[0].mxu0
    %v1305 = vadd.f32 0.0, %v1304
    %v1306 = vpop.f32.mrb[0].mxu0
    %v1307 = vpop.f32.mrb[0].mxu0
    %v1308 = vadd.f32 0.0, %v1307
    %v1309 = vpop.f32.mrb[0].mxu0
    %1310 = vmatprep.mubr.bf16.mxu0 0
    %1311 = vmatmul.mubr.bf16.gmra.mrb[0].mxu0 %v1179
    %v1312 = vpop.f32.mrb[0].mxu0
    %v1313 = vadd.f32 0.0, %v1312
    %v1314 = vpop.f32.mrb[0].mxu0
    %v1315 = vpop.f32.mrb[0].mxu0
    %v1316 = vadd.f32 0.0, %v1315
    %v1317 = vpop.f32.mrb[0].mxu0
    %1318 = vmatprep.mubr.bf16.mxu0 0
    %1319 = vmatmul.mubr.bf16.gmra.mrb[0].mxu0 %v1180
    %v1320 = vpop.f32.mrb[0].mxu0
    %v1321 = vadd.f32 0.0, %v1320
    %v1322 = vpop.f32.mrb[0].mxu0
    %v1323 = vpop.f32.mrb[0].mxu0
    %v1324 = vadd.f32 0.0, %v1323
    %v1325 = vpop.f32.mrb[0].mxu0
    %1326 = vmatprep.mubr.bf16.mxu0 0
    %1327 = vmatmul.mubr.bf16.gmra.mrb[0].mxu0 %v1181
    %v1328 = vpop.f32.mrb[0].mxu0
    %v1329 = vadd.f32 0.0, %v1328
    %v1330 = vpop.f32.mrb[0].mxu0
    %v1331 = vpop.f32.mrb[0].mxu0
    %v1332 = vadd.f32 0.0, %v1331
    %v1333 = vpop.f32.mrb[0].mxu0
    %1334 = vmatprep.mubr.bf16.mxu0 0
    %1335 = vmatmul.mubr.bf16.gmra.mrb[0].mxu0 %v1182
    %v1336 = vpop.f32.mrb[0].mxu0
    %v1337 = vadd.f32 0.0, %v1336
    %v1338 = vpop.f32.mrb[0].mxu0
    %v1339 = vpop.f32.mrb[0].mxu0
    %v1340 = vadd.f32 0.0, %v1339
    %v1341 = vpop.f32.mrb[0].mxu0
    %1342 = vmatprep.mubr.bf16.mxu0 0
    %1343 = vmatmul.mubr.bf16.gmra.mrb[0].mxu0 %v1183
    %v1344 = vpop.f32.mrb[0].mxu0
    %v1345 = vadd.f32 0.0, %v1344
    %v1346 = vpop.f32.mrb[0].mxu0
    %v1347 = vpop.f32.mrb[0].mxu0
    %v1348 = vadd.f32 0.0, %v1347
    %v1349 = vpop.f32.mrb[0].mxu0
    %1350 = vmatprep.mubr.bf16.mxu0 0
    %1351 = vmatmul.mubr.bf16.gmra.mrb[0].mxu0 %v1184
    %v1352 = vpop.f32.mrb[0].mxu0
    %v1353 = vadd.f32 0.0, %v1352
    %v1354 = vpop.f32.mrb[0].mxu0
    %v1355 = vpop.f32.mrb[0].mxu0
    %v1356 = vadd.f32 0.0, %v1355
    %v1357 = vpop.f32.mrb[0].mxu0
    %1358 = vmatprep.mubr.bf16.mxu0 0
    %1359 = vmatmul.mubr.bf16.gmra.mrb[0].mxu0 %v1185
    %v1360 = vpop.f32.mrb[0].mxu0
    %v1361 = vadd.f32 0.0, %v1360
    %v1362 = vpop.f32.mrb[0].mxu0
    %v1363 = vpop.f32.mrb[0].mxu0
    %v1364 = vadd.f32 0.0, %v1363
    %v1365 = vpop.f32.mrb[0].mxu0
    %1366 = vmatprep.mubr.bf16.mxu0 0
    %1367 = vmatmul.mubr.bf16.gmra.mrb[0].mxu0 %v1186
    %v1368 = vpop.f32.mrb[0].mxu0
    %v1369 = vadd.f32 0.0, %v1368
    %v1370 = vpop.f32.mrb[0].mxu0
    %v1371 = vpop.f32.mrb[0].mxu0
    %v1372 = vadd.f32 0.0, %v1371
    %v1373 = vpop.f32.mrb[0].mxu0
    %1374 = vmatprep.mubr.bf16.mxu0 0
    %1375 = vmatmul.mubr.bf16.gmra.mrb[0].mxu0 %v1187
    %v1376 = vpop.f32.mrb[0].mxu0
    %v1377 = vadd.f32 0.0, %v1376
    %v1378 = vpop.f32.mrb[0].mxu0
    %v1379 = vpop.f32.mrb[0].mxu0
    %v1380 = vadd.f32 0.0, %v1379
    %v1381 = vpop.f32.mrb[0].mxu0
    %1382 = vmatprep.mubr.bf16.mxu0 0
    %1383 = vmatmul.mubr.bf16.gmra.mrb[0].mxu0 %v1188
    %v1384 = vpop.f32.mrb[0].mxu0
    %v1385 = vadd.f32 0.0, %v1384
    %v1386 = vpop.f32.mrb[0].mxu0
    %v1387 = vpop.f32.mrb[0].mxu0
    %v1388 = vadd.f32 0.0, %v1387
    %v1389 = vpop.f32.mrb[0].mxu0
    %1390 = vmatprep.mubr.bf16.mxu0 0
    %1391 = vmatmul.mubr.bf16.gmra.mrb[0].mxu0 %v1189
    %v1392 = vpop.f32.mrb[0].mxu0
    %v1393 = vadd.f32 0.0, %v1392
    %v1394 = vpop.f32.mrb[0].mxu0
    %v1395 = vpop.f32.mrb[0].mxu0
    %v1396 = vadd.f32 0.0, %v1395
    %v1397 = vpop.f32.mrb[0].mxu0
    %1398 = vdwg.mxu0
    %v1415 = vunpack.c.l.b16 %v180
    %v1416 = vunpack.c.l.b16 %v181
    %v1417 = vunpack.c.l.b16 %v182
    %v1418 = vunpack.c.l.b16 %v183
    %v1419 = vunpack.c.l.b16 %v184
    %v1420 = vunpack.c.l.b16 %v185
    %v1421 = vunpack.c.l.b16 %v186
    %v1422 = vunpack.c.l.b16 %v187
    %v1423 = vunpack.c.l.b16 %v188
    %v1424 = vunpack.c.l.b16 %v189
    %v1425 = vunpack.c.l.b16 %v190
    %v1426 = vunpack.c.l.b16 %v191
    %v1427 = vunpack.c.l.b16 %v192
    %v1428 = vunpack.c.l.b16 %v193
    %v1429 = vunpack.c.l.b16 %v194
    %v1430 = vunpack.c.l.b16 %v195
    %v1431 = vpack.c.b16 %v1416, %v1415
    %v1432 = vpack.c.b16 %v1418, %v1417
    %v1433 = vpack.c.b16 %v1420, %v1419
    %v1434 = vpack.c.b16 %v1422, %v1421
    %v1435 = vpack.c.b16 %v1424, %v1423
    %v1436 = vpack.c.b16 %v1426, %v1425
    %v1437 = vpack.c.b16 %v1428, %v1427
    %v1438 = vpack.c.b16 %v1430, %v1429
    %1447 = vmatprep.subr.bf16.mxu0 0
    %1448 = vmatpush1.bf16.msra.mxu0 %v1431
    %1449 = vmatprep.subr.bf16.mxu0 0
    %1450 = vmatpush1.bf16.msra.mxu0 %v1432
    %1451 = vmatprep.subr.bf16.mxu0 0
    %1452 = vmatpush1.bf16.msra.mxu0 %v1433
    %1453 = vmatprep.subr.bf16.mxu0 0
    %1454 = vmatpush1.bf16.msra.mxu0 %v1434
    %1455 = vmatprep.subr.bf16.mxu0 0
    %1456 = vmatpush1.bf16.msra.mxu0 %v1435
    %1457 = vmatprep.subr.bf16.mxu0 0
    %1458 = vmatpush1.bf16.msra.mxu0 %v1436
    %1459 = vmatprep.subr.bf16.mxu0 0
    %1460 = vmatpush1.bf16.msra.mxu0 %v1437
    %1461 = vmatprep.subr.bf16.mxu0 0
    %1462 = vmatpush1.bf16.msra.mxu0 %v1438
    %1463 = vmatprep.subr.bf16.mxu0 0
    %1464 = vmatpush1.bf16.msra.mxu0 0
    %1465 = vmatprep.subr.bf16.mxu0 0
    %1466 = vmatpush1.bf16.msra.mxu0 0
    %1467 = vmatprep.subr.bf16.mxu0 0
    %1468 = vmatpush1.bf16.msra.mxu0 0
    %1469 = vmatprep.subr.bf16.mxu0 0
    %1470 = vmatpush1.bf16.msra.mxu0 0
    %1471 = vmatprep.subr.bf16.mxu0 0
    %1472 = vmatpush1.bf16.msra.mxu0 0
    %1473 = vmatprep.subr.bf16.mxu0 0
    %1474 = vmatpush1.bf16.msra.mxu0 0
    %1475 = vmatprep.subr.bf16.mxu0 0
    %1476 = vmatpush1.bf16.msra.mxu0 0
    %1477 = vmatprep.subr.bf16.mxu0 0
    %1478 = vmatpush1.bf16.msra.mxu0 0
    %1479 = vmatprep.mubr.bf16.mxu0 0
    %1480 = vmatmul.mubr.bf16.gmra.mrb[0].mxu0 %v471
    %v1481 = vpop.f32.mrb[0].mxu0
    %v1482 = vadd.f32 %v1273, %v1481
    %v1483 = vpop.f32.mrb[0].mxu0
    %v1484 = vpop.f32.mrb[0].mxu0
    %v1485 = vadd.f32 %v1276, %v1484
    %v1486 = vpop.f32.mrb[0].mxu0
    %1487 = vmatprep.mubr.bf16.mxu0 0
    %1488 = vmatmul.mubr.bf16.gmra.mrb[0].mxu0 %v472
    %v1489 = vpop.f32.mrb[0].mxu0
    %v1490 = vadd.f32 %v1281, %v1489
    %v1491 = vpop.f32.mrb[0].mxu0
    %v1492 = vpop.f32.mrb[0].mxu0
    %v1493 = vadd.f32 %v1284, %v1492
    %v1494 = vpop.f32.mrb[0].mxu0
    %1495 = vmatprep.mubr.bf16.mxu0 0
    %1496 = vmatmul.mubr.bf16.gmra.mrb[0].mxu0 %v473
    %v1497 = vpop.f32.mrb[0].mxu0
    %v1498 = vadd.f32 %v1289, %v1497
    %v1499 = vpop.f32.mrb[0].mxu0
    %v1500 = vpop.f32.mrb[0].mxu0
    %v1501 = vadd.f32 %v1292, %v1500
    %v1502 = vpop.f32.mrb[0].mxu0
    %1503 = vmatprep.mubr.bf16.mxu0 0
    %1504 = vmatmul.mubr.bf16.gmra.mrb[0].mxu0 %v474
    %v1505 = vpop.f32.mrb[0].mxu0
    %v1506 = vadd.f32 %v1297, %v1505
    %v1507 = vpop.f32.mrb[0].mxu0
    %v1508 = vpop.f32.mrb[0].mxu0
    %v1509 = vadd.f32 %v1300, %v1508
    %v1510 = vpop.f32.mrb[0].mxu0
    %1511 = vmatprep.mubr.bf16.mxu0 0
    %1512 = vmatmul.mubr.bf16.gmra.mrb[0].mxu0 %v475
    %v1513 = vpop.f32.mrb[0].mxu0
    %v1514 = vadd.f32 %v1305, %v1513
    %v1515 = vpop.f32.mrb[0].mxu0
    %v1516 = vpop.f32.mrb[0].mxu0
    %v1517 = vadd.f32 %v1308, %v1516
    %v1518 = vpop.f32.mrb[0].mxu0
    %1519 = vmatprep.mubr.bf16.mxu0 0
    %1520 = vmatmul.mubr.bf16.gmra.mrb[0].mxu0 %v476
    %v1521 = vpop.f32.mrb[0].mxu0
    %v1522 = vadd.f32 %v1313, %v1521
    %v1523 = vpop.f32.mrb[0].mxu0
    %v1524 = vpop.f32.mrb[0].mxu0
    %v1525 = vadd.f32 %v1316, %v1524
    %v1526 = vpop.f32.mrb[0].mxu0
    %1527 = vmatprep.mubr.bf16.mxu0 0
    %1528 = vmatmul.mubr.bf16.gmra.mrb[0].mxu0 %v477
    %v1529 = vpop.f32.mrb[0].mxu0
    %v1530 = vadd.f32 %v1321, %v1529
    %v1531 = vpop.f32.mrb[0].mxu0
    %v1532 = vpop.f32.mrb[0].mxu0
    %v1533 = vadd.f32 %v1324, %v1532
    %v1534 = vpop.f32.mrb[0].mxu0
    %1535 = vmatprep.mubr.bf16.mxu0 0
    %1536 = vmatmul.mubr.bf16.gmra.mrb[0].mxu0 %v478
    %v1537 = vpop.f32.mrb[0].mxu0
    %v1538 = vadd.f32 %v1329, %v1537
    %v1539 = vpop.f32.mrb[0].mxu0
    %v1540 = vpop.f32.mrb[0].mxu0
    %v1541 = vadd.f32 %v1332, %v1540
    %v1542 = vpop.f32.mrb[0].mxu0
    %1543 = vmatprep.mubr.bf16.mxu0 0
    %1544 = vmatmul.mubr.bf16.gmra.mrb[0].mxu0 %v479
    %v1545 = vpop.f32.mrb[0].mxu0
    %v1546 = vadd.f32 %v1337, %v1545
    %v1547 = vpop.f32.mrb[0].mxu0
    %v1548 = vpop.f32.mrb[0].mxu0
    %v1549 = vadd.f32 %v1340, %v1548
    %v1550 = vpop.f32.mrb[0].mxu0
    %1551 = vmatprep.mubr.bf16.mxu0 0
    %1552 = vmatmul.mubr.bf16.gmra.mrb[0].mxu0 %v480
    %v1553 = vpop.f32.mrb[0].mxu0
    %v1554 = vadd.f32 %v1345, %v1553
    %v1555 = vpop.f32.mrb[0].mxu0
    %v1556 = vpop.f32.mrb[0].mxu0
    %v1557 = vadd.f32 %v1348, %v1556
    %v1558 = vpop.f32.mrb[0].mxu0
    %1559 = vmatprep.mubr.bf16.mxu0 0
    %1560 = vmatmul.mubr.bf16.gmra.mrb[0].mxu0 %v481
    %v1561 = vpop.f32.mrb[0].mxu0
    %v1562 = vadd.f32 %v1353, %v1561
    %v1563 = vpop.f32.mrb[0].mxu0
    %v1564 = vpop.f32.mrb[0].mxu0
    %v1565 = vadd.f32 %v1356, %v1564
    %v1566 = vpop.f32.mrb[0].mxu0
    %1567 = vmatprep.mubr.bf16.mxu0 0
    %1568 = vmatmul.mubr.bf16.gmra.mrb[0].mxu0 %v482
    %v1569 = vpop.f32.mrb[0].mxu0
    %v1570 = vadd.f32 %v1361, %v1569
    %v1571 = vpop.f32.mrb[0].mxu0
    %v1572 = vpop.f32.mrb[0].mxu0
    %v1573 = vadd.f32 %v1364, %v1572
    %v1574 = vpop.f32.mrb[0].mxu0
    %1575 = vmatprep.mubr.bf16.mxu0 0
    %1576 = vmatmul.mubr.bf16.gmra.mrb[0].mxu0 %v483
    %v1577 = vpop.f32.mrb[0].mxu0
    %v1578 = vadd.f32 %v1369, %v1577
    %v1579 = vpop.f32.mrb[0].mxu0
    %v1580 = vpop.f32.mrb[0].mxu0
    %v1581 = vadd.f32 %v1372, %v1580
    %v1582 = vpop.f32.mrb[0].mxu0
    %1583 = vmatprep.mubr.bf16.mxu0 0
    %1584 = vmatmul.mubr.bf16.gmra.mrb[0].mxu0 %v484
    %v1585 = vpop.f32.mrb[0].mxu0
    %v1586 = vadd.f32 %v1377, %v1585
    %v1587 = vpop.f32.mrb[0].mxu0
    %v1588 = vpop.f32.mrb[0].mxu0
    %v1589 = vadd.f32 %v1380, %v1588
    %v1590 = vpop.f32.mrb[0].mxu0
    %1591 = vmatprep.mubr.bf16.mxu0 0
    %1592 = vmatmul.mubr.bf16.gmra.mrb[0].mxu0 %v485
    %v1593 = vpop.f32.mrb[0].mxu0
    %v1594 = vadd.f32 %v1385, %v1593
    %v1595 = vpop.f32.mrb[0].mxu0
    %v1596 = vpop.f32.mrb[0].mxu0
    %v1597 = vadd.f32 %v1388, %v1596
    %v1598 = vpop.f32.mrb[0].mxu0
    %1599 = vmatprep.mubr.bf16.mxu0 0
    %1600 = vmatmul.mubr.bf16.gmra.mrb[0].mxu0 %v486
    %v1601 = vpop.f32.mrb[0].mxu0
    %v1602 = vadd.f32 %v1393, %v1601
    %v1603 = vpop.f32.mrb[0].mxu0
    %v1604 = vpop.f32.mrb[0].mxu0
    %v1605 = vadd.f32 %v1396, %v1604
    %v1606 = vpop.f32.mrb[0].mxu0
    %1607 = vdwg.mxu0
    %v1609 = vlaneseq
    %v1610 = vshrl.u32 %v1609, 7
    %v1611 = vsub.s32 0, %v1610
    %v1612 = vrot.slane %v214, %v1611
    %v1614 = vadd.f32 %v1482, %v1612
    %v1615 = vadd.f32 %v1485, %v1612
    %v1616 = vadd.f32 %v1490, %v1612
    %v1617 = vadd.f32 %v1493, %v1612
    %v1618 = vadd.f32 %v1498, %v1612
    %v1619 = vadd.f32 %v1501, %v1612
    %v1620 = vadd.f32 %v1506, %v1612
    %v1621 = vadd.f32 %v1509, %v1612
    %v1622 = vadd.f32 %v1514, %v1612
    %v1623 = vadd.f32 %v1517, %v1612
    %v1624 = vadd.f32 %v1522, %v1612
    %v1625 = vadd.f32 %v1525, %v1612
    %v1626 = vadd.f32 %v1530, %v1612
    %v1627 = vadd.f32 %v1533, %v1612
    %v1628 = vadd.f32 %v1538, %v1612
    %v1629 = vadd.f32 %v1541, %v1612
    %v1630 = vadd.f32 %v1546, %v1612
    %v1631 = vadd.f32 %v1549, %v1612
    %v1632 = vadd.f32 %v1554, %v1612
    %v1633 = vadd.f32 %v1557, %v1612
    %v1634 = vadd.f32 %v1562, %v1612
    %v1635 = vadd.f32 %v1565, %v1612
    %v1636 = vadd.f32 %v1570, %v1612
    %v1637 = vadd.f32 %v1573, %v1612
    %v1638 = vadd.f32 %v1578, %v1612
    %v1639 = vadd.f32 %v1581, %v1612
    %v1640 = vadd.f32 %v1586, %v1612
    %v1641 = vadd.f32 %v1589, %v1612
    %v1642 = vadd.f32 %v1594, %v1612
    %v1643 = vadd.f32 %v1597, %v1612
    %v1644 = vadd.f32 %v1602, %v1612
    %v1645 = vadd.f32 %v1605, %v1612
    %v1646 = vpack.c.bf16 %v1615, %v1614
    %v1647 = vpack.c.bf16 %v1617, %v1616
    %v1648 = vpack.c.bf16 %v1619, %v1618
    %v1649 = vpack.c.bf16 %v1621, %v1620
    %v1650 = vpack.c.bf16 %v1623, %v1622
    %v1651 = vpack.c.bf16 %v1625, %v1624
    %v1652 = vpack.c.bf16 %v1627, %v1626
    %v1653 = vpack.c.bf16 %v1629, %v1628
    %v1654 = vpack.c.bf16 %v1631, %v1630
    %v1655 = vpack.c.bf16 %v1633, %v1632
    %v1656 = vpack.c.bf16 %v1635, %v1634
    %v1657 = vpack.c.bf16 %v1637, %v1636
    %v1658 = vpack.c.bf16 %v1639, %v1638
    %v1659 = vpack.c.bf16 %v1641, %v1640
    %v1660 = vpack.c.bf16 %v1643, %v1642
    %v1661 = vpack.c.bf16 %v1645, %v1644
    %v1662 = vtanh.bf16.pop %v1646
    %v1663 = vtanh.bf16.pop %v1647
    %v1664 = vtanh.bf16.pop %v1648
    %v1665 = vtanh.bf16.pop %v1649
    %v1666 = vtanh.bf16.pop %v1650
    %v1667 = vtanh.bf16.pop %v1651
    %v1668 = vtanh.bf16.pop %v1652
    %v1669 = vtanh.bf16.pop %v1653
    %v1670 = vtanh.bf16.pop %v1654
    %v1671 = vtanh.bf16.pop %v1655
    %v1672 = vtanh.bf16.pop %v1656
    %v1673 = vtanh.bf16.pop %v1657
    %v1674 = vtanh.bf16.pop %v1658
    %v1675 = vtanh.bf16.pop %v1659
    %v1676 = vtanh.bf16.pop %v1660
    %v1677 = vtanh.bf16.pop %v1661
    %1678 = vmatprep.subr.bf16.mxu0 0
    %1679 = vmatpush1.bf16.msra.mxu0 %v1662
    %1680 = vmatprep.subr.bf16.mxu0 0
    %1681 = vmatpush1.bf16.msra.mxu0 %v1663
    %1682 = vmatprep.subr.bf16.mxu0 0
    %1683 = vmatpush1.bf16.msra.mxu0 %v1664
    %1684 = vmatprep.subr.bf16.mxu0 0
    %1685 = vmatpush1.bf16.msra.mxu0 %v1665
    %1686 = vmatprep.subr.bf16.mxu0 0
    %1687 = vmatpush1.bf16.msra.mxu0 %v1666
    %1688 = vmatprep.subr.bf16.mxu0 0
    %1689 = vmatpush1.bf16.msra.mxu0 %v1667
    %1690 = vmatprep.subr.bf16.mxu0 0
    %1691 = vmatpush1.bf16.msra.mxu0 %v1668
    %1692 = vmatprep.subr.bf16.mxu0 0
    %1693 = vmatpush1.bf16.msra.mxu0 %v1669
    %1694 = vmatprep.subr.bf16.mxu0 0
    %1695 = vmatpush1.bf16.msra.mxu0 %v1670
    %1696 = vmatprep.subr.bf16.mxu0 0
    %1697 = vmatpush1.bf16.msra.mxu0 %v1671
    %1698 = vmatprep.subr.bf16.mxu0 0
    %1699 = vmatpush1.bf16.msra.mxu0 %v1672
    %1700 = vmatprep.subr.bf16.mxu0 0
    %1701 = vmatpush1.bf16.msra.mxu0 %v1673
    %1702 = vmatprep.subr.bf16.mxu0 0
    %1703 = vmatpush1.bf16.msra.mxu0 %v1674
    %1704 = vmatprep.subr.bf16.mxu0 0
    %1705 = vmatpush1.bf16.msra.mxu0 %v1675
    %1706 = vmatprep.subr.bf16.mxu0 0
    %1707 = vmatpush1.bf16.msra.mxu0 %v1676
    %1708 = vmatprep.subr.bf16.mxu0 0
    %1709 = vmatpush1.bf16.msra.mxu0 %v1677
    %1710 = vmatprep.mubr.bf16.mxu0 %v344
    %1711 = vmatmul.mubr.bf16.gmra.mrb[0].mxu0 %v343
    %v1712 = vpop.f32.mrb[0].mxu0
    %v1713 = vadd.f32 0.0, %v1712
    %v1714 = vpop.f32.mrb[0].mxu0
    %v1715 = vpop.f32.mrb[0].mxu0
    %v1716 = vadd.f32 0.0, %v1715
    %v1717 = vpop.f32.mrb[0].mxu0
    %1718 = vmatprep.mubr.bf16.mxu0 %v346
    %1719 = vmatmul.mubr.bf16.gmra.mrb[0].mxu0 %v345
    %v1720 = vpop.f32.mrb[0].mxu0
    %v1721 = vadd.f32 0.0, %v1720
    %v1722 = vpop.f32.mrb[0].mxu0
    %v1723 = vpop.f32.mrb[0].mxu0
    %v1724 = vadd.f32 0.0, %v1723
    %v1725 = vpop.f32.mrb[0].mxu0
    %1726 = vmatprep.mubr.bf16.mxu0 %v348
    %1727 = vmatmul.mubr.bf16.gmra.mrb[0].mxu0 %v347
    %v1728 = vpop.f32.mrb[0].mxu0
    %v1729 = vadd.f32 0.0, %v1728
    %v1730 = vpop.f32.mrb[0].mxu0
    %v1731 = vpop.f32.mrb[0].mxu0
    %v1732 = vadd.f32 0.0, %v1731
    %v1733 = vpop.f32.mrb[0].mxu0
    %1734 = vmatprep.mubr.bf16.mxu0 %v350
    %1735 = vmatmul.mubr.bf16.gmra.mrb[0].mxu0 %v349
    %v1736 = vpop.f32.mrb[0].mxu0
    %v1737 = vadd.f32 0.0, %v1736
    %v1738 = vpop.f32.mrb[0].mxu0
    %v1739 = vpop.f32.mrb[0].mxu0
    %v1740 = vadd.f32 0.0, %v1739
    %v1741 = vpop.f32.mrb[0].mxu0
    %1742 = vmatprep.mubr.bf16.mxu0 %v352
    %1743 = vmatmul.mubr.bf16.gmra.mrb[0].mxu0 %v351
    %v1744 = vpop.f32.mrb[0].mxu0
    %v1745 = vadd.f32 0.0, %v1744
    %v1746 = vpop.f32.mrb[0].mxu0
    %v1747 = vpop.f32.mrb[0].mxu0
    %v1748 = vadd.f32 0.0, %v1747
    %v1749 = vpop.f32.mrb[0].mxu0
    %1750 = vmatprep.mubr.bf16.mxu0 %v354
    %1751 = vmatmul.mubr.bf16.gmra.mrb[0].mxu0 %v353
    %v1752 = vpop.f32.mrb[0].mxu0
    %v1753 = vadd.f32 0.0, %v1752
    %v1754 = vpop.f32.mrb[0].mxu0
    %v1755 = vpop.f32.mrb[0].mxu0
    %v1756 = vadd.f32 0.0, %v1755
    %v1757 = vpop.f32.mrb[0].mxu0
    %1758 = vmatprep.mubr.bf16.mxu0 %v356
    %1759 = vmatmul.mubr.bf16.gmra.mrb[0].mxu0 %v355
    %v1760 = vpop.f32.mrb[0].mxu0
    %v1761 = vadd.f32 0.0, %v1760
    %v1762 = vpop.f32.mrb[0].mxu0
    %v1763 = vpop.f32.mrb[0].mxu0
    %v1764 = vadd.f32 0.0, %v1763
    %v1765 = vpop.f32.mrb[0].mxu0
    %1766 = vmatprep.mubr.bf16.mxu0 %v358
    %1767 = vmatmul.mubr.bf16.gmra.mrb[0].mxu0 %v357
    %v1768 = vpop.f32.mrb[0].mxu0
    %v1769 = vadd.f32 0.0, %v1768
    %v1770 = vpop.f32.mrb[0].mxu0
    %v1771 = vpop.f32.mrb[0].mxu0
    %v1772 = vadd.f32 0.0, %v1771
    %v1773 = vpop.f32.mrb[0].mxu0
    %1774 = vmatprep.mubr.bf16.mxu0 %v360
    %1775 = vmatmul.mubr.bf16.gmra.mrb[0].mxu0 %v359
    %v1776 = vpop.f32.mrb[0].mxu0
    %v1777 = vadd.f32 0.0, %v1776
    %v1778 = vpop.f32.mrb[0].mxu0
    %v1779 = vpop.f32.mrb[0].mxu0
    %v1780 = vadd.f32 0.0, %v1779
    %v1781 = vpop.f32.mrb[0].mxu0
    %1782 = vmatprep.mubr.bf16.mxu0 %v362
    %1783 = vmatmul.mubr.bf16.gmra.mrb[0].mxu0 %v361
    %v1784 = vpop.f32.mrb[0].mxu0
    %v1785 = vadd.f32 0.0, %v1784
    %v1786 = vpop.f32.mrb[0].mxu0
    %v1787 = vpop.f32.mrb[0].mxu0
    %v1788 = vadd.f32 0.0, %v1787
    %v1789 = vpop.f32.mrb[0].mxu0
    %1790 = vmatprep.mubr.bf16.mxu0 %v364
    %1791 = vmatmul.mubr.bf16.gmra.mrb[0].mxu0 %v363
    %v1792 = vpop.f32.mrb[0].mxu0
    %v1793 = vadd.f32 0.0, %v1792
    %v1794 = vpop.f32.mrb[0].mxu0
    %v1795 = vpop.f32.mrb[0].mxu0
    %v1796 = vadd.f32 0.0, %v1795
    %v1797 = vpop.f32.mrb[0].mxu0
    %1798 = vmatprep.mubr.bf16.mxu0 %v366
    %1799 = vmatmul.mubr.bf16.gmra.mrb[0].mxu0 %v365
    %v1800 = vpop.f32.mrb[0].mxu0
    %v1801 = vadd.f32 0.0, %v1800
    %v1802 = vpop.f32.mrb[0].mxu0
    %v1803 = vpop.f32.mrb[0].mxu0
    %v1804 = vadd.f32 0.0, %v1803
    %v1805 = vpop.f32.mrb[0].mxu0
    %1806 = vmatprep.mubr.bf16.mxu0 %v368
    %1807 = vmatmul.mubr.bf16.gmra.mrb[0].mxu0 %v367
    %v1808 = vpop.f32.mrb[0].mxu0
    %v1809 = vadd.f32 0.0, %v1808
    %v1810 = vpop.f32.mrb[0].mxu0
    %v1811 = vpop.f32.mrb[0].mxu0
    %v1812 = vadd.f32 0.0, %v1811
    %v1813 = vpop.f32.mrb[0].mxu0
    %1814 = vmatprep.mubr.bf16.mxu0 %v370
    %1815 = vmatmul.mubr.bf16.gmra.mrb[0].mxu0 %v369
    %v1816 = vpop.f32.mrb[0].mxu0
    %v1817 = vadd.f32 0.0, %v1816
    %v1818 = vpop.f32.mrb[0].mxu0
    %v1819 = vpop.f32.mrb[0].mxu0
    %v1820 = vadd.f32 0.0, %v1819
    %v1821 = vpop.f32.mrb[0].mxu0
    %1822 = vmatprep.mubr.bf16.mxu0 %v372
    %1823 = vmatmul.mubr.bf16.gmra.mrb[0].mxu0 %v371
    %v1824 = vpop.f32.mrb[0].mxu0
    %v1825 = vadd.f32 0.0, %v1824
    %v1826 = vpop.f32.mrb[0].mxu0
    %v1827 = vpop.f32.mrb[0].mxu0
    %v1828 = vadd.f32 0.0, %v1827
    %v1829 = vpop.f32.mrb[0].mxu0
    %1830 = vmatprep.mubr.bf16.mxu0 %v374
    %1831 = vmatmul.mubr.bf16.gmra.mrb[0].mxu0 %v373
    %v1832 = vpop.f32.mrb[0].mxu0
    %v1833 = vadd.f32 0.0, %v1832
    %v1834 = vpop.f32.mrb[0].mxu0
    %v1835 = vpop.f32.mrb[0].mxu0
    %v1836 = vadd.f32 0.0, %v1835
    %v1837 = vpop.f32.mrb[0].mxu0
    %1838 = vdwg.mxu0
    %v1839 = vpack.c.bf16 %v1716, %v1713
    %v1840 = vpack.c.bf16 %v1724, %v1721
    %v1841 = vpack.c.bf16 %v1732, %v1729
    %v1842 = vpack.c.bf16 %v1740, %v1737
    %v1843 = vpack.c.bf16 %v1748, %v1745
    %v1844 = vpack.c.bf16 %v1756, %v1753
    %v1845 = vpack.c.bf16 %v1764, %v1761
    %v1846 = vpack.c.bf16 %v1772, %v1769
    %v1847 = vpack.c.bf16 %v1780, %v1777
    %v1848 = vpack.c.bf16 %v1788, %v1785
    %v1849 = vpack.c.bf16 %v1796, %v1793
    %v1850 = vpack.c.bf16 %v1804, %v1801
    %v1851 = vpack.c.bf16 %v1812, %v1809
    %v1852 = vpack.c.bf16 %v1820, %v1817
    %v1853 = vpack.c.bf16 %v1828, %v1825
    %v1854 = vpack.c.bf16 %v1836, %v1833
    %1855 = vmatprep.subr.bf16.mxu0 0
    %1856 = vmatpush1.bf16.msra.mxu0 %v718
    %1857 = vmatprep.subr.bf16.mxu0 0
    %1858 = vmatpush1.bf16.msra.mxu0 %v719
    %1859 = vmatprep.subr.bf16.mxu0 0
    %1860 = vmatpush1.bf16.msra.mxu0 %v720
    %1861 = vmatprep.subr.bf16.mxu0 0
    %1862 = vmatpush1.bf16.msra.mxu0 %v721
    %1863 = vmatprep.subr.bf16.mxu0 0
    %1864 = vmatpush1.bf16.msra.mxu0 %v722
    %1865 = vmatprep.subr.bf16.mxu0 0
    %1866 = vmatpush1.bf16.msra.mxu0 %v723
    %1867 = vmatprep.subr.bf16.mxu0 0
    %1868 = vmatpush1.bf16.msra.mxu0 %v724
    %1869 = vmatprep.subr.bf16.mxu0 0
    %1870 = vmatpush1.bf16.msra.mxu0 %v725
    %1871 = vmatprep.subr.bf16.mxu0 0
    %1872 = vmatpush1.bf16.msra.mxu0 0
    %1873 = vmatprep.subr.bf16.mxu0 0
    %1874 = vmatpush1.bf16.msra.mxu0 0
    %1875 = vmatprep.subr.bf16.mxu0 0
    %1876 = vmatpush1.bf16.msra.mxu0 0
    %1877 = vmatprep.subr.bf16.mxu0 0
    %1878 = vmatpush1.bf16.msra.mxu0 0
    %1879 = vmatprep.subr.bf16.mxu0 0
    %1880 = vmatpush1.bf16.msra.mxu0 0
    %1881 = vmatprep.subr.bf16.mxu0 0
    %1882 = vmatpush1.bf16.msra.mxu0 0
    %1883 = vmatprep.subr.bf16.mxu0 0
    %1884 = vmatpush1.bf16.msra.mxu0 0
    %1885 = vmatprep.subr.bf16.mxu0 0
    %1886 = vmatpush1.bf16.msra.mxu0 0
    %1887 = vmatprep.mubr.bf16.mxu0 0
    %1888 = vmatmul.mubr.bf16.gmra.mrb[0].mxu0 %v1839
    %v1889 = vpop.f32.mrb[0].mxu0
    %v1890 = vadd.f32 %v684, %v1889
    %v1891 = vpop.f32.mrb[0].mxu0
    %v1892 = vpop.f32.mrb[0].mxu0
    %v1893 = vadd.f32 %v684, %v1892
    %v1894 = vpop.f32.mrb[0].mxu0
    %1895 = vmatprep.mubr.bf16.mxu0 0
    %1896 = vmatmul.mubr.bf16.gmra.mrb[0].mxu0 %v1840
    %v1897 = vpop.f32.mrb[0].mxu0
    %v1898 = vadd.f32 %v684, %v1897
    %v1899 = vpop.f32.mrb[0].mxu0
    %v1900 = vpop.f32.mrb[0].mxu0
    %v1901 = vadd.f32 %v684, %v1900
    %v1902 = vpop.f32.mrb[0].mxu0
    %1903 = vmatprep.mubr.bf16.mxu0 0
    %1904 = vmatmul.mubr.bf16.gmra.mrb[0].mxu0 %v1841
    %v1905 = vpop.f32.mrb[0].mxu0
    %v1906 = vadd.f32 %v684, %v1905
    %v1907 = vpop.f32.mrb[0].mxu0
    %v1908 = vpop.f32.mrb[0].mxu0
    %v1909 = vadd.f32 %v684, %v1908
    %v1910 = vpop.f32.mrb[0].mxu0
    %1911 = vmatprep.mubr.bf16.mxu0 0
    %1912 = vmatmul.mubr.bf16.gmra.mrb[0].mxu0 %v1842
    %v1913 = vpop.f32.mrb[0].mxu0
    %v1914 = vadd.f32 %v684, %v1913
    %v1915 = vpop.f32.mrb[0].mxu0
    %v1916 = vpop.f32.mrb[0].mxu0
    %v1917 = vadd.f32 %v684, %v1916
    %v1918 = vpop.f32.mrb[0].mxu0
    %1919 = vmatprep.mubr.bf16.mxu0 0
    %1920 = vmatmul.mubr.bf16.gmra.mrb[0].mxu0 %v1843
    %v1921 = vpop.f32.mrb[0].mxu0
    %v1922 = vadd.f32 %v684, %v1921
    %v1923 = vpop.f32.mrb[0].mxu0
    %v1924 = vpop.f32.mrb[0].mxu0
    %v1925 = vadd.f32 %v684, %v1924
    %v1926 = vpop.f32.mrb[0].mxu0
    %1927 = vmatprep.mubr.bf16.mxu0 0
    %1928 = vmatmul.mubr.bf16.gmra.mrb[0].mxu0 %v1844
    %v1929 = vpop.f32.mrb[0].mxu0
    %v1930 = vadd.f32 %v684, %v1929
    %v1931 = vpop.f32.mrb[0].mxu0
    %v1932 = vpop.f32.mrb[0].mxu0
    %v1933 = vadd.f32 %v684, %v1932
    %v1934 = vpop.f32.mrb[0].mxu0
    %1935 = vmatprep.mubr.bf16.mxu0 0
    %1936 = vmatmul.mubr.bf16.gmra.mrb[0].mxu0 %v1845
    %v1937 = vpop.f32.mrb[0].mxu0
    %v1938 = vadd.f32 %v684, %v1937
    %v1939 = vpop.f32.mrb[0].mxu0
    %v1940 = vpop.f32.mrb[0].mxu0
    %v1941 = vadd.f32 %v684, %v1940
    %v1942 = vpop.f32.mrb[0].mxu0
    %1943 = vmatprep.mubr.bf16.mxu0 0
    %1944 = vmatmul.mubr.bf16.gmra.mrb[0].mxu0 %v1846
    %v1945 = vpop.f32.mrb[0].mxu0
    %v1946 = vadd.f32 %v684, %v1945
    %v1947 = vpop.f32.mrb[0].mxu0
    %v1948 = vpop.f32.mrb[0].mxu0
    %v1949 = vadd.f32 %v684, %v1948
    %v1950 = vpop.f32.mrb[0].mxu0
    %1951 = vmatprep.mubr.bf16.mxu0 0
    %1952 = vmatmul.mubr.bf16.gmra.mrb[0].mxu0 %v1847
    %v1953 = vpop.f32.mrb[0].mxu0
    %v1954 = vadd.f32 %v684, %v1953
    %v1955 = vpop.f32.mrb[0].mxu0
    %v1956 = vpop.f32.mrb[0].mxu0
    %v1957 = vadd.f32 %v684, %v1956
    %v1958 = vpop.f32.mrb[0].mxu0
    %1959 = vmatprep.mubr.bf16.mxu0 0
    %1960 = vmatmul.mubr.bf16.gmra.mrb[0].mxu0 %v1848
    %v1961 = vpop.f32.mrb[0].mxu0
    %v1962 = vadd.f32 %v684, %v1961
    %v1963 = vpop.f32.mrb[0].mxu0
    %v1964 = vpop.f32.mrb[0].mxu0
    %v1965 = vadd.f32 %v684, %v1964
    %v1966 = vpop.f32.mrb[0].mxu0
    %1967 = vmatprep.mubr.bf16.mxu0 0
    %1968 = vmatmul.mubr.bf16.gmra.mrb[0].mxu0 %v1849
    %v1969 = vpop.f32.mrb[0].mxu0
    %v1970 = vadd.f32 %v684, %v1969
    %v1971 = vpop.f32.mrb[0].mxu0
    %v1972 = vpop.f32.mrb[0].mxu0
    %v1973 = vadd.f32 %v684, %v1972
    %v1974 = vpop.f32.mrb[0].mxu0
    %1975 = vmatprep.mubr.bf16.mxu0 0
    %1976 = vmatmul.mubr.bf16.gmra.mrb[0].mxu0 %v1850
    %v1977 = vpop.f32.mrb[0].mxu0
    %v1978 = vadd.f32 %v684, %v1977
    %v1979 = vpop.f32.mrb[0].mxu0
    %v1980 = vpop.f32.mrb[0].mxu0
    %v1981 = vadd.f32 %v684, %v1980
    %v1982 = vpop.f32.mrb[0].mxu0
    %1983 = vmatprep.mubr.bf16.mxu0 0
    %1984 = vmatmul.mubr.bf16.gmra.mrb[0].mxu0 %v1851
    %v1985 = vpop.f32.mrb[0].mxu0
    %v1986 = vadd.f32 %v684, %v1985
    %v1987 = vpop.f32.mrb[0].mxu0
    %v1988 = vpop.f32.mrb[0].mxu0
    %v1989 = vadd.f32 %v684, %v1988
    %v1990 = vpop.f32.mrb[0].mxu0
    %1991 = vmatprep.mubr.bf16.mxu0 0
    %1992 = vmatmul.mubr.bf16.gmra.mrb[0].mxu0 %v1852
    %v1993 = vpop.f32.mrb[0].mxu0
    %v1994 = vadd.f32 %v684, %v1993
    %v1995 = vpop.f32.mrb[0].mxu0
    %v1996 = vpop.f32.mrb[0].mxu0
    %v1997 = vadd.f32 %v684, %v1996
    %v1998 = vpop.f32.mrb[0].mxu0
    %1999 = vmatprep.mubr.bf16.mxu0 0
    %2000 = vmatmul.mubr.bf16.gmra.mrb[0].mxu0 %v1853
    %v2001 = vpop.f32.mrb[0].mxu0
    %v2002 = vadd.f32 %v684, %v2001
    %v2003 = vpop.f32.mrb[0].mxu0
    %v2004 = vpop.f32.mrb[0].mxu0
    %v2005 = vadd.f32 %v684, %v2004
    %v2006 = vpop.f32.mrb[0].mxu0
    %2007 = vmatprep.mubr.bf16.mxu0 0
    %2008 = vmatmul.mubr.bf16.gmra.mrb[0].mxu0 %v1854
    %v2009 = vpop.f32.mrb[0].mxu0
    %v2010 = vadd.f32 %v684, %v2009
    %v2011 = vpop.f32.mrb[0].mxu0
    %v2012 = vpop.f32.mrb[0].mxu0
    %v2013 = vadd.f32 %v684, %v2012
    %v2014 = vpop.f32.mrb[0].mxu0
    %2015 = vdwg.mxu0
    %v2016 = vmax.f32 %v1890, 0.0
    %v2017 = vmax.f32 %v1893, 0.0
    %v2018 = vmax.f32 %v1898, 0.0
    %v2019 = vmax.f32 %v1901, 0.0
    %v2020 = vmax.f32 %v1906, 0.0
    %v2021 = vmax.f32 %v1909, 0.0
    %v2022 = vmax.f32 %v1914, 0.0
    %v2023 = vmax.f32 %v1917, 0.0
    %v2024 = vmax.f32 %v1922, 0.0
    %v2025 = vmax.f32 %v1925, 0.0
    %v2026 = vmax.f32 %v1930, 0.0
    %v2027 = vmax.f32 %v1933, 0.0
    %v2028 = vmax.f32 %v1938, 0.0
    %v2029 = vmax.f32 %v1941, 0.0
    %v2030 = vmax.f32 %v1946, 0.0
    %v2031 = vmax.f32 %v1949, 0.0
    %v2032 = vmax.f32 %v1954, 0.0
    %v2033 = vmax.f32 %v1957, 0.0
    %v2034 = vmax.f32 %v1962, 0.0
    %v2035 = vmax.f32 %v1965, 0.0
    %v2036 = vmax.f32 %v1970, 0.0
    %v2037 = vmax.f32 %v1973, 0.0
    %v2038 = vmax.f32 %v1978, 0.0
    %v2039 = vmax.f32 %v1981, 0.0
    %v2040 = vmax.f32 %v1986, 0.0
    %v2041 = vmax.f32 %v1989, 0.0
    %v2042 = vmax.f32 %v1994, 0.0
    %v2043 = vmax.f32 %v1997, 0.0
    %v2044 = vmax.f32 %v2002, 0.0
    %v2045 = vmax.f32 %v2005, 0.0
    %v2046 = vmax.f32 %v2010, 0.0
    %v2047 = vmax.f32 %v2013, 0.0
    %v2048 = vpack.c.bf16 %v2017, %v2016
    %v2049 = vpack.c.bf16 %v2019, %v2018
    %v2050 = vpack.c.bf16 %v2021, %v2020
    %v2051 = vpack.c.bf16 %v2023, %v2022
    %v2052 = vpack.c.bf16 %v2025, %v2024
    %v2053 = vpack.c.bf16 %v2027, %v2026
    %v2054 = vpack.c.bf16 %v2029, %v2028
    %v2055 = vpack.c.bf16 %v2031, %v2030
    %v2056 = vpack.c.bf16 %v2033, %v2032
    %v2057 = vpack.c.bf16 %v2035, %v2034
    %v2058 = vpack.c.bf16 %v2037, %v2036
    %v2059 = vpack.c.bf16 %v2039, %v2038
    %v2060 = vpack.c.bf16 %v2041, %v2040
    %v2061 = vpack.c.bf16 %v2043, %v2042
    %v2062 = vpack.c.bf16 %v2045, %v2044
    %v2063 = vpack.c.bf16 %v2047, %v2046
    %2064 = vmatprep.subr.bf16.mxu0 0
    %2065 = vmatpush1.bf16.msra.mxu0 %v981
    %2066 = vmatprep.subr.bf16.mxu0 0
    %2067 = vmatpush1.bf16.msra.mxu0 %v982
    %2068 = vmatprep.subr.bf16.mxu0 0
    %2069 = vmatpush1.bf16.msra.mxu0 %v983
    %2070 = vmatprep.subr.bf16.mxu0 0
    %2071 = vmatpush1.bf16.msra.mxu0 %v984
    %2072 = vmatprep.subr.bf16.mxu0 0
    %2073 = vmatpush1.bf16.msra.mxu0 %v985
    %2074 = vmatprep.subr.bf16.mxu0 0
    %2075 = vmatpush1.bf16.msra.mxu0 %v986
    %2076 = vmatprep.subr.bf16.mxu0 0
    %2077 = vmatpush1.bf16.msra.mxu0 %v987
    %2078 = vmatprep.subr.bf16.mxu0 0
    %2079 = vmatpush1.bf16.msra.mxu0 %v988
    %2080 = vmatprep.subr.bf16.mxu0 0
    %2081 = vmatpush1.bf16.msra.mxu0 0
    %2082 = vmatprep.subr.bf16.mxu0 0
    %2083 = vmatpush1.bf16.msra.mxu0 0
    %2084 = vmatprep.subr.bf16.mxu0 0
    %2085 = vmatpush1.bf16.msra.mxu0 0
    %2086 = vmatprep.subr.bf16.mxu0 0
    %2087 = vmatpush1.bf16.msra.mxu0 0
    %2088 = vmatprep.subr.bf16.mxu0 0
    %2089 = vmatpush1.bf16.msra.mxu0 0
    %2090 = vmatprep.subr.bf16.mxu0 0
    %2091 = vmatpush1.bf16.msra.mxu0 0
    %2092 = vmatprep.subr.bf16.mxu0 0
    %2093 = vmatpush1.bf16.msra.mxu0 0
    %2094 = vmatprep.subr.bf16.mxu0 0
    %2095 = vmatpush1.bf16.msra.mxu0 0
    %2096 = vmatprep.mubr.bf16.mxu0 0
    %2097 = vmatmul.mubr.bf16.gmra.mrb[0].mxu0 %v2048
    %v2098 = vpop.f32.mrb[0].mxu0
    %v2099 = vadd.f32 %v947, %v2098
    %v2100 = vpop.f32.mrb[0].mxu0
    %v2101 = vpop.f32.mrb[0].mxu0
    %v2102 = vadd.f32 %v947, %v2101
    %v2103 = vpop.f32.mrb[0].mxu0
    %2104 = vmatprep.mubr.bf16.mxu0 0
    %2105 = vmatmul.mubr.bf16.gmra.mrb[0].mxu0 %v2049
    %v2106 = vpop.f32.mrb[0].mxu0
    %v2107 = vadd.f32 %v947, %v2106
    %v2108 = vpop.f32.mrb[0].mxu0
    %v2109 = vpop.f32.mrb[0].mxu0
    %v2110 = vadd.f32 %v947, %v2109
    %v2111 = vpop.f32.mrb[0].mxu0
    %2112 = vmatprep.mubr.bf16.mxu0 0
    %2113 = vmatmul.mubr.bf16.gmra.mrb[0].mxu0 %v2050
    %v2114 = vpop.f32.mrb[0].mxu0
    %v2115 = vadd.f32 %v947, %v2114
    %v2116 = vpop.f32.mrb[0].mxu0
    %v2117 = vpop.f32.mrb[0].mxu0
    %v2118 = vadd.f32 %v947, %v2117
    %v2119 = vpop.f32.mrb[0].mxu0
    %2120 = vmatprep.mubr.bf16.mxu0 0
    %2121 = vmatmul.mubr.bf16.gmra.mrb[0].mxu0 %v2051
    %v2122 = vpop.f32.mrb[0].mxu0
    %v2123 = vadd.f32 %v947, %v2122
    %v2124 = vpop.f32.mrb[0].mxu0
    %v2125 = vpop.f32.mrb[0].mxu0
    %v2126 = vadd.f32 %v947, %v2125
    %v2127 = vpop.f32.mrb[0].mxu0
    %2128 = vmatprep.mubr.bf16.mxu0 0
    %2129 = vmatmul.mubr.bf16.gmra.mrb[0].mxu0 %v2052
    %v2130 = vpop.f32.mrb[0].mxu0
    %v2131 = vadd.f32 %v947, %v2130
    %v2132 = vpop.f32.mrb[0].mxu0
    %v2133 = vpop.f32.mrb[0].mxu0
    %v2134 = vadd.f32 %v947, %v2133
    %v2135 = vpop.f32.mrb[0].mxu0
    %2136 = vmatprep.mubr.bf16.mxu0 0
    %2137 = vmatmul.mubr.bf16.gmra.mrb[0].mxu0 %v2053
    %v2138 = vpop.f32.mrb[0].mxu0
    %v2139 = vadd.f32 %v947, %v2138
    %v2140 = vpop.f32.mrb[0].mxu0
    %v2141 = vpop.f32.mrb[0].mxu0
    %v2142 = vadd.f32 %v947, %v2141
    %v2143 = vpop.f32.mrb[0].mxu0
    %2144 = vmatprep.mubr.bf16.mxu0 0
    %2145 = vmatmul.mubr.bf16.gmra.mrb[0].mxu0 %v2054
    %v2146 = vpop.f32.mrb[0].mxu0
    %v2147 = vadd.f32 %v947, %v2146
    %v2148 = vpop.f32.mrb[0].mxu0
    %v2149 = vpop.f32.mrb[0].mxu0
    %v2150 = vadd.f32 %v947, %v2149
    %v2151 = vpop.f32.mrb[0].mxu0
    %2152 = vmatprep.mubr.bf16.mxu0 0
    %2153 = vmatmul.mubr.bf16.gmra.mrb[0].mxu0 %v2055
    %v2154 = vpop.f32.mrb[0].mxu0
    %v2155 = vadd.f32 %v947, %v2154
    %v2156 = vpop.f32.mrb[0].mxu0
    %v2157 = vpop.f32.mrb[0].mxu0
    %v2158 = vadd.f32 %v947, %v2157
    %v2159 = vpop.f32.mrb[0].mxu0
    %2160 = vmatprep.mubr.bf16.mxu0 0
    %2161 = vmatmul.mubr.bf16.gmra.mrb[0].mxu0 %v2056
    %v2162 = vpop.f32.mrb[0].mxu0
    %v2163 = vadd.f32 %v947, %v2162
    %v2164 = vpop.f32.mrb[0].mxu0
    %v2165 = vpop.f32.mrb[0].mxu0
    %v2166 = vadd.f32 %v947, %v2165
    %v2167 = vpop.f32.mrb[0].mxu0
    %2168 = vmatprep.mubr.bf16.mxu0 0
    %2169 = vmatmul.mubr.bf16.gmra.mrb[0].mxu0 %v2057
    %v2170 = vpop.f32.mrb[0].mxu0
    %v2171 = vadd.f32 %v947, %v2170
    %v2172 = vpop.f32.mrb[0].mxu0
    %v2173 = vpop.f32.mrb[0].mxu0
    %v2174 = vadd.f32 %v947, %v2173
    %v2175 = vpop.f32.mrb[0].mxu0
    %2176 = vmatprep.mubr.bf16.mxu0 0
    %2177 = vmatmul.mubr.bf16.gmra.mrb[0].mxu0 %v2058
    %v2178 = vpop.f32.mrb[0].mxu0
    %v2179 = vadd.f32 %v947, %v2178
    %v2180 = vpop.f32.mrb[0].mxu0
    %v2181 = vpop.f32.mrb[0].mxu0
    %v2182 = vadd.f32 %v947, %v2181
    %v2183 = vpop.f32.mrb[0].mxu0
    %2184 = vmatprep.mubr.bf16.mxu0 0
    %2185 = vmatmul.mubr.bf16.gmra.mrb[0].mxu0 %v2059
    %v2186 = vpop.f32.mrb[0].mxu0
    %v2187 = vadd.f32 %v947, %v2186
    %v2188 = vpop.f32.mrb[0].mxu0
    %v2189 = vpop.f32.mrb[0].mxu0
    %v2190 = vadd.f32 %v947, %v2189
    %v2191 = vpop.f32.mrb[0].mxu0
    %2192 = vmatprep.mubr.bf16.mxu0 0
    %2193 = vmatmul.mubr.bf16.gmra.mrb[0].mxu0 %v2060
    %v2194 = vpop.f32.mrb[0].mxu0
    %v2195 = vadd.f32 %v947, %v2194
    %v2196 = vpop.f32.mrb[0].mxu0
    %v2197 = vpop.f32.mrb[0].mxu0
    %v2198 = vadd.f32 %v947, %v2197
    %v2199 = vpop.f32.mrb[0].mxu0
    %2200 = vmatprep.mubr.bf16.mxu0 0
    %2201 = vmatmul.mubr.bf16.gmra.mrb[0].mxu0 %v2061
    %v2202 = vpop.f32.mrb[0].mxu0
    %v2203 = vadd.f32 %v947, %v2202
    %v2204 = vpop.f32.mrb[0].mxu0
    %v2205 = vpop.f32.mrb[0].mxu0
    %v2206 = vadd.f32 %v947, %v2205
    %v2207 = vpop.f32.mrb[0].mxu0
    %2208 = vmatprep.mubr.bf16.mxu0 0
    %2209 = vmatmul.mubr.bf16.gmra.mrb[0].mxu0 %v2062
    %v2210 = vpop.f32.mrb[0].mxu0
    %v2211 = vadd.f32 %v947, %v2210
    %v2212 = vpop.f32.mrb[0].mxu0
    %v2213 = vpop.f32.mrb[0].mxu0
    %v2214 = vadd.f32 %v947, %v2213
    %v2215 = vpop.f32.mrb[0].mxu0
    %2216 = vmatprep.mubr.bf16.mxu0 0
    %2217 = vmatmul.mubr.bf16.gmra.mrb[0].mxu0 %v2063
    %v2218 = vpop.f32.mrb[0].mxu0
    %v2219 = vadd.f32 %v947, %v2218
    %v2220 = vpop.f32.mrb[0].mxu0
    %v2221 = vpop.f32.mrb[0].mxu0
    %v2222 = vadd.f32 %v947, %v2221
    %v2223 = vpop.f32.mrb[0].mxu0
    %2224 = vdwg.mxu0
    %v2225 = vpack.c.bf16 %v2102, %v2099
    %v2226 = vpack.c.bf16 %v2110, %v2107
    %v2227 = vpack.c.bf16 %v2118, %v2115
    %v2228 = vpack.c.bf16 %v2126, %v2123
    %v2229 = vpack.c.bf16 %v2134, %v2131
    %v2230 = vpack.c.bf16 %v2142, %v2139
    %v2231 = vpack.c.bf16 %v2150, %v2147
    %v2232 = vpack.c.bf16 %v2158, %v2155
    %v2233 = vpack.c.bf16 %v2166, %v2163
    %v2234 = vpack.c.bf16 %v2174, %v2171
    %v2235 = vpack.c.bf16 %v2182, %v2179
    %v2236 = vpack.c.bf16 %v2190, %v2187
    %v2237 = vpack.c.bf16 %v2198, %v2195
    %v2238 = vpack.c.bf16 %v2206, %v2203
    %v2239 = vpack.c.bf16 %v2214, %v2211
    %v2240 = vpack.c.bf16 %v2222, %v2219
    %v2241 = vtanh.bf16.pop %v2225
    %v2242 = vtanh.bf16.pop %v2226
    %v2243 = vtanh.bf16.pop %v2227
    %v2244 = vtanh.bf16.pop %v2228
    %v2245 = vtanh.bf16.pop %v2229
    %v2246 = vtanh.bf16.pop %v2230
    %v2247 = vtanh.bf16.pop %v2231
    %v2248 = vtanh.bf16.pop %v2232
    %v2249 = vtanh.bf16.pop %v2233
    %v2250 = vtanh.bf16.pop %v2234
    %v2251 = vtanh.bf16.pop %v2235
    %v2252 = vtanh.bf16.pop %v2236
    %v2253 = vtanh.bf16.pop %v2237
    %v2254 = vtanh.bf16.pop %v2238
    %v2255 = vtanh.bf16.pop %v2239
    %v2256 = vtanh.bf16.pop %v2240
    %2257 = vmatprep.subr.bf16.mxu0 0
    %2258 = vmatpush1.bf16.msra.mxu0 %v1222
    %2259 = vmatprep.subr.bf16.mxu0 0
    %2260 = vmatpush1.bf16.msra.mxu0 %v1223
    %2261 = vmatprep.subr.bf16.mxu0 0
    %2262 = vmatpush1.bf16.msra.mxu0 %v1224
    %2263 = vmatprep.subr.bf16.mxu0 0
    %2264 = vmatpush1.bf16.msra.mxu0 %v1225
    %2265 = vmatprep.subr.bf16.mxu0 0
    %2266 = vmatpush1.bf16.msra.mxu0 %v1226
    %2267 = vmatprep.subr.bf16.mxu0 0
    %2268 = vmatpush1.bf16.msra.mxu0 %v1227
    %2269 = vmatprep.subr.bf16.mxu0 0
    %2270 = vmatpush1.bf16.msra.mxu0 %v1228
    %2271 = vmatprep.subr.bf16.mxu0 0
    %2272 = vmatpush1.bf16.msra.mxu0 %v1229
    %2273 = vmatprep.subr.bf16.mxu0 0
    %2274 = vmatpush1.bf16.msra.mxu0 0
    %2275 = vmatprep.subr.bf16.mxu0 0
    %2276 = vmatpush1.bf16.msra.mxu0 0
    %2277 = vmatprep.subr.bf16.mxu0 0
    %2278 = vmatpush1.bf16.msra.mxu0 0
    %2279 = vmatprep.subr.bf16.mxu0 0
    %2280 = vmatpush1.bf16.msra.mxu0 0
    %2281 = vmatprep.subr.bf16.mxu0 0
    %2282 = vmatpush1.bf16.msra.mxu0 0
    %2283 = vmatprep.subr.bf16.mxu0 0
    %2284 = vmatpush1.bf16.msra.mxu0 0
    %2285 = vmatprep.subr.bf16.mxu0 0
    %2286 = vmatpush1.bf16.msra.mxu0 0
    %2287 = vmatprep.subr.bf16.mxu0 0
    %2288 = vmatpush1.bf16.msra.mxu0 0
    %2289 = vmatprep.mubr.bf16.mxu0 0
    %2290 = vmatmul.mubr.bf16.gmra.mrb[0].mxu0 %v2241
    %v2291 = vpop.f32.mrb[0].mxu0
    %v2292 = vadd.f32 0.0, %v2291
    %v2293 = vpop.f32.mrb[0].mxu0
    %v2294 = vpop.f32.mrb[0].mxu0
    %v2295 = vadd.f32 0.0, %v2294
    %v2296 = vpop.f32.mrb[0].mxu0
    %2297 = vmatprep.mubr.bf16.mxu0 0
    %2298 = vmatmul.mubr.bf16.gmra.mrb[0].mxu0 %v2242
    %v2299 = vpop.f32.mrb[0].mxu0
    %v2300 = vadd.f32 0.0, %v2299
    %v2301 = vpop.f32.mrb[0].mxu0
    %v2302 = vpop.f32.mrb[0].mxu0
    %v2303 = vadd.f32 0.0, %v2302
    %v2304 = vpop.f32.mrb[0].mxu0
    %2305 = vmatprep.mubr.bf16.mxu0 0
    %2306 = vmatmul.mubr.bf16.gmra.mrb[0].mxu0 %v2243
    %v2307 = vpop.f32.mrb[0].mxu0
    %v2308 = vadd.f32 0.0, %v2307
    %v2309 = vpop.f32.mrb[0].mxu0
    %v2310 = vpop.f32.mrb[0].mxu0
    %v2311 = vadd.f32 0.0, %v2310
    %v2312 = vpop.f32.mrb[0].mxu0
    %2313 = vmatprep.mubr.bf16.mxu0 0
    %2314 = vmatmul.mubr.bf16.gmra.mrb[0].mxu0 %v2244
    %v2315 = vpop.f32.mrb[0].mxu0
    %v2316 = vadd.f32 0.0, %v2315
    %v2317 = vpop.f32.mrb[0].mxu0
    %v2318 = vpop.f32.mrb[0].mxu0
    %v2319 = vadd.f32 0.0, %v2318
    %v2320 = vpop.f32.mrb[0].mxu0
    %2321 = vmatprep.mubr.bf16.mxu0 0
    %2322 = vmatmul.mubr.bf16.gmra.mrb[0].mxu0 %v2245
    %v2323 = vpop.f32.mrb[0].mxu0
    %v2324 = vadd.f32 0.0, %v2323
    %v2325 = vpop.f32.mrb[0].mxu0
    %v2326 = vpop.f32.mrb[0].mxu0
    %v2327 = vadd.f32 0.0, %v2326
    %v2328 = vpop.f32.mrb[0].mxu0
    %2329 = vmatprep.mubr.bf16.mxu0 0
    %2330 = vmatmul.mubr.bf16.gmra.mrb[0].mxu0 %v2246
    %v2331 = vpop.f32.mrb[0].mxu0
    %v2332 = vadd.f32 0.0, %v2331
    %v2333 = vpop.f32.mrb[0].mxu0
    %v2334 = vpop.f32.mrb[0].mxu0
    %v2335 = vadd.f32 0.0, %v2334
    %v2336 = vpop.f32.mrb[0].mxu0
    %2337 = vmatprep.mubr.bf16.mxu0 0
    %2338 = vmatmul.mubr.bf16.gmra.mrb[0].mxu0 %v2247
    %v2339 = vpop.f32.mrb[0].mxu0
    %v2340 = vadd.f32 0.0, %v2339
    %v2341 = vpop.f32.mrb[0].mxu0
    %v2342 = vpop.f32.mrb[0].mxu0
    %v2343 = vadd.f32 0.0, %v2342
    %v2344 = vpop.f32.mrb[0].mxu0
    %2345 = vmatprep.mubr.bf16.mxu0 0
    %2346 = vmatmul.mubr.bf16.gmra.mrb[0].mxu0 %v2248
    %v2347 = vpop.f32.mrb[0].mxu0
    %v2348 = vadd.f32 0.0, %v2347
    %v2349 = vpop.f32.mrb[0].mxu0
    %v2350 = vpop.f32.mrb[0].mxu0
    %v2351 = vadd.f32 0.0, %v2350
    %v2352 = vpop.f32.mrb[0].mxu0
    %2353 = vmatprep.mubr.bf16.mxu0 0
    %2354 = vmatmul.mubr.bf16.gmra.mrb[0].mxu0 %v2249
    %v2355 = vpop.f32.mrb[0].mxu0
    %v2356 = vadd.f32 0.0, %v2355
    %v2357 = vpop.f32.mrb[0].mxu0
    %v2358 = vpop.f32.mrb[0].mxu0
    %v2359 = vadd.f32 0.0, %v2358
    %v2360 = vpop.f32.mrb[0].mxu0
    %2361 = vmatprep.mubr.bf16.mxu0 0
    %2362 = vmatmul.mubr.bf16.gmra.mrb[0].mxu0 %v2250
    %v2363 = vpop.f32.mrb[0].mxu0
    %v2364 = vadd.f32 0.0, %v2363
    %v2365 = vpop.f32.mrb[0].mxu0
    %v2366 = vpop.f32.mrb[0].mxu0
    %v2367 = vadd.f32 0.0, %v2366
    %v2368 = vpop.f32.mrb[0].mxu0
    %2369 = vmatprep.mubr.bf16.mxu0 0
    %2370 = vmatmul.mubr.bf16.gmra.mrb[0].mxu0 %v2251
    %v2371 = vpop.f32.mrb[0].mxu0
    %v2372 = vadd.f32 0.0, %v2371
    %v2373 = vpop.f32.mrb[0].mxu0
    %v2374 = vpop.f32.mrb[0].mxu0
    %v2375 = vadd.f32 0.0, %v2374
    %v2376 = vpop.f32.mrb[0].mxu0
    %2377 = vmatprep.mubr.bf16.mxu0 0
    %2378 = vmatmul.mubr.bf16.gmra.mrb[0].mxu0 %v2252
    %v2379 = vpop.f32.mrb[0].mxu0
    %v2380 = vadd.f32 0.0, %v2379
    %v2381 = vpop.f32.mrb[0].mxu0
    %v2382 = vpop.f32.mrb[0].mxu0
    %v2383 = vadd.f32 0.0, %v2382
    %v2384 = vpop.f32.mrb[0].mxu0
    %2385 = vmatprep.mubr.bf16.mxu0 0
    %2386 = vmatmul.mubr.bf16.gmra.mrb[0].mxu0 %v2253
    %v2387 = vpop.f32.mrb[0].mxu0
    %v2388 = vadd.f32 0.0, %v2387
    %v2389 = vpop.f32.mrb[0].mxu0
    %v2390 = vpop.f32.mrb[0].mxu0
    %v2391 = vadd.f32 0.0, %v2390
    %v2392 = vpop.f32.mrb[0].mxu0
    %2393 = vmatprep.mubr.bf16.mxu0 0
    %2394 = vmatmul.mubr.bf16.gmra.mrb[0].mxu0 %v2254
    %v2395 = vpop.f32.mrb[0].mxu0
    %v2396 = vadd.f32 0.0, %v2395
    %v2397 = vpop.f32.mrb[0].mxu0
    %v2398 = vpop.f32.mrb[0].mxu0
    %v2399 = vadd.f32 0.0, %v2398
    %v2400 = vpop.f32.mrb[0].mxu0
    %2401 = vmatprep.mubr.bf16.mxu0 0
    %2402 = vmatmul.mubr.bf16.gmra.mrb[0].mxu0 %v2255
    %v2403 = vpop.f32.mrb[0].mxu0
    %v2404 = vadd.f32 0.0, %v2403
    %v2405 = vpop.f32.mrb[0].mxu0
    %v2406 = vpop.f32.mrb[0].mxu0
    %v2407 = vadd.f32 0.0, %v2406
    %v2408 = vpop.f32.mrb[0].mxu0
    %2409 = vmatprep.mubr.bf16.mxu0 0
    %2410 = vmatmul.mubr.bf16.gmra.mrb[0].mxu0 %v2256
    %v2411 = vpop.f32.mrb[0].mxu0
    %v2412 = vadd.f32 0.0, %v2411
    %v2413 = vpop.f32.mrb[0].mxu0
    %v2414 = vpop.f32.mrb[0].mxu0
    %v2415 = vadd.f32 0.0, %v2414
    %v2416 = vpop.f32.mrb[0].mxu0
    %2417 = vdwg.mxu0
    %2418 = vmatprep.subr.bf16.mxu0 0
    %2419 = vmatpush1.bf16.msra.mxu0 %v1431
    %2420 = vmatprep.subr.bf16.mxu0 0
    %2421 = vmatpush1.bf16.msra.mxu0 %v1432
    %2422 = vmatprep.subr.bf16.mxu0 0
    %2423 = vmatpush1.bf16.msra.mxu0 %v1433
    %2424 = vmatprep.subr.bf16.mxu0 0
    %2425 = vmatpush1.bf16.msra.mxu0 %v1434
    %2426 = vmatprep.subr.bf16.mxu0 0
    %2427 = vmatpush1.bf16.msra.mxu0 %v1435
    %2428 = vmatprep.subr.bf16.mxu0 0
    %2429 = vmatpush1.bf16.msra.mxu0 %v1436
    %2430 = vmatprep.subr.bf16.mxu0 0
    %2431 = vmatpush1.bf16.msra.mxu0 %v1437
    %2432 = vmatprep.subr.bf16.mxu0 0
    %2433 = vmatpush1.bf16.msra.mxu0 %v1438
    %2434 = vmatprep.subr.bf16.mxu0 0
    %2435 = vmatpush1.bf16.msra.mxu0 0
    %2436 = vmatprep.subr.bf16.mxu0 0
    %2437 = vmatpush1.bf16.msra.mxu0 0
    %2438 = vmatprep.subr.bf16.mxu0 0
    %2439 = vmatpush1.bf16.msra.mxu0 0
    %2440 = vmatprep.subr.bf16.mxu0 0
    %2441 = vmatpush1.bf16.msra.mxu0 0
    %2442 = vmatprep.subr.bf16.mxu0 0
    %2443 = vmatpush1.bf16.msra.mxu0 0
    %2444 = vmatprep.subr.bf16.mxu0 0
    %2445 = vmatpush1.bf16.msra.mxu0 0
    %2446 = vmatprep.subr.bf16.mxu0 0
    %2447 = vmatpush1.bf16.msra.mxu0 0
    %2448 = vmatprep.subr.bf16.mxu0 0
    %2449 = vmatpush1.bf16.msra.mxu0 0
    %2450 = vmatprep.mubr.bf16.mxu0 0
    %2451 = vmatmul.mubr.bf16.gmra.mrb[0].mxu0 %v1662
    %v2452 = vpop.f32.mrb[0].mxu0
    %v2453 = vadd.f32 %v2292, %v2452
    %v2454 = vpop.f32.mrb[0].mxu0
    %v2455 = vpop.f32.mrb[0].mxu0
    %v2456 = vadd.f32 %v2295, %v2455
    %v2457 = vpop.f32.mrb[0].mxu0
    %2458 = vmatprep.mubr.bf16.mxu0 0
    %2459 = vmatmul.mubr.bf16.gmra.mrb[0].mxu0 %v1663
    %v2460 = vpop.f32.mrb[0].mxu0
    %v2461 = vadd.f32 %v2300, %v2460
    %v2462 = vpop.f32.mrb[0].mxu0
    %v2463 = vpop.f32.mrb[0].mxu0
    %v2464 = vadd.f32 %v2303, %v2463
    %v2465 = vpop.f32.mrb[0].mxu0
    %2466 = vmatprep.mubr.bf16.mxu0 0
    %2467 = vmatmul.mubr.bf16.gmra.mrb[0].mxu0 %v1664
    %v2468 = vpop.f32.mrb[0].mxu0
    %v2469 = vadd.f32 %v2308, %v2468
    %v2470 = vpop.f32.mrb[0].mxu0
    %v2471 = vpop.f32.mrb[0].mxu0
    %v2472 = vadd.f32 %v2311, %v2471
    %v2473 = vpop.f32.mrb[0].mxu0
    %2474 = vmatprep.mubr.bf16.mxu0 0
    %2475 = vmatmul.mubr.bf16.gmra.mrb[0].mxu0 %v1665
    %v2476 = vpop.f32.mrb[0].mxu0
    %v2477 = vadd.f32 %v2316, %v2476
    %v2478 = vpop.f32.mrb[0].mxu0
    %v2479 = vpop.f32.mrb[0].mxu0
    %v2480 = vadd.f32 %v2319, %v2479
    %v2481 = vpop.f32.mrb[0].mxu0
    %2482 = vmatprep.mubr.bf16.mxu0 0
    %2483 = vmatmul.mubr.bf16.gmra.mrb[0].mxu0 %v1666
    %v2484 = vpop.f32.mrb[0].mxu0
    %v2485 = vadd.f32 %v2324, %v2484
    %v2486 = vpop.f32.mrb[0].mxu0
    %v2487 = vpop.f32.mrb[0].mxu0
    %v2488 = vadd.f32 %v2327, %v2487
    %v2489 = vpop.f32.mrb[0].mxu0
    %2490 = vmatprep.mubr.bf16.mxu0 0
    %2491 = vmatmul.mubr.bf16.gmra.mrb[0].mxu0 %v1667
    %v2492 = vpop.f32.mrb[0].mxu0
    %v2493 = vadd.f32 %v2332, %v2492
    %v2494 = vpop.f32.mrb[0].mxu0
    %v2495 = vpop.f32.mrb[0].mxu0
    %v2496 = vadd.f32 %v2335, %v2495
    %v2497 = vpop.f32.mrb[0].mxu0
    %2498 = vmatprep.mubr.bf16.mxu0 0
    %2499 = vmatmul.mubr.bf16.gmra.mrb[0].mxu0 %v1668
    %v2500 = vpop.f32.mrb[0].mxu0
    %v2501 = vadd.f32 %v2340, %v2500
    %v2502 = vpop.f32.mrb[0].mxu0
    %v2503 = vpop.f32.mrb[0].mxu0
    %v2504 = vadd.f32 %v2343, %v2503
    %v2505 = vpop.f32.mrb[0].mxu0
    %2506 = vmatprep.mubr.bf16.mxu0 0
    %2507 = vmatmul.mubr.bf16.gmra.mrb[0].mxu0 %v1669
    %v2508 = vpop.f32.mrb[0].mxu0
    %v2509 = vadd.f32 %v2348, %v2508
    %v2510 = vpop.f32.mrb[0].mxu0
    %v2511 = vpop.f32.mrb[0].mxu0
    %v2512 = vadd.f32 %v2351, %v2511
    %v2513 = vpop.f32.mrb[0].mxu0
    %2514 = vmatprep.mubr.bf16.mxu0 0
    %2515 = vmatmul.mubr.bf16.gmra.mrb[0].mxu0 %v1670
    %v2516 = vpop.f32.mrb[0].mxu0
    %v2517 = vadd.f32 %v2356, %v2516
    %v2518 = vpop.f32.mrb[0].mxu0
    %v2519 = vpop.f32.mrb[0].mxu0
    %v2520 = vadd.f32 %v2359, %v2519
    %v2521 = vpop.f32.mrb[0].mxu0
    %2522 = vmatprep.mubr.bf16.mxu0 0
    %2523 = vmatmul.mubr.bf16.gmra.mrb[0].mxu0 %v1671
    %v2524 = vpop.f32.mrb[0].mxu0
    %v2525 = vadd.f32 %v2364, %v2524
    %v2526 = vpop.f32.mrb[0].mxu0
    %v2527 = vpop.f32.mrb[0].mxu0
    %v2528 = vadd.f32 %v2367, %v2527
    %v2529 = vpop.f32.mrb[0].mxu0
    %2530 = vmatprep.mubr.bf16.mxu0 0
    %2531 = vmatmul.mubr.bf16.gmra.mrb[0].mxu0 %v1672
    %v2532 = vpop.f32.mrb[0].mxu0
    %v2533 = vadd.f32 %v2372, %v2532
    %v2534 = vpop.f32.mrb[0].mxu0
    %v2535 = vpop.f32.mrb[0].mxu0
    %v2536 = vadd.f32 %v2375, %v2535
    %v2537 = vpop.f32.mrb[0].mxu0
    %2538 = vmatprep.mubr.bf16.mxu0 0
    %2539 = vmatmul.mubr.bf16.gmra.mrb[0].mxu0 %v1673
    %v2540 = vpop.f32.mrb[0].mxu0
    %v2541 = vadd.f32 %v2380, %v2540
    %v2542 = vpop.f32.mrb[0].mxu0
    %v2543 = vpop.f32.mrb[0].mxu0
    %v2544 = vadd.f32 %v2383, %v2543
    %v2545 = vpop.f32.mrb[0].mxu0
    %2546 = vmatprep.mubr.bf16.mxu0 0
    %2547 = vmatmul.mubr.bf16.gmra.mrb[0].mxu0 %v1674
    %v2548 = vpop.f32.mrb[0].mxu0
    %v2549 = vadd.f32 %v2388, %v2548
    %v2550 = vpop.f32.mrb[0].mxu0
    %v2551 = vpop.f32.mrb[0].mxu0
    %v2552 = vadd.f32 %v2391, %v2551
    %v2553 = vpop.f32.mrb[0].mxu0
    %2554 = vmatprep.mubr.bf16.mxu0 0
    %2555 = vmatmul.mubr.bf16.gmra.mrb[0].mxu0 %v1675
    %v2556 = vpop.f32.mrb[0].mxu0
    %v2557 = vadd.f32 %v2396, %v2556
    %v2558 = vpop.f32.mrb[0].mxu0
    %v2559 = vpop.f32.mrb[0].mxu0
    %v2560 = vadd.f32 %v2399, %v2559
    %v2561 = vpop.f32.mrb[0].mxu0
    %2562 = vmatprep.mubr.bf16.mxu0 0
    %2563 = vmatmul.mubr.bf16.gmra.mrb[0].mxu0 %v1676
    %v2564 = vpop.f32.mrb[0].mxu0
    %v2565 = vadd.f32 %v2404, %v2564
    %v2566 = vpop.f32.mrb[0].mxu0
    %v2567 = vpop.f32.mrb[0].mxu0
    %v2568 = vadd.f32 %v2407, %v2567
    %v2569 = vpop.f32.mrb[0].mxu0
    %2570 = vmatprep.mubr.bf16.mxu0 0
    %2571 = vmatmul.mubr.bf16.gmra.mrb[0].mxu0 %v1677
    %v2572 = vpop.f32.mrb[0].mxu0
    %v2573 = vadd.f32 %v2412, %v2572
    %v2574 = vpop.f32.mrb[0].mxu0
    %v2575 = vpop.f32.mrb[0].mxu0
    %v2576 = vadd.f32 %v2415, %v2575
    %v2577 = vpop.f32.mrb[0].mxu0
    %2578 = vdwg.mxu0
    %v2579 = vadd.f32 %v2453, %v1612
    %v2580 = vadd.f32 %v2456, %v1612
    %v2581 = vadd.f32 %v2461, %v1612
    %v2582 = vadd.f32 %v2464, %v1612
    %v2583 = vadd.f32 %v2469, %v1612
    %v2584 = vadd.f32 %v2472, %v1612
    %v2585 = vadd.f32 %v2477, %v1612
    %v2586 = vadd.f32 %v2480, %v1612
    %v2587 = vadd.f32 %v2485, %v1612
    %v2588 = vadd.f32 %v2488, %v1612
    %v2589 = vadd.f32 %v2493, %v1612
    %v2590 = vadd.f32 %v2496, %v1612
    %v2591 = vadd.f32 %v2501, %v1612
    %v2592 = vadd.f32 %v2504, %v1612
    %v2593 = vadd.f32 %v2509, %v1612
    %v2594 = vadd.f32 %v2512, %v1612
    %v2595 = vadd.f32 %v2517, %v1612
    %v2596 = vadd.f32 %v2520, %v1612
    %v2597 = vadd.f32 %v2525, %v1612
    %v2598 = vadd.f32 %v2528, %v1612
    %v2599 = vadd.f32 %v2533, %v1612
    %v2600 = vadd.f32 %v2536, %v1612
    %v2601 = vadd.f32 %v2541, %v1612
    %v2602 = vadd.f32 %v2544, %v1612
    %v2603 = vadd.f32 %v2549, %v1612
    %v2604 = vadd.f32 %v2552, %v1612
    %v2605 = vadd.f32 %v2557, %v1612
    %v2606 = vadd.f32 %v2560, %v1612
    %v2607 = vadd.f32 %v2565, %v1612
    %v2608 = vadd.f32 %v2568, %v1612
    %v2609 = vadd.f32 %v2573, %v1612
    %v2610 = vadd.f32 %v2576, %v1612
    %v2611 = vpack.c.bf16 %v2580, %v2579
    %v2612 = vpack.c.bf16 %v2582, %v2581
    %v2613 = vpack.c.bf16 %v2584, %v2583
    %v2614 = vpack.c.bf16 %v2586, %v2585
    %v2615 = vpack.c.bf16 %v2588, %v2587
    %v2616 = vpack.c.bf16 %v2590, %v2589
    %v2617 = vpack.c.bf16 %v2592, %v2591
    %v2618 = vpack.c.bf16 %v2594, %v2593
    %v2619 = vpack.c.bf16 %v2596, %v2595
    %v2620 = vpack.c.bf16 %v2598, %v2597
    %v2621 = vpack.c.bf16 %v2600, %v2599
    %v2622 = vpack.c.bf16 %v2602, %v2601
    %v2623 = vpack.c.bf16 %v2604, %v2603
    %v2624 = vpack.c.bf16 %v2606, %v2605
    %v2625 = vpack.c.bf16 %v2608, %v2607
    %v2626 = vpack.c.bf16 %v2610, %v2609
    %v2627 = vtanh.bf16.pop %v2611
    %v2628 = vtanh.bf16.pop %v2612
    %v2629 = vtanh.bf16.pop %v2613
    %v2630 = vtanh.bf16.pop %v2614
    %v2631 = vtanh.bf16.pop %v2615
    %v2632 = vtanh.bf16.pop %v2616
    %v2633 = vtanh.bf16.pop %v2617
    %v2634 = vtanh.bf16.pop %v2618
    %v2635 = vtanh.bf16.pop %v2619
    %v2636 = vtanh.bf16.pop %v2620
    %v2637 = vtanh.bf16.pop %v2621
    %v2638 = vtanh.bf16.pop %v2622
    %v2639 = vtanh.bf16.pop %v2623
    %v2640 = vtanh.bf16.pop %v2624
    %v2641 = vtanh.bf16.pop %v2625
    %v2642 = vtanh.bf16.pop %v2626
    %2643 = vmatprep.subr.bf16.mxu0 0
    %2644 = vmatpush1.bf16.msra.mxu0 %v2627
    %2645 = vmatprep.subr.bf16.mxu0 0
    %2646 = vmatpush1.bf16.msra.mxu0 %v2628
    %2647 = vmatprep.subr.bf16.mxu0 0
    %2648 = vmatpush1.bf16.msra.mxu0 %v2629
    %2649 = vmatprep.subr.bf16.mxu0 0
    %2650 = vmatpush1.bf16.msra.mxu0 %v2630
    %2651 = vmatprep.subr.bf16.mxu0 0
    %2652 = vmatpush1.bf16.msra.mxu0 %v2631
    %2653 = vmatprep.subr.bf16.mxu0 0
    %2654 = vmatpush1.bf16.msra.mxu0 %v2632
    %2655 = vmatprep.subr.bf16.mxu0 0
    %2656 = vmatpush1.bf16.msra.mxu0 %v2633
    %2657 = vmatprep.subr.bf16.mxu0 0
    %2658 = vmatpush1.bf16.msra.mxu0 %v2634
    %2659 = vmatprep.subr.bf16.mxu0 0
    %2660 = vmatpush1.bf16.msra.mxu0 %v2635
    %2661 = vmatprep.subr.bf16.mxu0 0
    %2662 = vmatpush1.bf16.msra.mxu0 %v2636
    %2663 = vmatprep.subr.bf16.mxu0 0
    %2664 = vmatpush1.bf16.msra.mxu0 %v2637
    %2665 = vmatprep.subr.bf16.mxu0 0
    %2666 = vmatpush1.bf16.msra.mxu0 %v2638
    %2667 = vmatprep.subr.bf16.mxu0 0
    %2668 = vmatpush1.bf16.msra.mxu0 %v2639
    %2669 = vmatprep.subr.bf16.mxu0 0
    %2670 = vmatpush1.bf16.msra.mxu0 %v2640
    %2671 = vmatprep.subr.bf16.mxu0 0
    %2672 = vmatpush1.bf16.msra.mxu0 %v2641
    %2673 = vmatprep.subr.bf16.mxu0 0
    %2674 = vmatpush1.bf16.msra.mxu0 %v2642
    %2675 = vmatprep.mubr.bf16.mxu0 %v344
    %2676 = vmatmul.mubr.bf16.gmra.mrb[0].mxu0 %v343
    %v2677 = vpop.f32.mrb[0].mxu0
    %v2678 = vadd.f32 0.0, %v2677
    %v2679 = vpop.f32.mrb[0].mxu0
    %v2680 = vpop.f32.mrb[0].mxu0
    %v2681 = vadd.f32 0.0, %v2680
    %v2682 = vpop.f32.mrb[0].mxu0
    %2683 = vmatprep.mubr.bf16.mxu0 %v346
    %2684 = vmatmul.mubr.bf16.gmra.mrb[0].mxu0 %v345
    %v2685 = vpop.f32.mrb[0].mxu0
    %v2686 = vadd.f32 0.0, %v2685
    %v2687 = vpop.f32.mrb[0].mxu0
    %v2688 = vpop.f32.mrb[0].mxu0
    %v2689 = vadd.f32 0.0, %v2688
    %v2690 = vpop.f32.mrb[0].mxu0
    %2691 = vmatprep.mubr.bf16.mxu0 %v348
    %2692 = vmatmul.mubr.bf16.gmra.mrb[0].mxu0 %v347
    %v2693 = vpop.f32.mrb[0].mxu0
    %v2694 = vadd.f32 0.0, %v2693
    %v2695 = vpop.f32.mrb[0].mxu0
    %v2696 = vpop.f32.mrb[0].mxu0
    %v2697 = vadd.f32 0.0, %v2696
    %v2698 = vpop.f32.mrb[0].mxu0
    %2699 = vmatprep.mubr.bf16.mxu0 %v350
    %2700 = vmatmul.mubr.bf16.gmra.mrb[0].mxu0 %v349
    %v2701 = vpop.f32.mrb[0].mxu0
    %v2702 = vadd.f32 0.0, %v2701
    %v2703 = vpop.f32.mrb[0].mxu0
    %v2704 = vpop.f32.mrb[0].mxu0
    %v2705 = vadd.f32 0.0, %v2704
    %v2706 = vpop.f32.mrb[0].mxu0
    %2707 = vmatprep.mubr.bf16.mxu0 %v352
    %2708 = vmatmul.mubr.bf16.gmra.mrb[0].mxu0 %v351
    %v2709 = vpop.f32.mrb[0].mxu0
    %v2710 = vadd.f32 0.0, %v2709
    %v2711 = vpop.f32.mrb[0].mxu0
    %v2712 = vpop.f32.mrb[0].mxu0
    %v2713 = vadd.f32 0.0, %v2712
    %v2714 = vpop.f32.mrb[0].mxu0
    %2715 = vmatprep.mubr.bf16.mxu0 %v354
    %2716 = vmatmul.mubr.bf16.gmra.mrb[0].mxu0 %v353
    %v2717 = vpop.f32.mrb[0].mxu0
    %v2718 = vadd.f32 0.0, %v2717
    %v2719 = vpop.f32.mrb[0].mxu0
    %v2720 = vpop.f32.mrb[0].mxu0
    %v2721 = vadd.f32 0.0, %v2720
    %v2722 = vpop.f32.mrb[0].mxu0
    %2723 = vmatprep.mubr.bf16.mxu0 %v356
    %2724 = vmatmul.mubr.bf16.gmra.mrb[0].mxu0 %v355
    %v2725 = vpop.f32.mrb[0].mxu0
    %v2726 = vadd.f32 0.0, %v2725
    %v2727 = vpop.f32.mrb[0].mxu0
    %v2728 = vpop.f32.mrb[0].mxu0
    %v2729 = vadd.f32 0.0, %v2728
    %v2730 = vpop.f32.mrb[0].mxu0
    %2731 = vmatprep.mubr.bf16.mxu0 %v358
    %2732 = vmatmul.mubr.bf16.gmra.mrb[0].mxu0 %v357
    %v2733 = vpop.f32.mrb[0].mxu0
    %v2734 = vadd.f32 0.0, %v2733
    %v2735 = vpop.f32.mrb[0].mxu0
    %v2736 = vpop.f32.mrb[0].mxu0
    %v2737 = vadd.f32 0.0, %v2736
    %v2738 = vpop.f32.mrb[0].mxu0
    %2739 = vmatprep.mubr.bf16.mxu0 %v360
    %2740 = vmatmul.mubr.bf16.gmra.mrb[0].mxu0 %v359
    %v2741 = vpop.f32.mrb[0].mxu0
    %v2742 = vadd.f32 0.0, %v2741
    %v2743 = vpop.f32.mrb[0].mxu0
    %v2744 = vpop.f32.mrb[0].mxu0
    %v2745 = vadd.f32 0.0, %v2744
    %v2746 = vpop.f32.mrb[0].mxu0
    %2747 = vmatprep.mubr.bf16.mxu0 %v362
    %2748 = vmatmul.mubr.bf16.gmra.mrb[0].mxu0 %v361
    %v2749 = vpop.f32.mrb[0].mxu0
    %v2750 = vadd.f32 0.0, %v2749
    %v2751 = vpop.f32.mrb[0].mxu0
    %v2752 = vpop.f32.mrb[0].mxu0
    %v2753 = vadd.f32 0.0, %v2752
    %v2754 = vpop.f32.mrb[0].mxu0
    %2755 = vmatprep.mubr.bf16.mxu0 %v364
    %2756 = vmatmul.mubr.bf16.gmra.mrb[0].mxu0 %v363
    %v2757 = vpop.f32.mrb[0].mxu0
    %v2758 = vadd.f32 0.0, %v2757
    %v2759 = vpop.f32.mrb[0].mxu0
    %v2760 = vpop.f32.mrb[0].mxu0
    %v2761 = vadd.f32 0.0, %v2760
    %v2762 = vpop.f32.mrb[0].mxu0
    %2763 = vmatprep.mubr.bf16.mxu0 %v366
    %2764 = vmatmul.mubr.bf16.gmra.mrb[0].mxu0 %v365
    %v2765 = vpop.f32.mrb[0].mxu0
    %v2766 = vadd.f32 0.0, %v2765
    %v2767 = vpop.f32.mrb[0].mxu0
    %v2768 = vpop.f32.mrb[0].mxu0
    %v2769 = vadd.f32 0.0, %v2768
    %v2770 = vpop.f32.mrb[0].mxu0
    %2771 = vmatprep.mubr.bf16.mxu0 %v368
    %2772 = vmatmul.mubr.bf16.gmra.mrb[0].mxu0 %v367
    %v2773 = vpop.f32.mrb[0].mxu0
    %v2774 = vadd.f32 0.0, %v2773
    %v2775 = vpop.f32.mrb[0].mxu0
    %v2776 = vpop.f32.mrb[0].mxu0
    %v2777 = vadd.f32 0.0, %v2776
    %v2778 = vpop.f32.mrb[0].mxu0
    %2779 = vmatprep.mubr.bf16.mxu0 %v370
    %2780 = vmatmul.mubr.bf16.gmra.mrb[0].mxu0 %v369
    %v2781 = vpop.f32.mrb[0].mxu0
    %v2782 = vadd.f32 0.0, %v2781
    %v2783 = vpop.f32.mrb[0].mxu0
    %v2784 = vpop.f32.mrb[0].mxu0
    %v2785 = vadd.f32 0.0, %v2784
    %v2786 = vpop.f32.mrb[0].mxu0
    %2787 = vmatprep.mubr.bf16.mxu0 %v372
    %2788 = vmatmul.mubr.bf16.gmra.mrb[0].mxu0 %v371
    %v2789 = vpop.f32.mrb[0].mxu0
    %v2790 = vadd.f32 0.0, %v2789
    %v2791 = vpop.f32.mrb[0].mxu0
    %v2792 = vpop.f32.mrb[0].mxu0
    %v2793 = vadd.f32 0.0, %v2792
    %v2794 = vpop.f32.mrb[0].mxu0
    %2795 = vmatprep.mubr.bf16.mxu0 %v374
    %2796 = vmatmul.mubr.bf16.gmra.mrb[0].mxu0 %v373
    %v2797 = vpop.f32.mrb[0].mxu0
    %v2798 = vadd.f32 0.0, %v2797
    %v2799 = vpop.f32.mrb[0].mxu0
    %v2800 = vpop.f32.mrb[0].mxu0
    %v2801 = vadd.f32 0.0, %v2800
    %v2802 = vpop.f32.mrb[0].mxu0
    %2803 = vdwg.mxu0
    %v2804 = vpack.c.bf16 %v2681, %v2678
    %v2805 = vpack.c.bf16 %v2689, %v2686
    %v2806 = vpack.c.bf16 %v2697, %v2694
    %v2807 = vpack.c.bf16 %v2705, %v2702
    %v2808 = vpack.c.bf16 %v2713, %v2710
    %v2809 = vpack.c.bf16 %v2721, %v2718
    %v2810 = vpack.c.bf16 %v2729, %v2726
    %v2811 = vpack.c.bf16 %v2737, %v2734
    %v2812 = vpack.c.bf16 %v2745, %v2742
    %v2813 = vpack.c.bf16 %v2753, %v2750
    %v2814 = vpack.c.bf16 %v2761, %v2758
    %v2815 = vpack.c.bf16 %v2769, %v2766
    %v2816 = vpack.c.bf16 %v2777, %v2774
    %v2817 = vpack.c.bf16 %v2785, %v2782
    %v2818 = vpack.c.bf16 %v2793, %v2790
    %v2819 = vpack.c.bf16 %v2801, %v2798
    %2820 = vmatprep.subr.bf16.mxu0 0
    %2821 = vmatpush1.bf16.msra.mxu0 %v718
    %2822 = vmatprep.subr.bf16.mxu0 0
    %2823 = vmatpush1.bf16.msra.mxu0 %v719
    %2824 = vmatprep.subr.bf16.mxu0 0
    %2825 = vmatpush1.bf16.msra.mxu0 %v720
    %2826 = vmatprep.subr.bf16.mxu0 0
    %2827 = vmatpush1.bf16.msra.mxu0 %v721
    %2828 = vmatprep.subr.bf16.mxu0 0
    %2829 = vmatpush1.bf16.msra.mxu0 %v722
    %2830 = vmatprep.subr.bf16.mxu0 0
    %2831 = vmatpush1.bf16.msra.mxu0 %v723
    %2832 = vmatprep.subr.bf16.mxu0 0
    %2833 = vmatpush1.bf16.msra.mxu0 %v724
    %2834 = vmatprep.subr.bf16.mxu0 0
    %2835 = vmatpush1.bf16.msra.mxu0 %v725
    %2836 = vmatprep.subr.bf16.mxu0 0
    %2837 = vmatpush1.bf16.msra.mxu0 0
    %2838 = vmatprep.subr.bf16.mxu0 0
    %2839 = vmatpush1.bf16.msra.mxu0 0
    %2840 = vmatprep.subr.bf16.mxu0 0
    %2841 = vmatpush1.bf16.msra.mxu0 0
    %2842 = vmatprep.subr.bf16.mxu0 0
    %2843 = vmatpush1.bf16.msra.mxu0 0
    %2844 = vmatprep.subr.bf16.mxu0 0
    %2845 = vmatpush1.bf16.msra.mxu0 0
    %2846 = vmatprep.subr.bf16.mxu0 0
    %2847 = vmatpush1.bf16.msra.mxu0 0
    %2848 = vmatprep.subr.bf16.mxu0 0
    %2849 = vmatpush1.bf16.msra.mxu0 0
    %2850 = vmatprep.subr.bf16.mxu0 0
    %2851 = vmatpush1.bf16.msra.mxu0 0
    %2852 = vmatprep.mubr.bf16.mxu0 0
    %2853 = vmatmul.mubr.bf16.gmra.mrb[0].mxu0 %v2804
    %v2854 = vpop.f32.mrb[0].mxu0
    %v2855 = vadd.f32 %v684, %v2854
    %v2856 = vpop.f32.mrb[0].mxu0
    %v2857 = vpop.f32.mrb[0].mxu0
    %v2858 = vadd.f32 %v684, %v2857
    %v2859 = vpop.f32.mrb[0].mxu0
    %2860 = vmatprep.mubr.bf16.mxu0 0
    %2861 = vmatmul.mubr.bf16.gmra.mrb[0].mxu0 %v2805
    %v2862 = vpop.f32.mrb[0].mxu0
    %v2863 = vadd.f32 %v684, %v2862
    %v2864 = vpop.f32.mrb[0].mxu0
    %v2865 = vpop.f32.mrb[0].mxu0
    %v2866 = vadd.f32 %v684, %v2865
    %v2867 = vpop.f32.mrb[0].mxu0
    %2868 = vmatprep.mubr.bf16.mxu0 0
    %2869 = vmatmul.mubr.bf16.gmra.mrb[0].mxu0 %v2806
    %v2870 = vpop.f32.mrb[0].mxu0
    %v2871 = vadd.f32 %v684, %v2870
    %v2872 = vpop.f32.mrb[0].mxu0
    %v2873 = vpop.f32.mrb[0].mxu0
    %v2874 = vadd.f32 %v684, %v2873
    %v2875 = vpop.f32.mrb[0].mxu0
    %2876 = vmatprep.mubr.bf16.mxu0 0
    %2877 = vmatmul.mubr.bf16.gmra.mrb[0].mxu0 %v2807
    %v2878 = vpop.f32.mrb[0].mxu0
    %v2879 = vadd.f32 %v684, %v2878
    %v2880 = vpop.f32.mrb[0].mxu0
    %v2881 = vpop.f32.mrb[0].mxu0
    %v2882 = vadd.f32 %v684, %v2881
    %v2883 = vpop.f32.mrb[0].mxu0
    %2884 = vmatprep.mubr.bf16.mxu0 0
    %2885 = vmatmul.mubr.bf16.gmra.mrb[0].mxu0 %v2808
    %v2886 = vpop.f32.mrb[0].mxu0
    %v2887 = vadd.f32 %v684, %v2886
    %v2888 = vpop.f32.mrb[0].mxu0
    %v2889 = vpop.f32.mrb[0].mxu0
    %v2890 = vadd.f32 %v684, %v2889
    %v2891 = vpop.f32.mrb[0].mxu0
    %2892 = vmatprep.mubr.bf16.mxu0 0
    %2893 = vmatmul.mubr.bf16.gmra.mrb[0].mxu0 %v2809
    %v2894 = vpop.f32.mrb[0].mxu0
    %v2895 = vadd.f32 %v684, %v2894
    %v2896 = vpop.f32.mrb[0].mxu0
    %v2897 = vpop.f32.mrb[0].mxu0
    %v2898 = vadd.f32 %v684, %v2897
    %v2899 = vpop.f32.mrb[0].mxu0
    %2900 = vmatprep.mubr.bf16.mxu0 0
    %2901 = vmatmul.mubr.bf16.gmra.mrb[0].mxu0 %v2810
    %v2902 = vpop.f32.mrb[0].mxu0
    %v2903 = vadd.f32 %v684, %v2902
    %v2904 = vpop.f32.mrb[0].mxu0
    %v2905 = vpop.f32.mrb[0].mxu0
    %v2906 = vadd.f32 %v684, %v2905
    %v2907 = vpop.f32.mrb[0].mxu0
    %2908 = vmatprep.mubr.bf16.mxu0 0
    %2909 = vmatmul.mubr.bf16.gmra.mrb[0].mxu0 %v2811
    %v2910 = vpop.f32.mrb[0].mxu0
    %v2911 = vadd.f32 %v684, %v2910
    %v2912 = vpop.f32.mrb[0].mxu0
    %v2913 = vpop.f32.mrb[0].mxu0
    %v2914 = vadd.f32 %v684, %v2913
    %v2915 = vpop.f32.mrb[0].mxu0
    %2916 = vmatprep.mubr.bf16.mxu0 0
    %2917 = vmatmul.mubr.bf16.gmra.mrb[0].mxu0 %v2812
    %v2918 = vpop.f32.mrb[0].mxu0
    %v2919 = vadd.f32 %v684, %v2918
    %v2920 = vpop.f32.mrb[0].mxu0
    %v2921 = vpop.f32.mrb[0].mxu0
    %v2922 = vadd.f32 %v684, %v2921
    %v2923 = vpop.f32.mrb[0].mxu0
    %2924 = vmatprep.mubr.bf16.mxu0 0
    %2925 = vmatmul.mubr.bf16.gmra.mrb[0].mxu0 %v2813
    %v2926 = vpop.f32.mrb[0].mxu0
    %v2927 = vadd.f32 %v684, %v2926
    %v2928 = vpop.f32.mrb[0].mxu0
    %v2929 = vpop.f32.mrb[0].mxu0
    %v2930 = vadd.f32 %v684, %v2929
    %v2931 = vpop.f32.mrb[0].mxu0
    %2932 = vmatprep.mubr.bf16.mxu0 0
    %2933 = vmatmul.mubr.bf16.gmra.mrb[0].mxu0 %v2814
    %v2934 = vpop.f32.mrb[0].mxu0
    %v2935 = vadd.f32 %v684, %v2934
    %v2936 = vpop.f32.mrb[0].mxu0
    %v2937 = vpop.f32.mrb[0].mxu0
    %v2938 = vadd.f32 %v684, %v2937
    %v2939 = vpop.f32.mrb[0].mxu0
    %2940 = vmatprep.mubr.bf16.mxu0 0
    %2941 = vmatmul.mubr.bf16.gmra.mrb[0].mxu0 %v2815
    %v2942 = vpop.f32.mrb[0].mxu0
    %v2943 = vadd.f32 %v684, %v2942
    %v2944 = vpop.f32.mrb[0].mxu0
    %v2945 = vpop.f32.mrb[0].mxu0
    %v2946 = vadd.f32 %v684, %v2945
    %v2947 = vpop.f32.mrb[0].mxu0
    %2948 = vmatprep.mubr.bf16.mxu0 0
    %2949 = vmatmul.mubr.bf16.gmra.mrb[0].mxu0 %v2816
    %v2950 = vpop.f32.mrb[0].mxu0
    %v2951 = vadd.f32 %v684, %v2950
    %v2952 = vpop.f32.mrb[0].mxu0
    %v2953 = vpop.f32.mrb[0].mxu0
    %v2954 = vadd.f32 %v684, %v2953
    %v2955 = vpop.f32.mrb[0].mxu0
    %2956 = vmatprep.mubr.bf16.mxu0 0
    %2957 = vmatmul.mubr.bf16.gmra.mrb[0].mxu0 %v2817
    %v2958 = vpop.f32.mrb[0].mxu0
    %v2959 = vadd.f32 %v684, %v2958
    %v2960 = vpop.f32.mrb[0].mxu0
    %v2961 = vpop.f32.mrb[0].mxu0
    %v2962 = vadd.f32 %v684, %v2961
    %v2963 = vpop.f32.mrb[0].mxu0
    %2964 = vmatprep.mubr.bf16.mxu0 0
    %2965 = vmatmul.mubr.bf16.gmra.mrb[0].mxu0 %v2818
    %v2966 = vpop.f32.mrb[0].mxu0
    %v2967 = vadd.f32 %v684, %v2966
    %v2968 = vpop.f32.mrb[0].mxu0
    %v2969 = vpop.f32.mrb[0].mxu0
    %v2970 = vadd.f32 %v684, %v2969
    %v2971 = vpop.f32.mrb[0].mxu0
    %2972 = vmatprep.mubr.bf16.mxu0 0
    %2973 = vmatmul.mubr.bf16.gmra.mrb[0].mxu0 %v2819
    %v2974 = vpop.f32.mrb[0].mxu0
    %v2975 = vadd.f32 %v684, %v2974
    %v2976 = vpop.f32.mrb[0].mxu0
    %v2977 = vpop.f32.mrb[0].mxu0
    %v2978 = vadd.f32 %v684, %v2977
    %v2979 = vpop.f32.mrb[0].mxu0
    %2980 = vdwg.mxu0
    %v2981 = vmax.f32 %v2855, 0.0
    %v2982 = vmax.f32 %v2858, 0.0
    %v2983 = vmax.f32 %v2863, 0.0
    %v2984 = vmax.f32 %v2866, 0.0
    %v2985 = vmax.f32 %v2871, 0.0
    %v2986 = vmax.f32 %v2874, 0.0
    %v2987 = vmax.f32 %v2879, 0.0
    %v2988 = vmax.f32 %v2882, 0.0
    %v2989 = vmax.f32 %v2887, 0.0
    %v2990 = vmax.f32 %v2890, 0.0
    %v2991 = vmax.f32 %v2895, 0.0
    %v2992 = vmax.f32 %v2898, 0.0
    %v2993 = vmax.f32 %v2903, 0.0
    %v2994 = vmax.f32 %v2906, 0.0
    %v2995 = vmax.f32 %v2911, 0.0
    %v2996 = vmax.f32 %v2914, 0.0
    %v2997 = vmax.f32 %v2919, 0.0
    %v2998 = vmax.f32 %v2922, 0.0
    %v2999 = vmax.f32 %v2927, 0.0
    %v3000 = vmax.f32 %v2930, 0.0
    %v3001 = vmax.f32 %v2935, 0.0
    %v3002 = vmax.f32 %v2938, 0.0
    %v3003 = vmax.f32 %v2943, 0.0
    %v3004 = vmax.f32 %v2946, 0.0
    %v3005 = vmax.f32 %v2951, 0.0
    %v3006 = vmax.f32 %v2954, 0.0
    %v3007 = vmax.f32 %v2959, 0.0
    %v3008 = vmax.f32 %v2962, 0.0
    %v3009 = vmax.f32 %v2967, 0.0
    %v3010 = vmax.f32 %v2970, 0.0
    %v3011 = vmax.f32 %v2975, 0.0
    %v3012 = vmax.f32 %v2978, 0.0
    %v3013 = vpack.c.bf16 %v2982, %v2981
    %v3014 = vpack.c.bf16 %v2984, %v2983
    %v3015 = vpack.c.bf16 %v2986, %v2985
    %v3016 = vpack.c.bf16 %v2988, %v2987
    %v3017 = vpack.c.bf16 %v2990, %v2989
    %v3018 = vpack.c.bf16 %v2992, %v2991
    %v3019 = vpack.c.bf16 %v2994, %v2993
    %v3020 = vpack.c.bf16 %v2996, %v2995
    %v3021 = vpack.c.bf16 %v2998, %v2997
    %v3022 = vpack.c.bf16 %v3000, %v2999
    %v3023 = vpack.c.bf16 %v3002, %v3001
    %v3024 = vpack.c.bf16 %v3004, %v3003
    %v3025 = vpack.c.bf16 %v3006, %v3005
    %v3026 = vpack.c.bf16 %v3008, %v3007
    %v3027 = vpack.c.bf16 %v3010, %v3009
    %v3028 = vpack.c.bf16 %v3012, %v3011
    %3029 = vmatprep.subr.bf16.mxu0 0
    %3030 = vmatpush1.bf16.msra.mxu0 %v981
    %3031 = vmatprep.subr.bf16.mxu0 0
    %3032 = vmatpush1.bf16.msra.mxu0 %v982
    %3033 = vmatprep.subr.bf16.mxu0 0
    %3034 = vmatpush1.bf16.msra.mxu0 %v983
    %3035 = vmatprep.subr.bf16.mxu0 0
    %3036 = vmatpush1.bf16.msra.mxu0 %v984
    %3037 = vmatprep.subr.bf16.mxu0 0
    %3038 = vmatpush1.bf16.msra.mxu0 %v985
    %3039 = vmatprep.subr.bf16.mxu0 0
    %3040 = vmatpush1.bf16.msra.mxu0 %v986
    %3041 = vmatprep.subr.bf16.mxu0 0
    %3042 = vmatpush1.bf16.msra.mxu0 %v987
    %3043 = vmatprep.subr.bf16.mxu0 0
    %3044 = vmatpush1.bf16.msra.mxu0 %v988
    %3045 = vmatprep.subr.bf16.mxu0 0
    %3046 = vmatpush1.bf16.msra.mxu0 0
    %3047 = vmatprep.subr.bf16.mxu0 0
    %3048 = vmatpush1.bf16.msra.mxu0 0
    %3049 = vmatprep.subr.bf16.mxu0 0
    %3050 = vmatpush1.bf16.msra.mxu0 0
    %3051 = vmatprep.subr.bf16.mxu0 0
    %3052 = vmatpush1.bf16.msra.mxu0 0
    %3053 = vmatprep.subr.bf16.mxu0 0
    %3054 = vmatpush1.bf16.msra.mxu0 0
    %3055 = vmatprep.subr.bf16.mxu0 0
    %3056 = vmatpush1.bf16.msra.mxu0 0
    %3057 = vmatprep.subr.bf16.mxu0 0
    %3058 = vmatpush1.bf16.msra.mxu0 0
    %3059 = vmatprep.subr.bf16.mxu0 0
    %3060 = vmatpush1.bf16.msra.mxu0 0
    %3061 = vmatprep.mubr.bf16.mxu0 0
    %3062 = vmatmul.mubr.bf16.gmra.mrb[0].mxu0 %v3013
    %v3063 = vpop.f32.mrb[0].mxu0
    %v3064 = vadd.f32 %v947, %v3063
    %v3065 = vpop.f32.mrb[0].mxu0
    %v3066 = vpop.f32.mrb[0].mxu0
    %v3067 = vadd.f32 %v947, %v3066
    %v3068 = vpop.f32.mrb[0].mxu0
    %3069 = vmatprep.mubr.bf16.mxu0 0
    %3070 = vmatmul.mubr.bf16.gmra.mrb[0].mxu0 %v3014
    %v3071 = vpop.f32.mrb[0].mxu0
    %v3072 = vadd.f32 %v947, %v3071
    %v3073 = vpop.f32.mrb[0].mxu0
    %v3074 = vpop.f32.mrb[0].mxu0
    %v3075 = vadd.f32 %v947, %v3074
    %v3076 = vpop.f32.mrb[0].mxu0
    %3077 = vmatprep.mubr.bf16.mxu0 0
    %3078 = vmatmul.mubr.bf16.gmra.mrb[0].mxu0 %v3015
    %v3079 = vpop.f32.mrb[0].mxu0
    %v3080 = vadd.f32 %v947, %v3079
    %v3081 = vpop.f32.mrb[0].mxu0
    %v3082 = vpop.f32.mrb[0].mxu0
    %v3083 = vadd.f32 %v947, %v3082
    %v3084 = vpop.f32.mrb[0].mxu0
    %3085 = vmatprep.mubr.bf16.mxu0 0
    %3086 = vmatmul.mubr.bf16.gmra.mrb[0].mxu0 %v3016
    %v3087 = vpop.f32.mrb[0].mxu0
    %v3088 = vadd.f32 %v947, %v3087
    %v3089 = vpop.f32.mrb[0].mxu0
    %v3090 = vpop.f32.mrb[0].mxu0
    %v3091 = vadd.f32 %v947, %v3090
    %v3092 = vpop.f32.mrb[0].mxu0
    %3093 = vmatprep.mubr.bf16.mxu0 0
    %3094 = vmatmul.mubr.bf16.gmra.mrb[0].mxu0 %v3017
    %v3095 = vpop.f32.mrb[0].mxu0
    %v3096 = vadd.f32 %v947, %v3095
    %v3097 = vpop.f32.mrb[0].mxu0
    %v3098 = vpop.f32.mrb[0].mxu0
    %v3099 = vadd.f32 %v947, %v3098
    %v3100 = vpop.f32.mrb[0].mxu0
    %3101 = vmatprep.mubr.bf16.mxu0 0
    %3102 = vmatmul.mubr.bf16.gmra.mrb[0].mxu0 %v3018
    %v3103 = vpop.f32.mrb[0].mxu0
    %v3104 = vadd.f32 %v947, %v3103
    %v3105 = vpop.f32.mrb[0].mxu0
    %v3106 = vpop.f32.mrb[0].mxu0
    %v3107 = vadd.f32 %v947, %v3106
    %v3108 = vpop.f32.mrb[0].mxu0
    %3109 = vmatprep.mubr.bf16.mxu0 0
    %3110 = vmatmul.mubr.bf16.gmra.mrb[0].mxu0 %v3019
    %v3111 = vpop.f32.mrb[0].mxu0
    %v3112 = vadd.f32 %v947, %v3111
    %v3113 = vpop.f32.mrb[0].mxu0
    %v3114 = vpop.f32.mrb[0].mxu0
    %v3115 = vadd.f32 %v947, %v3114
    %v3116 = vpop.f32.mrb[0].mxu0
    %3117 = vmatprep.mubr.bf16.mxu0 0
    %3118 = vmatmul.mubr.bf16.gmra.mrb[0].mxu0 %v3020
    %v3119 = vpop.f32.mrb[0].mxu0
    %v3120 = vadd.f32 %v947, %v3119
    %v3121 = vpop.f32.mrb[0].mxu0
    %v3122 = vpop.f32.mrb[0].mxu0
    %v3123 = vadd.f32 %v947, %v3122
    %v3124 = vpop.f32.mrb[0].mxu0
    %3125 = vmatprep.mubr.bf16.mxu0 0
    %3126 = vmatmul.mubr.bf16.gmra.mrb[0].mxu0 %v3021
    %v3127 = vpop.f32.mrb[0].mxu0
    %v3128 = vadd.f32 %v947, %v3127
    %v3129 = vpop.f32.mrb[0].mxu0
    %v3130 = vpop.f32.mrb[0].mxu0
    %v3131 = vadd.f32 %v947, %v3130
    %v3132 = vpop.f32.mrb[0].mxu0
    %3133 = vmatprep.mubr.bf16.mxu0 0
    %3134 = vmatmul.mubr.bf16.gmra.mrb[0].mxu0 %v3022
    %v3135 = vpop.f32.mrb[0].mxu0
    %v3136 = vadd.f32 %v947, %v3135
    %v3137 = vpop.f32.mrb[0].mxu0
    %v3138 = vpop.f32.mrb[0].mxu0
    %v3139 = vadd.f32 %v947, %v3138
    %v3140 = vpop.f32.mrb[0].mxu0
    %3141 = vmatprep.mubr.bf16.mxu0 0
    %3142 = vmatmul.mubr.bf16.gmra.mrb[0].mxu0 %v3023
    %v3143 = vpop.f32.mrb[0].mxu0
    %v3144 = vadd.f32 %v947, %v3143
    %v3145 = vpop.f32.mrb[0].mxu0
    %v3146 = vpop.f32.mrb[0].mxu0
    %v3147 = vadd.f32 %v947, %v3146
    %v3148 = vpop.f32.mrb[0].mxu0
    %3149 = vmatprep.mubr.bf16.mxu0 0
    %3150 = vmatmul.mubr.bf16.gmra.mrb[0].mxu0 %v3024
    %v3151 = vpop.f32.mrb[0].mxu0
    %v3152 = vadd.f32 %v947, %v3151
    %v3153 = vpop.f32.mrb[0].mxu0
    %v3154 = vpop.f32.mrb[0].mxu0
    %v3155 = vadd.f32 %v947, %v3154
    %v3156 = vpop.f32.mrb[0].mxu0
    %3157 = vmatprep.mubr.bf16.mxu0 0
    %3158 = vmatmul.mubr.bf16.gmra.mrb[0].mxu0 %v3025
    %v3159 = vpop.f32.mrb[0].mxu0
    %v3160 = vadd.f32 %v947, %v3159
    %v3161 = vpop.f32.mrb[0].mxu0
    %v3162 = vpop.f32.mrb[0].mxu0
    %v3163 = vadd.f32 %v947, %v3162
    %v3164 = vpop.f32.mrb[0].mxu0
    %3165 = vmatprep.mubr.bf16.mxu0 0
    %3166 = vmatmul.mubr.bf16.gmra.mrb[0].mxu0 %v3026
    %v3167 = vpop.f32.mrb[0].mxu0
    %v3168 = vadd.f32 %v947, %v3167
    %v3169 = vpop.f32.mrb[0].mxu0
    %v3170 = vpop.f32.mrb[0].mxu0
    %v3171 = vadd.f32 %v947, %v3170
    %v3172 = vpop.f32.mrb[0].mxu0
    %3173 = vmatprep.mubr.bf16.mxu0 0
    %3174 = vmatmul.mubr.bf16.gmra.mrb[0].mxu0 %v3027
    %v3175 = vpop.f32.mrb[0].mxu0
    %v3176 = vadd.f32 %v947, %v3175
    %v3177 = vpop.f32.mrb[0].mxu0
    %v3178 = vpop.f32.mrb[0].mxu0
    %v3179 = vadd.f32 %v947, %v3178
    %v3180 = vpop.f32.mrb[0].mxu0
    %3181 = vmatprep.mubr.bf16.mxu0 0
    %3182 = vmatmul.mubr.bf16.gmra.mrb[0].mxu0 %v3028
    %v3183 = vpop.f32.mrb[0].mxu0
    %v3184 = vadd.f32 %v947, %v3183
    %v3185 = vpop.f32.mrb[0].mxu0
    %v3186 = vpop.f32.mrb[0].mxu0
    %v3187 = vadd.f32 %v947, %v3186
    %v3188 = vpop.f32.mrb[0].mxu0
    %3189 = vdwg.mxu0
    %v3190 = vpack.c.bf16 %v3067, %v3064
    %v3191 = vpack.c.bf16 %v3075, %v3072
    %v3192 = vpack.c.bf16 %v3083, %v3080
    %v3193 = vpack.c.bf16 %v3091, %v3088
    %v3194 = vpack.c.bf16 %v3099, %v3096
    %v3195 = vpack.c.bf16 %v3107, %v3104
    %v3196 = vpack.c.bf16 %v3115, %v3112
    %v3197 = vpack.c.bf16 %v3123, %v3120
    %v3198 = vpack.c.bf16 %v3131, %v3128
    %v3199 = vpack.c.bf16 %v3139, %v3136
    %v3200 = vpack.c.bf16 %v3147, %v3144
    %v3201 = vpack.c.bf16 %v3155, %v3152
    %v3202 = vpack.c.bf16 %v3163, %v3160
    %v3203 = vpack.c.bf16 %v3171, %v3168
    %v3204 = vpack.c.bf16 %v3179, %v3176
    %v3205 = vpack.c.bf16 %v3187, %v3184
    %v3206 = vtanh.bf16.pop %v3190
    %v3207 = vtanh.bf16.pop %v3191
    %v3208 = vtanh.bf16.pop %v3192
    %v3209 = vtanh.bf16.pop %v3193
    %v3210 = vtanh.bf16.pop %v3194
    %v3211 = vtanh.bf16.pop %v3195
    %v3212 = vtanh.bf16.pop %v3196
    %v3213 = vtanh.bf16.pop %v3197
    %v3214 = vtanh.bf16.pop %v3198
    %v3215 = vtanh.bf16.pop %v3199
    %v3216 = vtanh.bf16.pop %v3200
    %v3217 = vtanh.bf16.pop %v3201
    %v3218 = vtanh.bf16.pop %v3202
    %v3219 = vtanh.bf16.pop %v3203
    %v3220 = vtanh.bf16.pop %v3204
    %v3221 = vtanh.bf16.pop %v3205
    %3222 = vmatprep.subr.bf16.mxu0 0
    %3223 = vmatpush1.bf16.msra.mxu0 %v1222
    %3224 = vmatprep.subr.bf16.mxu0 0
    %3225 = vmatpush1.bf16.msra.mxu0 %v1223
    %3226 = vmatprep.subr.bf16.mxu0 0
    %3227 = vmatpush1.bf16.msra.mxu0 %v1224
    %3228 = vmatprep.subr.bf16.mxu0 0
    %3229 = vmatpush1.bf16.msra.mxu0 %v1225
    %3230 = vmatprep.subr.bf16.mxu0 0
    %3231 = vmatpush1.bf16.msra.mxu0 %v1226
    %3232 = vmatprep.subr.bf16.mxu0 0
    %3233 = vmatpush1.bf16.msra.mxu0 %v1227
    %3234 = vmatprep.subr.bf16.mxu0 0
    %3235 = vmatpush1.bf16.msra.mxu0 %v1228
    %3236 = vmatprep.subr.bf16.mxu0 0
    %3237 = vmatpush1.bf16.msra.mxu0 %v1229
    %3238 = vmatprep.subr.bf16.mxu0 0
    %3239 = vmatpush1.bf16.msra.mxu0 0
    %3240 = vmatprep.subr.bf16.mxu0 0
    %3241 = vmatpush1.bf16.msra.mxu0 0
    %3242 = vmatprep.subr.bf16.mxu0 0
    %3243 = vmatpush1.bf16.msra.mxu0 0
    %3244 = vmatprep.subr.bf16.mxu0 0
    %3245 = vmatpush1.bf16.msra.mxu0 0
    %3246 = vmatprep.subr.bf16.mxu0 0
    %3247 = vmatpush1.bf16.msra.mxu0 0
    %3248 = vmatprep.subr.bf16.mxu0 0
    %3249 = vmatpush1.bf16.msra.mxu0 0
    %3250 = vmatprep.subr.bf16.mxu0 0
    %3251 = vmatpush1.bf16.msra.mxu0 0
    %3252 = vmatprep.subr.bf16.mxu0 0
    %3253 = vmatpush1.bf16.msra.mxu0 0
    %3254 = vmatprep.mubr.bf16.mxu0 0
    %3255 = vmatmul.mubr.bf16.gmra.mrb[0].mxu0 %v3206
    %v3256 = vpop.f32.mrb[0].mxu0
    %v3257 = vadd.f32 0.0, %v3256
    %v3258 = vpop.f32.mrb[0].mxu0
    %v3259 = vpop.f32.mrb[0].mxu0
    %v3260 = vadd.f32 0.0, %v3259
    %v3261 = vpop.f32.mrb[0].mxu0
    %3262 = vmatprep.mubr.bf16.mxu0 0
    %3263 = vmatmul.mubr.bf16.gmra.mrb[0].mxu0 %v3207
    %v3264 = vpop.f32.mrb[0].mxu0
    %v3265 = vadd.f32 0.0, %v3264
    %v3266 = vpop.f32.mrb[0].mxu0
    %v3267 = vpop.f32.mrb[0].mxu0
    %v3268 = vadd.f32 0.0, %v3267
    %v3269 = vpop.f32.mrb[0].mxu0
    %3270 = vmatprep.mubr.bf16.mxu0 0
    %3271 = vmatmul.mubr.bf16.gmra.mrb[0].mxu0 %v3208
    %v3272 = vpop.f32.mrb[0].mxu0
    %v3273 = vadd.f32 0.0, %v3272
    %v3274 = vpop.f32.mrb[0].mxu0
    %v3275 = vpop.f32.mrb[0].mxu0
    %v3276 = vadd.f32 0.0, %v3275
    %v3277 = vpop.f32.mrb[0].mxu0
    %3278 = vmatprep.mubr.bf16.mxu0 0
    %3279 = vmatmul.mubr.bf16.gmra.mrb[0].mxu0 %v3209
    %v3280 = vpop.f32.mrb[0].mxu0
    %v3281 = vadd.f32 0.0, %v3280
    %v3282 = vpop.f32.mrb[0].mxu0
    %v3283 = vpop.f32.mrb[0].mxu0
    %v3284 = vadd.f32 0.0, %v3283
    %v3285 = vpop.f32.mrb[0].mxu0
    %3286 = vmatprep.mubr.bf16.mxu0 0
    %3287 = vmatmul.mubr.bf16.gmra.mrb[0].mxu0 %v3210
    %v3288 = vpop.f32.mrb[0].mxu0
    %v3289 = vadd.f32 0.0, %v3288
    %v3290 = vpop.f32.mrb[0].mxu0
    %v3291 = vpop.f32.mrb[0].mxu0
    %v3292 = vadd.f32 0.0, %v3291
    %v3293 = vpop.f32.mrb[0].mxu0
    %3294 = vmatprep.mubr.bf16.mxu0 0
    %3295 = vmatmul.mubr.bf16.gmra.mrb[0].mxu0 %v3211
    %v3296 = vpop.f32.mrb[0].mxu0
    %v3297 = vadd.f32 0.0, %v3296
    %v3298 = vpop.f32.mrb[0].mxu0
    %v3299 = vpop.f32.mrb[0].mxu0
    %v3300 = vadd.f32 0.0, %v3299
    %v3301 = vpop.f32.mrb[0].mxu0
    %3302 = vmatprep.mubr.bf16.mxu0 0
    %3303 = vmatmul.mubr.bf16.gmra.mrb[0].mxu0 %v3212
    %v3304 = vpop.f32.mrb[0].mxu0
    %v3305 = vadd.f32 0.0, %v3304
    %v3306 = vpop.f32.mrb[0].mxu0
    %v3307 = vpop.f32.mrb[0].mxu0
    %v3308 = vadd.f32 0.0, %v3307
    %v3309 = vpop.f32.mrb[0].mxu0
    %3310 = vmatprep.mubr.bf16.mxu0 0
    %3311 = vmatmul.mubr.bf16.gmra.mrb[0].mxu0 %v3213
    %v3312 = vpop.f32.mrb[0].mxu0
    %v3313 = vadd.f32 0.0, %v3312
    %v3314 = vpop.f32.mrb[0].mxu0
    %v3315 = vpop.f32.mrb[0].mxu0
    %v3316 = vadd.f32 0.0, %v3315
    %v3317 = vpop.f32.mrb[0].mxu0
    %3318 = vmatprep.mubr.bf16.mxu0 0
    %3319 = vmatmul.mubr.bf16.gmra.mrb[0].mxu0 %v3214
    %v3320 = vpop.f32.mrb[0].mxu0
    %v3321 = vadd.f32 0.0, %v3320
    %v3322 = vpop.f32.mrb[0].mxu0
    %v3323 = vpop.f32.mrb[0].mxu0
    %v3324 = vadd.f32 0.0, %v3323
    %v3325 = vpop.f32.mrb[0].mxu0
    %3326 = vmatprep.mubr.bf16.mxu0 0
    %3327 = vmatmul.mubr.bf16.gmra.mrb[0].mxu0 %v3215
    %v3328 = vpop.f32.mrb[0].mxu0
    %v3329 = vadd.f32 0.0, %v3328
    %v3330 = vpop.f32.mrb[0].mxu0
    %v3331 = vpop.f32.mrb[0].mxu0
    %v3332 = vadd.f32 0.0, %v3331
    %v3333 = vpop.f32.mrb[0].mxu0
    %3334 = vmatprep.mubr.bf16.mxu0 0
    %3335 = vmatmul.mubr.bf16.gmra.mrb[0].mxu0 %v3216
    %v3336 = vpop.f32.mrb[0].mxu0
    %v3337 = vadd.f32 0.0, %v3336
    %v3338 = vpop.f32.mrb[0].mxu0
    %v3339 = vpop.f32.mrb[0].mxu0
    %v3340 = vadd.f32 0.0, %v3339
    %v3341 = vpop.f32.mrb[0].mxu0
    %3342 = vmatprep.mubr.bf16.mxu0 0
    %3343 = vmatmul.mubr.bf16.gmra.mrb[0].mxu0 %v3217
    %v3344 = vpop.f32.mrb[0].mxu0
    %v3345 = vadd.f32 0.0, %v3344
    %v3346 = vpop.f32.mrb[0].mxu0
    %v3347 = vpop.f32.mrb[0].mxu0
    %v3348 = vadd.f32 0.0, %v3347
    %v3349 = vpop.f32.mrb[0].mxu0
    %3350 = vmatprep.mubr.bf16.mxu0 0
    %3351 = vmatmul.mubr.bf16.gmra.mrb[0].mxu0 %v3218
    %v3352 = vpop.f32.mrb[0].mxu0
    %v3353 = vadd.f32 0.0, %v3352
    %v3354 = vpop.f32.mrb[0].mxu0
    %v3355 = vpop.f32.mrb[0].mxu0
    %v3356 = vadd.f32 0.0, %v3355
    %v3357 = vpop.f32.mrb[0].mxu0
    %3358 = vmatprep.mubr.bf16.mxu0 0
    %3359 = vmatmul.mubr.bf16.gmra.mrb[0].mxu0 %v3219
    %v3360 = vpop.f32.mrb[0].mxu0
    %v3361 = vadd.f32 0.0, %v3360
    %v3362 = vpop.f32.mrb[0].mxu0
    %v3363 = vpop.f32.mrb[0].mxu0
    %v3364 = vadd.f32 0.0, %v3363
    %v3365 = vpop.f32.mrb[0].mxu0
    %3366 = vmatprep.mubr.bf16.mxu0 0
    %3367 = vmatmul.mubr.bf16.gmra.mrb[0].mxu0 %v3220
    %v3368 = vpop.f32.mrb[0].mxu0
    %v3369 = vadd.f32 0.0, %v3368
    %v3370 = vpop.f32.mrb[0].mxu0
    %v3371 = vpop.f32.mrb[0].mxu0
    %v3372 = vadd.f32 0.0, %v3371
    %v3373 = vpop.f32.mrb[0].mxu0
    %3374 = vmatprep.mubr.bf16.mxu0 0
    %3375 = vmatmul.mubr.bf16.gmra.mrb[0].mxu0 %v3221
    %v3376 = vpop.f32.mrb[0].mxu0
    %v3377 = vadd.f32 0.0, %v3376
    %v3378 = vpop.f32.mrb[0].mxu0
    %v3379 = vpop.f32.mrb[0].mxu0
    %v3380 = vadd.f32 0.0, %v3379
    %v3381 = vpop.f32.mrb[0].mxu0
    %3382 = vdwg.mxu0
    %3383 = vmatprep.subr.bf16.mxu0 0
    %3384 = vmatpush1.bf16.msra.mxu0 %v1431
    %3385 = vmatprep.subr.bf16.mxu0 0
    %3386 = vmatpush1.bf16.msra.mxu0 %v1432
    %3387 = vmatprep.subr.bf16.mxu0 0
    %3388 = vmatpush1.bf16.msra.mxu0 %v1433
    %3389 = vmatprep.subr.bf16.mxu0 0
    %3390 = vmatpush1.bf16.msra.mxu0 %v1434
    %3391 = vmatprep.subr.bf16.mxu0 0
    %3392 = vmatpush1.bf16.msra.mxu0 %v1435
    %3393 = vmatprep.subr.bf16.mxu0 0
    %3394 = vmatpush1.bf16.msra.mxu0 %v1436
    %3395 = vmatprep.subr.bf16.mxu0 0
    %3396 = vmatpush1.bf16.msra.mxu0 %v1437
    %3397 = vmatprep.subr.bf16.mxu0 0
    %3398 = vmatpush1.bf16.msra.mxu0 %v1438
    %3399 = vmatprep.subr.bf16.mxu0 0
    %3400 = vmatpush1.bf16.msra.mxu0 0
    %3401 = vmatprep.subr.bf16.mxu0 0
    %3402 = vmatpush1.bf16.msra.mxu0 0
    %3403 = vmatprep.subr.bf16.mxu0 0
    %3404 = vmatpush1.bf16.msra.mxu0 0
    %3405 = vmatprep.subr.bf16.mxu0 0
    %3406 = vmatpush1.bf16.msra.mxu0 0
    %3407 = vmatprep.subr.bf16.mxu0 0
    %3408 = vmatpush1.bf16.msra.mxu0 0
    %3409 = vmatprep.subr.bf16.mxu0 0
    %3410 = vmatpush1.bf16.msra.mxu0 0
    %3411 = vmatprep.subr.bf16.mxu0 0
    %3412 = vmatpush1.bf16.msra.mxu0 0
    %3413 = vmatprep.subr.bf16.mxu0 0
    %3414 = vmatpush1.bf16.msra.mxu0 0
    %3415 = vmatprep.mubr.bf16.mxu0 0
    %3416 = vmatmul.mubr.bf16.gmra.mrb[0].mxu0 %v2627
    %v3417 = vpop.f32.mrb[0].mxu0
    %v3418 = vadd.f32 %v3257, %v3417
    %v3419 = vpop.f32.mrb[0].mxu0
    %v3420 = vpop.f32.mrb[0].mxu0
    %v3421 = vadd.f32 %v3260, %v3420
    %v3422 = vpop.f32.mrb[0].mxu0
    %3423 = vmatprep.mubr.bf16.mxu0 0
    %3424 = vmatmul.mubr.bf16.gmra.mrb[0].mxu0 %v2628
    %v3425 = vpop.f32.mrb[0].mxu0
    %v3426 = vadd.f32 %v3265, %v3425
    %v3427 = vpop.f32.mrb[0].mxu0
    %v3428 = vpop.f32.mrb[0].mxu0
    %v3429 = vadd.f32 %v3268, %v3428
    %v3430 = vpop.f32.mrb[0].mxu0
    %3431 = vmatprep.mubr.bf16.mxu0 0
    %3432 = vmatmul.mubr.bf16.gmra.mrb[0].mxu0 %v2629
    %v3433 = vpop.f32.mrb[0].mxu0
    %v3434 = vadd.f32 %v3273, %v3433
    %v3435 = vpop.f32.mrb[0].mxu0
    %v3436 = vpop.f32.mrb[0].mxu0
    %v3437 = vadd.f32 %v3276, %v3436
    %v3438 = vpop.f32.mrb[0].mxu0
    %3439 = vmatprep.mubr.bf16.mxu0 0
    %3440 = vmatmul.mubr.bf16.gmra.mrb[0].mxu0 %v2630
    %v3441 = vpop.f32.mrb[0].mxu0
    %v3442 = vadd.f32 %v3281, %v3441
    %v3443 = vpop.f32.mrb[0].mxu0
    %v3444 = vpop.f32.mrb[0].mxu0
    %v3445 = vadd.f32 %v3284, %v3444
    %v3446 = vpop.f32.mrb[0].mxu0
    %3447 = vmatprep.mubr.bf16.mxu0 0
    %3448 = vmatmul.mubr.bf16.gmra.mrb[0].mxu0 %v2631
    %v3449 = vpop.f32.mrb[0].mxu0
    %v3450 = vadd.f32 %v3289, %v3449
    %v3451 = vpop.f32.mrb[0].mxu0
    %v3452 = vpop.f32.mrb[0].mxu0
    %v3453 = vadd.f32 %v3292, %v3452
    %v3454 = vpop.f32.mrb[0].mxu0
    %3455 = vmatprep.mubr.bf16.mxu0 0
    %3456 = vmatmul.mubr.bf16.gmra.mrb[0].mxu0 %v2632
    %v3457 = vpop.f32.mrb[0].mxu0
    %v3458 = vadd.f32 %v3297, %v3457
    %v3459 = vpop.f32.mrb[0].mxu0
    %v3460 = vpop.f32.mrb[0].mxu0
    %v3461 = vadd.f32 %v3300, %v3460
    %v3462 = vpop.f32.mrb[0].mxu0
    %3463 = vmatprep.mubr.bf16.mxu0 0
    %3464 = vmatmul.mubr.bf16.gmra.mrb[0].mxu0 %v2633
    %v3465 = vpop.f32.mrb[0].mxu0
    %v3466 = vadd.f32 %v3305, %v3465
    %v3467 = vpop.f32.mrb[0].mxu0
    %v3468 = vpop.f32.mrb[0].mxu0
    %v3469 = vadd.f32 %v3308, %v3468
    %v3470 = vpop.f32.mrb[0].mxu0
    %3471 = vmatprep.mubr.bf16.mxu0 0
    %3472 = vmatmul.mubr.bf16.gmra.mrb[0].mxu0 %v2634
    %v3473 = vpop.f32.mrb[0].mxu0
    %v3474 = vadd.f32 %v3313, %v3473
    %v3475 = vpop.f32.mrb[0].mxu0
    %v3476 = vpop.f32.mrb[0].mxu0
    %v3477 = vadd.f32 %v3316, %v3476
    %v3478 = vpop.f32.mrb[0].mxu0
    %3479 = vmatprep.mubr.bf16.mxu0 0
    %3480 = vmatmul.mubr.bf16.gmra.mrb[0].mxu0 %v2635
    %v3481 = vpop.f32.mrb[0].mxu0
    %v3482 = vadd.f32 %v3321, %v3481
    %v3483 = vpop.f32.mrb[0].mxu0
    %v3484 = vpop.f32.mrb[0].mxu0
    %v3485 = vadd.f32 %v3324, %v3484
    %v3486 = vpop.f32.mrb[0].mxu0
    %3487 = vmatprep.mubr.bf16.mxu0 0
    %3488 = vmatmul.mubr.bf16.gmra.mrb[0].mxu0 %v2636
    %v3489 = vpop.f32.mrb[0].mxu0
    %v3490 = vadd.f32 %v3329, %v3489
    %v3491 = vpop.f32.mrb[0].mxu0
    %v3492 = vpop.f32.mrb[0].mxu0
    %v3493 = vadd.f32 %v3332, %v3492
    %v3494 = vpop.f32.mrb[0].mxu0
    %3495 = vmatprep.mubr.bf16.mxu0 0
    %3496 = vmatmul.mubr.bf16.gmra.mrb[0].mxu0 %v2637
    %v3497 = vpop.f32.mrb[0].mxu0
    %v3498 = vadd.f32 %v3337, %v3497
    %v3499 = vpop.f32.mrb[0].mxu0
    %v3500 = vpop.f32.mrb[0].mxu0
    %v3501 = vadd.f32 %v3340, %v3500
    %v3502 = vpop.f32.mrb[0].mxu0
    %3503 = vmatprep.mubr.bf16.mxu0 0
    %3504 = vmatmul.mubr.bf16.gmra.mrb[0].mxu0 %v2638
    %v3505 = vpop.f32.mrb[0].mxu0
    %v3506 = vadd.f32 %v3345, %v3505
    %v3507 = vpop.f32.mrb[0].mxu0
    %v3508 = vpop.f32.mrb[0].mxu0
    %v3509 = vadd.f32 %v3348, %v3508
    %v3510 = vpop.f32.mrb[0].mxu0
    %3511 = vmatprep.mubr.bf16.mxu0 0
    %3512 = vmatmul.mubr.bf16.gmra.mrb[0].mxu0 %v2639
    %v3513 = vpop.f32.mrb[0].mxu0
    %v3514 = vadd.f32 %v3353, %v3513
    %v3515 = vpop.f32.mrb[0].mxu0
    %v3516 = vpop.f32.mrb[0].mxu0
    %v3517 = vadd.f32 %v3356, %v3516
    %v3518 = vpop.f32.mrb[0].mxu0
    %3519 = vmatprep.mubr.bf16.mxu0 0
    %3520 = vmatmul.mubr.bf16.gmra.mrb[0].mxu0 %v2640
    %v3521 = vpop.f32.mrb[0].mxu0
    %v3522 = vadd.f32 %v3361, %v3521
    %v3523 = vpop.f32.mrb[0].mxu0
    %v3524 = vpop.f32.mrb[0].mxu0
    %v3525 = vadd.f32 %v3364, %v3524
    %v3526 = vpop.f32.mrb[0].mxu0
    %3527 = vmatprep.mubr.bf16.mxu0 0
    %3528 = vmatmul.mubr.bf16.gmra.mrb[0].mxu0 %v2641
    %v3529 = vpop.f32.mrb[0].mxu0
    %v3530 = vadd.f32 %v3369, %v3529
    %v3531 = vpop.f32.mrb[0].mxu0
    %v3532 = vpop.f32.mrb[0].mxu0
    %v3533 = vadd.f32 %v3372, %v3532
    %v3534 = vpop.f32.mrb[0].mxu0
    %3535 = vmatprep.mubr.bf16.mxu0 0
    %3536 = vmatmul.mubr.bf16.gmra.mrb[0].mxu0 %v2642
    %v3537 = vpop.f32.mrb[0].mxu0
    %v3538 = vadd.f32 %v3377, %v3537
    %v3539 = vpop.f32.mrb[0].mxu0
    %v3540 = vpop.f32.mrb[0].mxu0
    %v3541 = vadd.f32 %v3380, %v3540
    %v3542 = vpop.f32.mrb[0].mxu0
    %3543 = vdwg.mxu0
    %v3544 = vadd.f32 %v3418, %v1612
    %v3545 = vadd.f32 %v3421, %v1612
    %v3546 = vadd.f32 %v3426, %v1612
    %v3547 = vadd.f32 %v3429, %v1612
    %v3548 = vadd.f32 %v3434, %v1612
    %v3549 = vadd.f32 %v3437, %v1612
    %v3550 = vadd.f32 %v3442, %v1612
    %v3551 = vadd.f32 %v3445, %v1612
    %v3552 = vadd.f32 %v3450, %v1612
    %v3553 = vadd.f32 %v3453, %v1612
    %v3554 = vadd.f32 %v3458, %v1612
    %v3555 = vadd.f32 %v3461, %v1612
    %v3556 = vadd.f32 %v3466, %v1612
    %v3557 = vadd.f32 %v3469, %v1612
    %v3558 = vadd.f32 %v3474, %v1612
    %v3559 = vadd.f32 %v3477, %v1612
    %v3560 = vadd.f32 %v3482, %v1612
    %v3561 = vadd.f32 %v3485, %v1612
    %v3562 = vadd.f32 %v3490, %v1612
    %v3563 = vadd.f32 %v3493, %v1612
    %v3564 = vadd.f32 %v3498, %v1612
    %v3565 = vadd.f32 %v3501, %v1612
    %v3566 = vadd.f32 %v3506, %v1612
    %v3567 = vadd.f32 %v3509, %v1612
    %v3568 = vadd.f32 %v3514, %v1612
    %v3569 = vadd.f32 %v3517, %v1612
    %v3570 = vadd.f32 %v3522, %v1612
    %v3571 = vadd.f32 %v3525, %v1612
    %v3572 = vadd.f32 %v3530, %v1612
    %v3573 = vadd.f32 %v3533, %v1612
    %v3574 = vadd.f32 %v3538, %v1612
    %v3575 = vadd.f32 %v3541, %v1612
    %v3576 = vpack.c.bf16 %v3545, %v3544
    %v3577 = vpack.c.bf16 %v3547, %v3546
    %v3578 = vpack.c.bf16 %v3549, %v3548
    %v3579 = vpack.c.bf16 %v3551, %v3550
    %v3580 = vpack.c.bf16 %v3553, %v3552
    %v3581 = vpack.c.bf16 %v3555, %v3554
    %v3582 = vpack.c.bf16 %v3557, %v3556
    %v3583 = vpack.c.bf16 %v3559, %v3558
    %v3584 = vpack.c.bf16 %v3561, %v3560
    %v3585 = vpack.c.bf16 %v3563, %v3562
    %v3586 = vpack.c.bf16 %v3565, %v3564
    %v3587 = vpack.c.bf16 %v3567, %v3566
    %v3588 = vpack.c.bf16 %v3569, %v3568
    %v3589 = vpack.c.bf16 %v3571, %v3570
    %v3590 = vpack.c.bf16 %v3573, %v3572
    %v3591 = vpack.c.bf16 %v3575, %v3574
    %v3592 = vtanh.bf16.pop %v3576
    %v3593 = vtanh.bf16.pop %v3577
    %v3594 = vtanh.bf16.pop %v3578
    %v3595 = vtanh.bf16.pop %v3579
    %v3596 = vtanh.bf16.pop %v3580
    %v3597 = vtanh.bf16.pop %v3581
    %v3598 = vtanh.bf16.pop %v3582
    %v3599 = vtanh.bf16.pop %v3583
    %v3600 = vtanh.bf16.pop %v3584
    %v3601 = vtanh.bf16.pop %v3585
    %v3602 = vtanh.bf16.pop %v3586
    %v3603 = vtanh.bf16.pop %v3587
    %v3604 = vtanh.bf16.pop %v3588
    %v3605 = vtanh.bf16.pop %v3589
    %v3606 = vtanh.bf16.pop %v3590
    %v3607 = vtanh.bf16.pop %v3591
    %v3624 = vunpack.c.l.b16 %v3592
    %v3625 = vunpack.c.h.b16 %v3592
    %v3626 = vunpack.c.l.b16 %v3593
    %v3627 = vunpack.c.h.b16 %v3593
    %v3628 = vunpack.c.l.b16 %v3594
    %v3629 = vunpack.c.h.b16 %v3594
    %v3630 = vunpack.c.l.b16 %v3595
    %v3631 = vunpack.c.h.b16 %v3595
    %v3632 = vunpack.c.l.b16 %v3596
    %v3633 = vunpack.c.h.b16 %v3596
    %v3634 = vunpack.c.l.b16 %v3597
    %v3635 = vunpack.c.h.b16 %v3597
    %v3636 = vunpack.c.l.b16 %v3598
    %v3637 = vunpack.c.h.b16 %v3598
    %v3638 = vunpack.c.l.b16 %v3599
    %v3639 = vunpack.c.h.b16 %v3599
    %v3640 = vunpack.c.l.b16 %v3600
    %v3641 = vunpack.c.h.b16 %v3600
    %v3642 = vunpack.c.l.b16 %v3601
    %v3643 = vunpack.c.h.b16 %v3601
    %v3644 = vunpack.c.l.b16 %v3602
    %v3645 = vunpack.c.h.b16 %v3602
    %v3646 = vunpack.c.l.b16 %v3603
    %v3647 = vunpack.c.h.b16 %v3603
    %v3648 = vunpack.c.l.b16 %v3604
    %v3649 = vunpack.c.h.b16 %v3604
    %v3650 = vunpack.c.l.b16 %v3605
    %v3651 = vunpack.c.h.b16 %v3605
    %v3652 = vunpack.c.l.b16 %v3606
    %v3653 = vunpack.c.h.b16 %v3606
    %v3654 = vunpack.c.l.b16 %v3607
    %v3655 = vunpack.c.h.b16 %v3607
    %v3656 = vpack.c.b16 %v3624, %v3624
    %v3657 = vpack.c.b16 %v3625, %v3625
    %v3658 = vpack.c.b16 %v3626, %v3626
    %v3659 = vpack.c.b16 %v3627, %v3627
    %v3660 = vpack.c.b16 %v3628, %v3628
    %v3661 = vpack.c.b16 %v3629, %v3629
    %v3662 = vpack.c.b16 %v3630, %v3630
    %v3663 = vpack.c.b16 %v3631, %v3631
    %v3664 = vpack.c.b16 %v3632, %v3632
    %v3665 = vpack.c.b16 %v3633, %v3633
    %v3666 = vpack.c.b16 %v3634, %v3634
    %v3667 = vpack.c.b16 %v3635, %v3635
    %v3668 = vpack.c.b16 %v3636, %v3636
    %v3669 = vpack.c.b16 %v3637, %v3637
    %v3670 = vpack.c.b16 %v3638, %v3638
    %v3671 = vpack.c.b16 %v3639, %v3639
    %v3672 = vpack.c.b16 %v3640, %v3640
    %v3673 = vpack.c.b16 %v3641, %v3641
    %v3674 = vpack.c.b16 %v3642, %v3642
    %v3675 = vpack.c.b16 %v3643, %v3643
    %v3676 = vpack.c.b16 %v3644, %v3644
    %v3677 = vpack.c.b16 %v3645, %v3645
    %v3678 = vpack.c.b16 %v3646, %v3646
    %v3679 = vpack.c.b16 %v3647, %v3647
    %v3680 = vpack.c.b16 %v3648, %v3648
    %v3681 = vpack.c.b16 %v3649, %v3649
    %v3682 = vpack.c.b16 %v3650, %v3650
    %v3683 = vpack.c.b16 %v3651, %v3651
    %v3684 = vpack.c.b16 %v3652, %v3652
    %v3685 = vpack.c.b16 %v3653, %v3653
    %v3686 = vpack.c.b16 %v3654, %v3654
    %v3687 = vpack.c.b16 %v3655, %v3655
    %3720 = vst [vmem:[#allocation13] sm:$0xf] %v3656
    %3721 = vst [vmem:[#allocation13 + $0x4] sm:$0xf] %v3657
    %3722 = vst [vmem:[#allocation13 + $0x8] sm:$0xf] %v3658
    %3723 = vst [vmem:[#allocation13 + $0xc] sm:$0xf] %v3659
    %3724 = vst [vmem:[#allocation13 + $0x10] sm:$0xf] %v3660
    %3725 = vst [vmem:[#allocation13 + $0x14] sm:$0xf] %v3661
    %3726 = vst [vmem:[#allocation13 + $0x18] sm:$0xf] %v3662
    %3727 = vst [vmem:[#allocation13 + $0x1c] sm:$0xf] %v3663
    %3728 = vst [vmem:[#allocation13 + $0x20] sm:$0xf] %v3664
    %3729 = vst [vmem:[#allocation13 + $0x24] sm:$0xf] %v3665
    %3730 = vst [vmem:[#allocation13 + $0x28] sm:$0xf] %v3666
    %3731 = vst [vmem:[#allocation13 + $0x2c] sm:$0xf] %v3667
    %3732 = vst [vmem:[#allocation13 + $0x30] sm:$0xf] %v3668
    %3733 = vst [vmem:[#allocation13 + $0x34] sm:$0xf] %v3669
    %3734 = vst [vmem:[#allocation13 + $0x38] sm:$0xf] %v3670
    %3735 = vst [vmem:[#allocation13 + $0x3c] sm:$0xf] %v3671
    %3736 = vst [vmem:[#allocation13 + $0x40] sm:$0xf] %v3672
    %3737 = vst [vmem:[#allocation13 + $0x44] sm:$0xf] %v3673
    %3738 = vst [vmem:[#allocation13 + $0x48] sm:$0xf] %v3674
    %3739 = vst [vmem:[#allocation13 + $0x4c] sm:$0xf] %v3675
    %3740 = vst [vmem:[#allocation13 + $0x50] sm:$0xf] %v3676
    %3741 = vst [vmem:[#allocation13 + $0x54] sm:$0xf] %v3677
    %3742 = vst [vmem:[#allocation13 + $0x58] sm:$0xf] %v3678
    %3743 = vst [vmem:[#allocation13 + $0x5c] sm:$0xf] %v3679
    %3744 = vst [vmem:[#allocation13 + $0x60] sm:$0xf] %v3680
    %3745 = vst [vmem:[#allocation13 + $0x64] sm:$0xf] %v3681
    %3746 = vst [vmem:[#allocation13 + $0x68] sm:$0xf] %v3682
    %3747 = vst [vmem:[#allocation13 + $0x6c] sm:$0xf] %v3683
    %3748 = vst [vmem:[#allocation13 + $0x70] sm:$0xf] %v3684
    %3749 = vst [vmem:[#allocation13 + $0x74] sm:$0xf] %v3685
    %3750 = vst [vmem:[#allocation13 + $0x78] sm:$0xf] %v3686
    %3751 = vst [vmem:[#allocation13 + $0x7c] sm:$0xf] %v3687
    // Predicated region
    $region62: #{tpu_custom_call.1} parent=1 // pred_check
      _
    $region63: #{tpu_custom_call.1} parent=1 // pred_check_branch
      %3753 = sbr.rel (0) target = $region65
    $region64: #{tpu_custom_call.1} parent=1 // pred_region
      %s3755 = ssub.s32 2048, 2048
      %3756 = vsyncadd [#allocation4], %s3755
      %s3757 = sshll.u32 [#allocation13], 4
      %s3758 = int_to_ptr.vmem [resolvable:$true] %s3757
      %3763 = dma.vmem_to_hbm [thread:$0]  %s3758, 2048, %s9, [#allocation4], 64, 64, 4
    $region65: #{tpu_custom_call.1} parent=1 // pred_fallthru
      _
    // Predicated region
    $region66: #{tpu_custom_call.1} parent=1 // pred_check
      _
    $region67: #{tpu_custom_call.1} parent=1 // pred_check_branch
      %3765 = sbr.rel (0) target = $region69
    $region68: #{tpu_custom_call.1} parent=1 // pred_region
      %3766 = dma.done [#allocation4], 2048
    $region69: #{tpu_custom_call.1} parent=1 // pred_fallthru
      _
    %3767 = vsyncpa [#allocation3], 1
    %3768 = vsyncpa [#allocation6], 1
    %3769 = vsyncpa [#allocation9], 1
    %3770 = vsyncpa [#allocation12], 1
    %3771 = vsyncpa [#allocation4], 1

</llo_original>
